<compile_context>
chip_gen: v7x
topology: tpu7x:2x2x1
jax: 0.10.0
libtpu: 0.0.40
codegen_flags: <defaults>
</compile_context>

<pallas_src>
import jax
import jax.numpy as jnp
from jax.experimental import pallas as pl
from jax.experimental.pallas import tpu as pltpu

EPS_BN = 1e-5      # PyTorch BatchNorm1d default eps
EPS_NORM = 1e-12   # F.normalize-style guard (only protects exact-zero feature)


def _head(pooled_sum_f32, w1_ref, b1_ref, w2_ref, out_dtype):
    """Folded Linear+BN(+pool scale), L2-normalize, ArcFace cosine logits."""
    # bf16 operands keep the MXU on its native path; accumulate in f32.
    h = jnp.dot(pooled_sum_f32.astype(jnp.bfloat16), w1_ref[...],
                preferred_element_type=jnp.float32)
    h = h + b1_ref[...].astype(jnp.float32)
    # Dropout(p=0.5): identity at inference.
    inv = jax.lax.rsqrt(jnp.sum(h * h, axis=-1, keepdims=True) + EPS_NORM)
    logits = jnp.dot((h * inv).astype(jnp.bfloat16), w2_ref[...],
                     preferred_element_type=jnp.float32)
    return logits.astype(out_dtype)


def arc_head_fused_kernel(x_ref, w1_ref, b1_ref, w2_ref, out_ref):
    """Single spatial step: whole (bt, HW, C) tile -> pool-sum -> head."""
    pooled = jnp.sum(x_ref[...].astype(jnp.float32), axis=1)      # (bt, C) f32
    out_ref[...] = _head(pooled, w1_ref, b1_ref, w2_ref, out_ref.dtype)


def arc_head_acc_kernel(x_ref, w1_ref, b1_ref, w2_ref, out_ref, acc_ref):
    """Spatially tiled path: accumulate f32 sum, run head on the last step."""
    hw = pl.program_id(1)

    @pl.when(hw == 0)
    def _():
        acc_ref[...] = jnp.zeros_like(acc_ref)

    # f32 accumulation (mandatory on v5e: no bf16 VALU there).
    acc_ref[...] += jnp.sum(x_ref[...].astype(jnp.float32), axis=1)

    @pl.when(hw == pl.num_programs(1) - 1)
    def _():
        out_ref[...] = _head(acc_ref[...], w1_ref, b1_ref, w2_ref,
                             out_ref.dtype)


def _pick_tile(n, max_tile, quantum):
    """Largest divisor of n <= max_tile that is a multiple of `quantum`.

    Falls back to the full extent n (always a legal block dim)."""
    for t in range(min(n, max_tile), 0, -1):
        if n % t == 0 and t % quantum == 0:
            return t
    return n


def _vmem_bytes(bt, hwt, C, Dk, nc_pad, multi_spatial):
    """Rough per-kernel VMEM footprint estimate (bytes)."""
    x_buf = 2 * bt * hwt * C * 2            # bf16 feature tile, double-buffered
    w1 = C * Dk * 2                         # bf16, single-buffered
    b1 = Dk * 2
    w2 = Dk * nc_pad * 2
    out = 2 * bt * nc_pad * 4
    acc = bt * C * 4 if multi_spatial else 0
    return x_buf + w1 + b1 + w2 + out + acc + (2 << 20)   # +2 MiB slack


def init_params(key, input_dim=2048, bottleneck=512, class_num=100):
    """Deterministic init mirroring weights_init_kaiming (+ ArcLinear stub)."""
    k1, k2, k3 = jax.random.split(key, 3)
    nc_pad = ((class_num + 127) // 128) * 128   # pad class dim to lane multiple

    # Linear(2048,512): kaiming_normal fan_out -> std = sqrt(2 / out_features)
    w1 = jax.random.normal(k1, (input_dim, bottleneck), jnp.float32) \
        * jnp.sqrt(2.0 / bottleneck)
    b1 = jnp.zeros((1, bottleneck), jnp.float32)

    # BatchNorm1d(512): weight ~ N(1, 0.02), bias = 0, running stats (0, 1)
    gamma = 1.0 + 0.02 * jax.random.normal(k2, (1, bottleneck), jnp.float32)
    beta = jnp.zeros((1, bottleneck), jnp.float32)
    mu = jnp.zeros((1, bottleneck), jnp.float32)
    var = jnp.ones((1, bottleneck), jnp.float32)

    # ArcLinear(512, class_num): external class, init unknown -> small normal.
    # Stored as (bottleneck, nc_pad) with zero-padded class columns.
    w2 = jnp.zeros((bottleneck, nc_pad), jnp.float32)
    w2 = w2.at[:, :class_num].set(
        0.02 * jax.random.normal(k3, (bottleneck, class_num), jnp.float32))

    return dict(w1=w1, b1=b1, gamma=gamma, beta=beta, mu=mu, var=var, w2=w2)


def ft_net_arc_head_forward(feats_bhwc, params, class_num, *,
                            max_b_tile=128, max_hw_tile=None):
    """feats_bhwc: (B, H, W, 2048) channels-last backbone feature map."""
    B, H, W, C = feats_bhwc.shape
    HW = H * W
    x = feats_bhwc.reshape(B, HW, C).astype(jnp.bfloat16)  # contiguous reshape

    Dk = params["w1"].shape[1]
    nc_pad = params["w2"].shape[1]

    # Fold eval-mode BatchNorm1d and the 1/(H*W) average-pool scale into
    # Linear1 (constant precompute; done once offline in serving), then carry
    # all head weights in bf16.
    scale = params["gamma"] * jax.lax.rsqrt(params["var"] + EPS_BN)   # (1, Dk)
    w1f = (params["w1"] * scale * (1.0 / HW)).astype(jnp.bfloat16)    # (C, Dk)
    b1f = ((params["b1"] - params["mu"]) * scale
           + params["beta"]).astype(jnp.bfloat16)                     # (1, Dk)
    w2 = params["w2"]
    w2n = (w2 * jax.lax.rsqrt(jnp.sum(w2 * w2, axis=0, keepdims=True)
                              + EPS_NORM)).astype(jnp.bfloat16)       # (Dk, Np)

    # Per-generation VMEM budget (v7x: 64 MiB/TC, v5e/v6e: 128 MiB).
    try:
        vmem_cap = int(pltpu.get_tpu_info().vmem_capacity_bytes)
    except Exception:
        vmem_cap = 64 * 1024 * 1024
    vmem_budget = min(vmem_cap - 16 * 1024 * 1024, 100 * 1024 * 1024)

    # Spatial tile: prefer the full HW extent (single step, fused kernel);
    # otherwise 16-aligned chunks so the bf16 stream fills packed [16,128]
    # vregs with dense loads.
    if max_hw_tile is None or max_hw_tile >= HW:
        hwt = HW
    else:
        hwt = _pick_tile(HW, max_hw_tile, 16)
    multi_spatial = hwt != HW

    # Batch tile: largest 8-multiple divisor of B (sublane dim of the output
    # block) that fits the VMEM budget, preferring >= 2 batch tiles so the
    # "parallel" axis can shard across v7x's two TensorCores.
    cands = [t for t in range(min(B, max_b_tile), 0, -1)
             if B % t == 0 and (t % 8 == 0 or t == B)]
    if not cands:
        cands = [B]
    fitting = [t for t in cands
               if _vmem_bytes(t, hwt, C, Dk, nc_pad, multi_spatial)
               <= vmem_budget]
    if not fitting:
        fitting = [cands[-1]]
    multi_core = [t for t in fitting if B // t >= 2]
    bt = multi_core[0] if multi_core else fitting[0]

    cost = pl.CostEstimate(
        flops=2 * B * C * Dk + 2 * B * Dk * nc_pad,
        transcendentals=B,
        bytes_accessed=B * HW * C * 2 + (C * Dk + Dk * nc_pad) * 2
        + B * nc_pad * 4)

    cparams = pltpu.CompilerParams(
        dimension_semantics=(("parallel", "arbitrary") if multi_spatial
                             else ("parallel",)),
        vmem_limit_bytes=int(vmem_budget))

    if multi_spatial:
        grid = (B // bt, HW // hwt)
        in_specs = [
            pl.BlockSpec((bt, hwt, C), lambda b, s: (b, s, 0)),            # x
            pl.BlockSpec((C, Dk), lambda b, s: (0, 0),
                         pipeline_mode=pl.Buffered(1)),                    # w1f
            pl.BlockSpec((1, Dk), lambda b, s: (0, 0),
                         pipeline_mode=pl.Buffered(1)),                    # b1f
            pl.BlockSpec((Dk, nc_pad), lambda b, s: (0, 0),
                         pipeline_mode=pl.Buffered(1)),                    # w2n
        ]
        out_specs = pl.BlockSpec((bt, nc_pad), lambda b, s: (b, 0))
        kernel = arc_head_acc_kernel
        scratch = [pltpu.VMEM((bt, C), jnp.float32)]
    else:
        grid = (B // bt,)
        in_specs = [
            pl.BlockSpec((bt, HW, C), lambda b: (b, 0, 0)),                # x
            pl.BlockSpec((C, Dk), lambda b: (0, 0),
                         pipeline_mode=pl.Buffered(1)),                    # w1f
            pl.BlockSpec((1, Dk), lambda b: (0, 0),
                         pipeline_mode=pl.Buffered(1)),                    # b1f
            pl.BlockSpec((Dk, nc_pad), lambda b: (0, 0),
                         pipeline_mode=pl.Buffered(1)),                    # w2n
        ]
        out_specs = pl.BlockSpec((bt, nc_pad), lambda b: (b, 0))
        kernel = arc_head_fused_kernel
        scratch = []

    out = pl.pallas_call(
        kernel,
        out_shape=jax.ShapeDtypeStruct((B, nc_pad), jnp.float32),
        grid_spec=pltpu.PrefetchScalarGridSpec(
            num_scalar_prefetch=0,
            grid=grid,
            in_specs=in_specs,
            out_specs=out_specs,
            scratch_shapes=scratch),
        compiler_params=cparams,
        cost_estimate=cost,
    )(x, w1f, b1f, w2n)
    return out[:, :class_num]


def reference_forward(feats_bhwc, params, class_num):
    """Pure-JAX f32 reference of the same head (un-folded math)."""
    x = feats_bhwc.astype(jnp.float32)
    pooled = jnp.mean(x, axis=(1, 2))                                  # (B, C)
    h = jnp.dot(pooled, params["w1"],
                precision=jax.lax.Precision.HIGHEST) + params["b1"]
    h = (h - params["mu"]) * jax.lax.rsqrt(params["var"] + EPS_BN) \
        * params["gamma"] + params["beta"]
    hn = h * jax.lax.rsqrt(jnp.sum(h * h, axis=-1, keepdims=True) + EPS_NORM)
    w2 = params["w2"]
    w2n = w2 * jax.lax.rsqrt(jnp.sum(w2 * w2, axis=0, keepdims=True) + EPS_NORM)
    logits = jnp.dot(hn, w2n, precision=jax.lax.Precision.HIGHEST)
    return logits[:, :class_num]


if __name__ == "__main__":
    key = jax.random.PRNGKey(0)
    k_feat, k_param = jax.random.split(key)

    C = 2048            # ResNet-50 layer4 width
    class_num = 100
    params = init_params(k_param, input_dim=C, bottleneck=512,
                         class_num=class_num)

    # Case 1: realistic small feature map -> single spatial step, fused kernel.
    B, H, W = 16, 4, 4
    feats = jax.random.normal(
        k_feat, (B, H, W, C), jnp.float32).astype(jnp.bfloat16)
    out = ft_net_arc_head_forward(feats, params, class_num)
    out = jax.block_until_ready(out)
    ref = reference_forward(feats, params, class_num)
    assert out.shape == (B, class_num)
    # bf16 weights/operands: cosine logits agree to ~1e-3; 5e-3 tolerance.
    assert jnp.allclose(out, ref, atol=5e-3, rtol=5e-3), "fused path mismatch"

    # Case 2: larger spatial map with forced spatial tiling -> accumulator path.
    B2, H2, W2 = 16, 8, 8
    feats2 = jax.random.normal(
        k_feat, (B2, H2, W2, C), jnp.float32).astype(jnp.bfloat16)
    out2 = ft_net_arc_head_forward(feats2, params, class_num, max_hw_tile=16)
    out2 = jax.block_until_ready(out2)
    ref2 = reference_forward(feats2, params, class_num)
    assert out2.shape == (B2, class_num)
    assert jnp.allclose(out2, ref2, atol=5e-3, rtol=5e-3), "tiled path mismatch"

    print("KERNEL_OK")
</pallas_src>

<mosaic_0001>
module attributes {stable_mosaic.version = 11 : i64} {
  func.func @arc_head_fused_kernel(%arg0: i32, %arg1: memref<8x16x2048xbf16, #tpu.memory_space<vmem>>, %arg2: memref<2048x512xbf16, #tpu.memory_space<vmem>>, %arg3: memref<1x512xbf16, #tpu.memory_space<vmem>>, %arg4: memref<512x128xbf16, #tpu.memory_space<vmem>>, %arg5: memref<8x128xf32, #tpu.memory_space<vmem>>) attributes {dimension_semantics = [#tpu.dimension_semantics<parallel>], iteration_bounds = array<i64: 2>, scalar_prefetch = 0 : i64, scratch_operands = 0 : i64, tpu.core_type = #tpu.core_type<tc>, window_params = [{transform_indices = @transform_0, window_bounds = array<i64: 8, 16, 2048>}, {pipeline_mode = #tpu.pipeline_mode<synchronous>, transform_indices = @transform_1, window_bounds = array<i64: 2048, 512>}, {pipeline_mode = #tpu.pipeline_mode<synchronous>, transform_indices = @transform_2, window_bounds = array<i64: 1, 512>}, {pipeline_mode = #tpu.pipeline_mode<synchronous>, transform_indices = @transform_3, window_bounds = array<i64: 512, 128>}, {transform_indices = @transform_4, window_bounds = array<i64: 8, 128>}]} {
    %c0 = arith.constant 0 : index
    %c0_0 = arith.constant 0 : index
    %c0_1 = arith.constant 0 : index
    %0 = vector.load %arg1[%c0, %c0_0, %c0_1] : memref<8x16x2048xbf16, #tpu.memory_space<vmem>>, vector<8x16x2048xbf16>
    %1 = arith.extf %0 : vector<8x16x2048xbf16> to vector<8x16x2048xf32>
    %cst = arith.constant dense<0.000000e+00> : vector<8x2048xf32>
    %2 = vector.multi_reduction <add>, %1, %cst [1] : vector<8x16x2048xf32> to vector<8x2048xf32>
    %3 = arith.truncf %2 : vector<8x2048xf32> to vector<8x2048xbf16>
    %c0_2 = arith.constant 0 : index
    %c0_3 = arith.constant 0 : index
    %4 = vector.load %arg2[%c0_2, %c0_3] : memref<2048x512xbf16, #tpu.memory_space<vmem>>, vector<2048x512xbf16>
    %cst_4 = arith.constant dense<0.000000e+00> : vector<8x512xf32>
    %5 = tpu.matmul %3, %4, %cst_4 {dimension_numbers = #tpu.dot_dimension_numbers<[1], [0], [0], [1], [0, 0, 1, 1], [], []>} : vector<8x2048xbf16>, vector<2048x512xbf16>, vector<8x512xf32> -> vector<8x512xf32>
    %c0_5 = arith.constant 0 : index
    %c0_6 = arith.constant 0 : index
    %6 = vector.load %arg3[%c0_5, %c0_6] : memref<1x512xbf16, #tpu.memory_space<vmem>>, vector<1x512xbf16>
    %7 = arith.extf %6 : vector<1x512xbf16> to vector<1x512xf32>
    %8 = vector.broadcast %7 : vector<1x512xf32> to vector<8x512xf32>
    %9 = arith.addf %5, %8 : vector<8x512xf32>
    %10 = arith.mulf %9, %9 : vector<8x512xf32>
    %cst_7 = arith.constant dense<0.000000e+00> : vector<8xf32>
    %11 = vector.multi_reduction <add>, %10, %cst_7 [1] : vector<8x512xf32> to vector<8xf32>
    %12 = vector.shape_cast %11 : vector<8xf32> to vector<8x1xf32>
    %cst_8 = arith.constant 9.99999996E-13 : f32
    %13 = vector.broadcast %cst_8 : f32 to vector<8x1xf32>
    %14 = arith.addf %12, %13 : vector<8x1xf32>
    %15 = math.rsqrt %14 : vector<8x1xf32>
    %16 = vector.broadcast %15 : vector<8x1xf32> to vector<8x512xf32>
    %17 = arith.mulf %9, %16 : vector<8x512xf32>
    %18 = arith.truncf %17 : vector<8x512xf32> to vector<8x512xbf16>
    %c0_9 = arith.constant 0 : index
    %c0_10 = arith.constant 0 : index
    %19 = vector.load %arg4[%c0_9, %c0_10] : memref<512x128xbf16, #tpu.memory_space<vmem>>, vector<512x128xbf16>
    %cst_11 = arith.constant dense<0.000000e+00> : vector<8x128xf32>
    %20 = tpu.matmul %18, %19, %cst_11 {dimension_numbers = #tpu.dot_dimension_numbers<[1], [0], [0], [1], [0, 0, 1, 1], [], []>} : vector<8x512xbf16>, vector<512x128xbf16>, vector<8x128xf32> -> vector<8x128xf32>
    %c0_12 = arith.constant 0 : index
    %c0_13 = arith.constant 0 : index
    %21 = vector.load %arg5[%c0_12, %c0_13] : memref<8x128xf32, #tpu.memory_space<vmem>>, vector<8x128xf32>
    tpu.vector_store %arg5[%c0_12, %c0_13], %20 {strides = array<i32>} : memref<8x128xf32, #tpu.memory_space<vmem>>, vector<8x128xf32>,
    return
  }
  func.func @transform_0(%arg0: i32) -> (i32, i32, i32) {
    %c0_i32 = arith.constant 0 : i32
    %c0_i32_0 = arith.constant 0 : i32
    %c0_i32_1 = arith.constant 0 : i32
    return %arg0, %c0_i32, %c0_i32_0 : i32, i32, i32
  }
  func.func @transform_1(%arg0: i32) -> (i32, i32) {
    %c0_i32 = arith.constant 0 : i32
    %c0_i32_0 = arith.constant 0 : i32
    %c0_i32_1 = arith.constant 0 : i32
    return %c0_i32, %c0_i32_0 : i32, i32
  }
  func.func @transform_2(%arg0: i32) -> (i32, i32) {
    %c0_i32 = arith.constant 0 : i32
    %c0_i32_0 = arith.constant 0 : i32
    %c0_i32_1 = arith.constant 0 : i32
    return %c0_i32, %c0_i32_0 : i32, i32
  }
  func.func @transform_3(%arg0: i32) -> (i32, i32) {
    %c0_i32 = arith.constant 0 : i32
    %c0_i32_0 = arith.constant 0 : i32
    %c0_i32_1 = arith.constant 0 : i32
    return %c0_i32, %c0_i32_0 : i32, i32
  }
  func.func @transform_4(%arg0: i32) -> (i32, i32) {
    %c0_i32 = arith.constant 0 : i32
    %c0_i32_0 = arith.constant 0 : i32
    return %arg0, %c0_i32 : i32, i32
  }
}

</mosaic_0001>

<llo_original>
// kernel: tpu_custom_call.1
$region0: #{tpu_custom_call.1}
  #allocation0 [shape = 'u32[]', space=smem, size = 0x4, offset = 0x4, fixed_abs, tag = 'smem constant byte address 0x4 - core index']
  #allocation1 [shape = 'u32[144,128]{1,0:T(1,128)}', space=vmem, size = 0x12000, scoped, tag = 'internal scratch']
  %s0 = inlined_call_operand.hbm [shape: bf16[16,16,2048], index: 0, kind: input, shape index: {}]
  %s1 = inlined_call_operand.hbm [shape: bf16[2048,512], index: 1, kind: input, shape index: {}]
  %s2 = inlined_call_operand.hbm [shape: bf16[1,512], index: 2, kind: input, shape index: {}]
  %s3 = inlined_call_operand.hbm [shape: bf16[512,128], index: 3, kind: input, shape index: {}]
  %s4 = inlined_call_operand.hbm [shape: f32[16,128], index: 4, kind: output, shape index: {}]
  %s5 = sld [smem:[#allocation0]]
  $region65: #{tpu_custom_call.1} parent=0
    _
  %s7 = ssub.s32 1, %s5
  %s8 = scalar_select 0, %s7, %s5
  $region1: #{tpu_custom_call.1} parent=0
    #allocation2 [shape = 'u8[1048576]{0}', space=vmem, size = 0x100000, scoped, tag = 'input window, operand 0']
    #allocation3 [shape = 's32[2]{0}', space=sflag, size = 0x8, scoped, tag = 'scoped memory for tpu_custom_call.1']
    #allocation4 [shape = 's32[2]{0}', space=sflag, size = 0x8, scoped, tag = 'scoped memory for tpu_custom_call.1']
    #allocation5 [shape = 'u8[2097152]{0}', space=vmem, size = 0x200000, scoped, tag = 'input window, operand 1, single buffered']
    #allocation6 [shape = 's32[1]{0}', space=sflag, size = 0x4, scoped, tag = 'scoped memory for tpu_custom_call.1']
    #allocation7 [shape = 'u8[2048]{0}', space=vmem, size = 0x800, scoped, tag = 'input window, operand 2, single buffered']
    #allocation8 [shape = 'u8[131072]{0}', space=vmem, size = 0x20000, scoped, tag = 'input window, operand 3, single buffered']
    #allocation9 [shape = 's32[1]{0}', space=sflag, size = 0x4, scoped, tag = 'scoped memory for tpu_custom_call.1']
    #allocation10 [shape = 'u8[8192]{0}', space=vmem, size = 0x2000, scoped, tag = 'output window, operand 0']
    %9 = vsyncpa [#allocation3], 0
    %s10 = scalar_lea.sflag [#allocation3], 1
    %11 = vsyncpa %s10, 0
    %12 = vsyncpa [#allocation6], 0
    %13 = vsyncpa [#allocation9], 0
    %14 = vsyncpa [#allocation4], 0
    %s15 = scalar_lea.sflag [#allocation4], 1
    %16 = vsyncpa %s15, 0
    loop: start=0, step=1, limit=4
    $region2: #{tpu_custom_call.1} parent=1 // loop_pre_header
      _
    $region3: #{tpu_custom_call.1} parent=1 // loop_header
      %s18 = sphi 0, %s22
      %p19 = scmp.ge.s32.totalorder %s18, 4
      %s28 = sphi 0, %s30
      %s31 = sphi 0, %s28
      %s32 = sphi 0, %s31
      %s48 = sphi 0, %s32
      %s52 = sphi 0, %s52
      %s54 = sphi 0, %s52
      %s55 = sphi 0, %s54
      %s69 = sphi 0, %s55
      %s73 = sphi 0, %s73
      %s75 = sphi 0, %s73
      %s76 = sphi 0, %s75
      %s90 = sphi 0, %s76
      %s94 = sphi 0, %s94
      %s96 = sphi 0, %s94
      %s97 = sphi 0, %s96
      %s111 = sphi 0, %s97
      %s117 = sphi 0, %s119
      %s120 = sphi 0, %s117
      %s121 = sphi 0, %s120
      %s137 = sphi 0, %s121
    $region4: #{tpu_custom_call.1} parent=1 // loop_header_branch
      %21 = sbr.rel (%p19) target = $region8
    $region5: #{tpu_custom_call.1} parent=1 // loop_body
      %s23 = ssub.s32 %s18, 1
      %s24 = ssub.s32 %s18, 2
      %s25 = sadd.s32 %s18, 1
      %s26 = ssub.s32 %s18, %s25
      %p27 = scmp.eq.s32.totalorder %s26, 0
      %s29 = sadd.s32 %s28, 1
      %s30 = scalar_select %p27, %s28, %s29
      %p33 = pneg %p27
      %p34 = scmp.eq.s32.totalorder %s18, 1
      %p35 = por %p33, %p34
      %p36 = scmp.ne.s32.totalorder %s28, %s31
      %p37 = scmp.eq.s32.totalorder %s18, 0
      %p38 = por %p36, %p37
      %p39 = scmp.ne.s32.totalorder %s28, %s31
      %p40 = scmp.eq.s32.totalorder %s23, 1
      %p41 = por %p39, %p40
      %p42 = scmp.ne.s32.totalorder %s31, %s32
      %p43 = scmp.eq.s32.totalorder %s23, 0
      %p44 = por %p42, %p43
      %p45 = scmp.ne.s32.totalorder %s31, %s32
      %p46 = scmp.eq.s32.totalorder %s24, 1
      %p47 = por %p45, %p46
      %p49 = scmp.ne.s32.totalorder %s32, %s48
      %p50 = scmp.eq.s32.totalorder %s24, 0
      %p51 = por %p49, %p50
      %s53 = sadd.s32 %s52, 1
      %p56 = scmp.eq.s32.totalorder %s18, 1
      %p57 = scmp.ne.s32.totalorder %s52, %s54
      %p58 = scmp.eq.s32.totalorder %s18, 0
      %p59 = por %p57, %p58
      %p60 = scmp.ne.s32.totalorder %s52, %s54
      %p61 = scmp.eq.s32.totalorder %s23, 1
      %p62 = por %p60, %p61
      %p63 = scmp.ne.s32.totalorder %s54, %s55
      %p64 = scmp.eq.s32.totalorder %s23, 0
      %p65 = por %p63, %p64
      %p66 = scmp.ne.s32.totalorder %s54, %s55
      %p67 = scmp.eq.s32.totalorder %s24, 1
      %p68 = por %p66, %p67
      %p70 = scmp.ne.s32.totalorder %s55, %s69
      %p71 = scmp.eq.s32.totalorder %s24, 0
      %p72 = por %p70, %p71
      %s74 = sadd.s32 %s73, 1
      %p77 = scmp.eq.s32.totalorder %s18, 1
      %p78 = scmp.ne.s32.totalorder %s73, %s75
      %p79 = scmp.eq.s32.totalorder %s18, 0
      %p80 = por %p78, %p79
      %p81 = scmp.ne.s32.totalorder %s73, %s75
      %p82 = scmp.eq.s32.totalorder %s23, 1
      %p83 = por %p81, %p82
      %p84 = scmp.ne.s32.totalorder %s75, %s76
      %p85 = scmp.eq.s32.totalorder %s23, 0
      %p86 = por %p84, %p85
      %p87 = scmp.ne.s32.totalorder %s75, %s76
      %p88 = scmp.eq.s32.totalorder %s24, 1
      %p89 = por %p87, %p88
      %p91 = scmp.ne.s32.totalorder %s76, %s90
      %p92 = scmp.eq.s32.totalorder %s24, 0
      %p93 = por %p91, %p92
      %s95 = sadd.s32 %s94, 1
      %p98 = scmp.eq.s32.totalorder %s18, 1
      %p99 = scmp.ne.s32.totalorder %s94, %s96
      %p100 = scmp.eq.s32.totalorder %s18, 0
      %p101 = por %p99, %p100
      %p102 = scmp.ne.s32.totalorder %s94, %s96
      %p103 = scmp.eq.s32.totalorder %s23, 1
      %p104 = por %p102, %p103
      %p105 = scmp.ne.s32.totalorder %s96, %s97
      %p106 = scmp.eq.s32.totalorder %s23, 0
      %p107 = por %p105, %p106
      %p108 = scmp.ne.s32.totalorder %s96, %s97
      %p109 = scmp.eq.s32.totalorder %s24, 1
      %p110 = por %p108, %p109
      %p112 = scmp.ne.s32.totalorder %s97, %s111
      %p113 = scmp.eq.s32.totalorder %s24, 0
      %p114 = por %p112, %p113
      %s115 = ssub.s32 %s18, %s25
      %p116 = scmp.eq.s32.totalorder %s115, 0
      %s118 = sadd.s32 %s117, 1
      %s119 = scalar_select %p116, %s117, %s118
      %p122 = pneg %p116
      %p123 = scmp.eq.s32.totalorder %s18, 1
      %p124 = por %p122, %p123
      %p125 = scmp.ne.s32.totalorder %s117, %s120
      %p126 = scmp.eq.s32.totalorder %s18, 0
      %p127 = por %p125, %p126
      %p128 = scmp.ne.s32.totalorder %s117, %s120
      %p129 = scmp.eq.s32.totalorder %s23, 1
      %p130 = por %p128, %p129
      %p131 = scmp.ne.s32.totalorder %s120, %s121
      %p132 = scmp.eq.s32.totalorder %s23, 0
      %p133 = por %p131, %p132
      %p134 = scmp.ne.s32.totalorder %s120, %s121
      %p135 = scmp.eq.s32.totalorder %s24, 1
      %p136 = por %p134, %p135
      %p138 = scmp.ne.s32.totalorder %s121, %s137
      %p139 = scmp.eq.s32.totalorder %s24, 0
      %p140 = por %p138, %p139
      %p141 = scmp.le.s32.totalorder 1, %s18
      %p142 = scmp.lt.s32.totalorder %s18, 3
      %p143 = pnand %p141, %p142
      %p144 = pneg %p143
      // Predicated region
      $region9: #{tpu_custom_call.1} parent=5 // pred_check
        _
      $region10: #{tpu_custom_call.1} parent=5 // pred_check_branch
        %146 = sbr.rel (%p143) target = $region12
      $region11: #{tpu_custom_call.1} parent=5 // pred_region
        %s147 = ssub.s32 %s18, 1
        // Predicated region
        $region13: #{tpu_custom_call.1} parent=11 // pred_check
          %p148 = pneg %p65
        $region14: #{tpu_custom_call.1} parent=11 // pred_check_branch
          %150 = sbr.rel (%p148) target = $region16
        $region15: #{tpu_custom_call.1} parent=11 // pred_region
          %s152 = ssub.s32 65536, 65536
          %153 = vsyncadd [#allocation6], %s152
          %s154 = sshll.u32 [#allocation5], 4
          %s155 = int_to_ptr.vmem [resolvable:$true] %s154
          %160 = dma.hbm_to_vmem [thread:$0]  %s1, 65536, %s155, [#allocation6], 256, 256, 16
        $region16: #{tpu_custom_call.1} parent=11 // pred_fallthru
          _
        // Predicated region
        $region17: #{tpu_custom_call.1} parent=11 // pred_check
          %p161 = pneg %p86
        $region18: #{tpu_custom_call.1} parent=11 // pred_check_branch
          %163 = sbr.rel (%p161) target = $region20
        $region19: #{tpu_custom_call.1} parent=11 // pred_region
          %s165 = ssub.s32 64, 64
          %166 = vsyncadd [#allocation6], %s165
          %s168 = sshll.u32 [#allocation7], 4
          %s169 = int_to_ptr.vmem [resolvable:$true] %s168
          %171 = dma.hbm_to_vmem [thread:$0]  %s2, 64, %s169, [#allocation6]
        $region20: #{tpu_custom_call.1} parent=11 // pred_fallthru
          _
        // Predicated region
        $region21: #{tpu_custom_call.1} parent=11 // pred_check
          %p172 = pneg %p107
        $region22: #{tpu_custom_call.1} parent=11 // pred_check_branch
          %174 = sbr.rel (%p172) target = $region24
        $region23: #{tpu_custom_call.1} parent=11 // pred_region
          %s176 = ssub.s32 4096, 4096
          %177 = vsyncadd [#allocation9], %s176
          %s178 = sshll.u32 [#allocation8], 4
          %s179 = int_to_ptr.vmem [resolvable:$true] %s178
          %184 = dma.hbm_to_vmem [thread:$0]  %s3, 4096, %s179, [#allocation9], 64, 64, 4
        $region24: #{tpu_custom_call.1} parent=11 // pred_fallthru
          _
      $region12: #{tpu_custom_call.1} parent=5 // pred_fallthru
        _
      %p185 = scmp.lt.s32.totalorder %s18, 2
      // Predicated region
      $region25: #{tpu_custom_call.1} parent=5 // pred_check
        %p186 = pneg %p185
      $region26: #{tpu_custom_call.1} parent=5 // pred_check_branch
        %188 = sbr.rel (%p186) target = $region28
      $region27: #{tpu_custom_call.1} parent=5 // pred_region
        // Predicated region
        $region29: #{tpu_custom_call.1} parent=27 // pred_check
          %p189 = pneg %p38
        $region30: #{tpu_custom_call.1} parent=27 // pred_check_branch
          %191 = sbr.rel (%p189) target = $region32
        $region31: #{tpu_custom_call.1} parent=27 // pred_region
          %s192 = sand.u32 %s28, 1
          %s193 = scalar_lea.sflag [#allocation3], %s192
          %s194 = sand.u32 %s28, 1
          %s195 = smul.addr %s194, 1024
          %s196 = scalar_lea.vmem [#allocation2], %s195
          %s197 = smul.u32 8, %s18
          %s199 = ssub.s32 16384, 16384
          %200 = vsyncadd %s193, %s199
          %s201 = smul.addr %s197, 32
          %s202 = smul.addr %s201, 64
          %s203 = scalar_lea.hbm %s0, %s202
          %s204 = sshll.u32 %s196, 4
          %s205 = int_to_ptr.vmem [resolvable:$true] %s204
          %210 = dma.hbm_to_vmem [thread:$0]  %s203, 16384, %s205, %s193, 1024, 1024, 64
        $region32: #{tpu_custom_call.1} parent=27 // pred_fallthru
          _
      $region28: #{tpu_custom_call.1} parent=5 // pred_fallthru
        _
      %p211 = scmp.le.s32.totalorder 1, %s18
      %p212 = scmp.lt.s32.totalorder %s18, 3
      %p213 = pnand %p211, %p212
      %p214 = pneg %p213
      // Predicated region
      $region33: #{tpu_custom_call.1} parent=5 // pred_check
        _
      $region34: #{tpu_custom_call.1} parent=5 // pred_check_branch
        %216 = sbr.rel (%p213) target = $region36
      $region35: #{tpu_custom_call.1} parent=5 // pred_region
        %s217 = ssub.s32 %s18, 1
        %s218 = sand.u32 %s31, 1
        %s219 = scalar_lea.sflag [#allocation3], %s218
        %s220 = sand.u32 %s31, 1
        %s221 = smul.addr %s220, 1024
        %s222 = scalar_lea.vmem [#allocation2], %s221
        // Predicated region
        $region37: #{tpu_custom_call.1} parent=35 // pred_check
          %p223 = pneg %p44
        $region38: #{tpu_custom_call.1} parent=35 // pred_check_branch
          %225 = sbr.rel (%p223) target = $region40
        $region39: #{tpu_custom_call.1} parent=35 // pred_region
          %226 = dma.done %s219, 16384
        $region40: #{tpu_custom_call.1} parent=35 // pred_fallthru
          _
        // Predicated region
        $region41: #{tpu_custom_call.1} parent=35 // pred_check
          %p227 = pneg %p65
        $region42: #{tpu_custom_call.1} parent=35 // pred_check_branch
          %229 = sbr.rel (%p227) target = $region44
        $region43: #{tpu_custom_call.1} parent=35 // pred_region
          %230 = dma.done [#allocation6], 65536
        $region44: #{tpu_custom_call.1} parent=35 // pred_fallthru
          _
        // Predicated region
        $region45: #{tpu_custom_call.1} parent=35 // pred_check
          %p231 = pneg %p86
        $region46: #{tpu_custom_call.1} parent=35 // pred_check_branch
          %233 = sbr.rel (%p231) target = $region48
        $region47: #{tpu_custom_call.1} parent=35 // pred_region
          %234 = dma.done [#allocation6], 64
        $region48: #{tpu_custom_call.1} parent=35 // pred_fallthru
          _
        // Predicated region
        $region49: #{tpu_custom_call.1} parent=35 // pred_check
          %p235 = pneg %p107
        $region50: #{tpu_custom_call.1} parent=35 // pred_check_branch
          %237 = sbr.rel (%p235) target = $region52
        $region51: #{tpu_custom_call.1} parent=35 // pred_region
          %238 = dma.done [#allocation9], 4096
        $region52: #{tpu_custom_call.1} parent=35 // pred_fallthru
          _
        %s239 = sand.u32 %s31, 1
        %s240 = scalar_lea.sflag [#allocation3], %s239
        %s241 = sand.u32 %s31, 1
        %s242 = smul.addr %s241, 1024
        %s243 = scalar_lea.vmem [#allocation2], %s242
        %p244 = pneg %p44
        %p245 = pneg %p41
        %p246 = pneg %p65
        %p247 = pneg %p62
        %p248 = pneg %p86
        %p249 = pneg %p83
        %p250 = pneg %p107
        %p251 = pneg %p104
        %p252 = pneg %p133
        %p253 = pneg %p130
        %s254 = sand.u32 %s120, 1
        %s255 = scalar_lea.sflag [#allocation4], %s254
        %s256 = sand.u32 %s120, 1
        %s257 = smul.addr %s256, 8
        %s258 = scalar_lea.vmem [#allocation10], %s257
        %s259 = smul.u32 8, %s23
        %v261 = vld [vmem:[%s222] sm:$0xff]
        %v262 = vld [vmem:[%s222 + $0x8] sm:$0xff]
        %v263 = vld [vmem:[%s222 + $0x10] sm:$0xff]
        %v264 = vld [vmem:[%s222 + $0x18] sm:$0xff]
        %v265 = vld [vmem:[%s222 + $0x20] sm:$0xff]
        %v266 = vld [vmem:[%s222 + $0x28] sm:$0xff]
        %v267 = vld [vmem:[%s222 + $0x30] sm:$0xff]
        %v268 = vld [vmem:[%s222 + $0x38] sm:$0xff]
        %v269 = vld [vmem:[%s222 + $0x40] sm:$0xff]
        %v270 = vld [vmem:[%s222 + $0x48] sm:$0xff]
        %v271 = vld [vmem:[%s222 + $0x50] sm:$0xff]
        %v272 = vld [vmem:[%s222 + $0x58] sm:$0xff]
        %v273 = vld [vmem:[%s222 + $0x60] sm:$0xff]
        %v274 = vld [vmem:[%s222 + $0x68] sm:$0xff]
        %v275 = vld [vmem:[%s222 + $0x70] sm:$0xff]
        %v276 = vld [vmem:[%s222 + $0x78] sm:$0xff]
        %v277 = vld [vmem:[%s222 + $0x80] sm:$0xff]
        %v278 = vld [vmem:[%s222 + $0x88] sm:$0xff]
        %v279 = vld [vmem:[%s222 + $0x90] sm:$0xff]
        %v280 = vld [vmem:[%s222 + $0x98] sm:$0xff]
        %v281 = vld [vmem:[%s222 + $0xa0] sm:$0xff]
        %v282 = vld [vmem:[%s222 + $0xa8] sm:$0xff]
        %v283 = vld [vmem:[%s222 + $0xb0] sm:$0xff]
        %v284 = vld [vmem:[%s222 + $0xb8] sm:$0xff]
        %v285 = vld [vmem:[%s222 + $0xc0] sm:$0xff]
        %v286 = vld [vmem:[%s222 + $0xc8] sm:$0xff]
        %v287 = vld [vmem:[%s222 + $0xd0] sm:$0xff]
        %v288 = vld [vmem:[%s222 + $0xd8] sm:$0xff]
        %v289 = vld [vmem:[%s222 + $0xe0] sm:$0xff]
        %v290 = vld [vmem:[%s222 + $0xe8] sm:$0xff]
        %v291 = vld [vmem:[%s222 + $0xf0] sm:$0xff]
        %v292 = vld [vmem:[%s222 + $0xf8] sm:$0xff]
        %v293 = vld [vmem:[%s222 + $0x100] sm:$0xff]
        %v294 = vld [vmem:[%s222 + $0x108] sm:$0xff]
        %v295 = vld [vmem:[%s222 + $0x110] sm:$0xff]
        %v296 = vld [vmem:[%s222 + $0x118] sm:$0xff]
        %v297 = vld [vmem:[%s222 + $0x120] sm:$0xff]
        %v298 = vld [vmem:[%s222 + $0x128] sm:$0xff]
        %v299 = vld [vmem:[%s222 + $0x130] sm:$0xff]
        %v300 = vld [vmem:[%s222 + $0x138] sm:$0xff]
        %v301 = vld [vmem:[%s222 + $0x140] sm:$0xff]
        %v302 = vld [vmem:[%s222 + $0x148] sm:$0xff]
        %v303 = vld [vmem:[%s222 + $0x150] sm:$0xff]
        %v304 = vld [vmem:[%s222 + $0x158] sm:$0xff]
        %v305 = vld [vmem:[%s222 + $0x160] sm:$0xff]
        %v306 = vld [vmem:[%s222 + $0x168] sm:$0xff]
        %v307 = vld [vmem:[%s222 + $0x170] sm:$0xff]
        %v308 = vld [vmem:[%s222 + $0x178] sm:$0xff]
        %v309 = vld [vmem:[%s222 + $0x180] sm:$0xff]
        %v310 = vld [vmem:[%s222 + $0x188] sm:$0xff]
        %v311 = vld [vmem:[%s222 + $0x190] sm:$0xff]
        %v312 = vld [vmem:[%s222 + $0x198] sm:$0xff]
        %v313 = vld [vmem:[%s222 + $0x1a0] sm:$0xff]
        %v314 = vld [vmem:[%s222 + $0x1a8] sm:$0xff]
        %v315 = vld [vmem:[%s222 + $0x1b0] sm:$0xff]
        %v316 = vld [vmem:[%s222 + $0x1b8] sm:$0xff]
        %v317 = vld [vmem:[%s222 + $0x1c0] sm:$0xff]
        %v318 = vld [vmem:[%s222 + $0x1c8] sm:$0xff]
        %v319 = vld [vmem:[%s222 + $0x1d0] sm:$0xff]
        %v320 = vld [vmem:[%s222 + $0x1d8] sm:$0xff]
        %v321 = vld [vmem:[%s222 + $0x1e0] sm:$0xff]
        %v322 = vld [vmem:[%s222 + $0x1e8] sm:$0xff]
        %v323 = vld [vmem:[%s222 + $0x1f0] sm:$0xff]
        %v324 = vld [vmem:[%s222 + $0x1f8] sm:$0xff]
        %v325 = vld [vmem:[%s222 + $0x200] sm:$0xff]
        %v326 = vld [vmem:[%s222 + $0x208] sm:$0xff]
        %v327 = vld [vmem:[%s222 + $0x210] sm:$0xff]
        %v328 = vld [vmem:[%s222 + $0x218] sm:$0xff]
        %v329 = vld [vmem:[%s222 + $0x220] sm:$0xff]
        %v330 = vld [vmem:[%s222 + $0x228] sm:$0xff]
        %v331 = vld [vmem:[%s222 + $0x230] sm:$0xff]
        %v332 = vld [vmem:[%s222 + $0x238] sm:$0xff]
        %v333 = vld [vmem:[%s222 + $0x240] sm:$0xff]
        %v334 = vld [vmem:[%s222 + $0x248] sm:$0xff]
        %v335 = vld [vmem:[%s222 + $0x250] sm:$0xff]
        %v336 = vld [vmem:[%s222 + $0x258] sm:$0xff]
        %v337 = vld [vmem:[%s222 + $0x260] sm:$0xff]
        %v338 = vld [vmem:[%s222 + $0x268] sm:$0xff]
        %v339 = vld [vmem:[%s222 + $0x270] sm:$0xff]
        %v340 = vld [vmem:[%s222 + $0x278] sm:$0xff]
        %v341 = vld [vmem:[%s222 + $0x280] sm:$0xff]
        %v342 = vld [vmem:[%s222 + $0x288] sm:$0xff]
        %v343 = vld [vmem:[%s222 + $0x290] sm:$0xff]
        %v344 = vld [vmem:[%s222 + $0x298] sm:$0xff]
        %v345 = vld [vmem:[%s222 + $0x2a0] sm:$0xff]
        %v346 = vld [vmem:[%s222 + $0x2a8] sm:$0xff]
        %v347 = vld [vmem:[%s222 + $0x2b0] sm:$0xff]
        %v348 = vld [vmem:[%s222 + $0x2b8] sm:$0xff]
        %v349 = vld [vmem:[%s222 + $0x2c0] sm:$0xff]
        %v350 = vld [vmem:[%s222 + $0x2c8] sm:$0xff]
        %v351 = vld [vmem:[%s222 + $0x2d0] sm:$0xff]
        %v352 = vld [vmem:[%s222 + $0x2d8] sm:$0xff]
        %v353 = vld [vmem:[%s222 + $0x2e0] sm:$0xff]
        %v354 = vld [vmem:[%s222 + $0x2e8] sm:$0xff]
        %v355 = vld [vmem:[%s222 + $0x2f0] sm:$0xff]
        %v356 = vld [vmem:[%s222 + $0x2f8] sm:$0xff]
        %v357 = vld [vmem:[%s222 + $0x300] sm:$0xff]
        %v358 = vld [vmem:[%s222 + $0x308] sm:$0xff]
        %v359 = vld [vmem:[%s222 + $0x310] sm:$0xff]
        %v360 = vld [vmem:[%s222 + $0x318] sm:$0xff]
        %v361 = vld [vmem:[%s222 + $0x320] sm:$0xff]
        %v362 = vld [vmem:[%s222 + $0x328] sm:$0xff]
        %v363 = vld [vmem:[%s222 + $0x330] sm:$0xff]
        %v364 = vld [vmem:[%s222 + $0x338] sm:$0xff]
        %v365 = vld [vmem:[%s222 + $0x340] sm:$0xff]
        %v366 = vld [vmem:[%s222 + $0x348] sm:$0xff]
        %v367 = vld [vmem:[%s222 + $0x350] sm:$0xff]
        %v368 = vld [vmem:[%s222 + $0x358] sm:$0xff]
        %v369 = vld [vmem:[%s222 + $0x360] sm:$0xff]
        %v370 = vld [vmem:[%s222 + $0x368] sm:$0xff]
        %v371 = vld [vmem:[%s222 + $0x370] sm:$0xff]
        %v372 = vld [vmem:[%s222 + $0x378] sm:$0xff]
        %v373 = vld [vmem:[%s222 + $0x380] sm:$0xff]
        %v374 = vld [vmem:[%s222 + $0x388] sm:$0xff]
        %v375 = vld [vmem:[%s222 + $0x390] sm:$0xff]
        %v376 = vld [vmem:[%s222 + $0x398] sm:$0xff]
        %v377 = vld [vmem:[%s222 + $0x3a0] sm:$0xff]
        %v378 = vld [vmem:[%s222 + $0x3a8] sm:$0xff]
        %v379 = vld [vmem:[%s222 + $0x3b0] sm:$0xff]
        %v380 = vld [vmem:[%s222 + $0x3b8] sm:$0xff]
        %v381 = vld [vmem:[%s222 + $0x3c0] sm:$0xff]
        %v382 = vld [vmem:[%s222 + $0x3c8] sm:$0xff]
        %v383 = vld [vmem:[%s222 + $0x3d0] sm:$0xff]
        %v384 = vld [vmem:[%s222 + $0x3d8] sm:$0xff]
        %v385 = vld [vmem:[%s222 + $0x3e0] sm:$0xff]
        %v386 = vld [vmem:[%s222 + $0x3e8] sm:$0xff]
        %v387 = vld [vmem:[%s222 + $0x3f0] sm:$0xff]
        %v388 = vld [vmem:[%s222 + $0x3f8] sm:$0xff]
        %v389 = vunpack.c.l.bf16 %v261
        %v390 = vunpack.c.h.bf16 %v261
        %v391 = vunpack.c.l.bf16 %v262
        %v392 = vunpack.c.h.bf16 %v262
        %v393 = vunpack.c.l.bf16 %v263
        %v394 = vunpack.c.h.bf16 %v263
        %v395 = vunpack.c.l.bf16 %v264
        %v396 = vunpack.c.h.bf16 %v264
        %v397 = vunpack.c.l.bf16 %v265
        %v398 = vunpack.c.h.bf16 %v265
        %v399 = vunpack.c.l.bf16 %v266
        %v400 = vunpack.c.h.bf16 %v266
        %v401 = vunpack.c.l.bf16 %v267
        %v402 = vunpack.c.h.bf16 %v267
        %v403 = vunpack.c.l.bf16 %v268
        %v404 = vunpack.c.h.bf16 %v268
        %v405 = vunpack.c.l.bf16 %v269
        %v406 = vunpack.c.h.bf16 %v269
        %v407 = vunpack.c.l.bf16 %v270
        %v408 = vunpack.c.h.bf16 %v270
        %v409 = vunpack.c.l.bf16 %v271
        %v410 = vunpack.c.h.bf16 %v271
        %v411 = vunpack.c.l.bf16 %v272
        %v412 = vunpack.c.h.bf16 %v272
        %v413 = vunpack.c.l.bf16 %v273
        %v414 = vunpack.c.h.bf16 %v273
        %v415 = vunpack.c.l.bf16 %v274
        %v416 = vunpack.c.h.bf16 %v274
        %v417 = vunpack.c.l.bf16 %v275
        %v418 = vunpack.c.h.bf16 %v275
        %v419 = vunpack.c.l.bf16 %v276
        %v420 = vunpack.c.h.bf16 %v276
        %v421 = vunpack.c.l.bf16 %v277
        %v422 = vunpack.c.h.bf16 %v277
        %v423 = vunpack.c.l.bf16 %v278
        %v424 = vunpack.c.h.bf16 %v278
        %v425 = vunpack.c.l.bf16 %v279
        %v426 = vunpack.c.h.bf16 %v279
        %v427 = vunpack.c.l.bf16 %v280
        %v428 = vunpack.c.h.bf16 %v280
        %v429 = vunpack.c.l.bf16 %v281
        %v430 = vunpack.c.h.bf16 %v281
        %v431 = vunpack.c.l.bf16 %v282
        %v432 = vunpack.c.h.bf16 %v282
        %v433 = vunpack.c.l.bf16 %v283
        %v434 = vunpack.c.h.bf16 %v283
        %v435 = vunpack.c.l.bf16 %v284
        %v436 = vunpack.c.h.bf16 %v284
        %v437 = vunpack.c.l.bf16 %v285
        %v438 = vunpack.c.h.bf16 %v285
        %v439 = vunpack.c.l.bf16 %v286
        %v440 = vunpack.c.h.bf16 %v286
        %v441 = vunpack.c.l.bf16 %v287
        %v442 = vunpack.c.h.bf16 %v287
        %v443 = vunpack.c.l.bf16 %v288
        %v444 = vunpack.c.h.bf16 %v288
        %v445 = vunpack.c.l.bf16 %v289
        %v446 = vunpack.c.h.bf16 %v289
        %v447 = vunpack.c.l.bf16 %v290
        %v448 = vunpack.c.h.bf16 %v290
        %v449 = vunpack.c.l.bf16 %v291
        %v450 = vunpack.c.h.bf16 %v291
        %v451 = vunpack.c.l.bf16 %v292
        %v452 = vunpack.c.h.bf16 %v292
        %v453 = vunpack.c.l.bf16 %v293
        %v454 = vunpack.c.h.bf16 %v293
        %v455 = vunpack.c.l.bf16 %v294
        %v456 = vunpack.c.h.bf16 %v294
        %v457 = vunpack.c.l.bf16 %v295
        %v458 = vunpack.c.h.bf16 %v295
        %v459 = vunpack.c.l.bf16 %v296
        %v460 = vunpack.c.h.bf16 %v296
        %v461 = vunpack.c.l.bf16 %v297
        %v462 = vunpack.c.h.bf16 %v297
        %v463 = vunpack.c.l.bf16 %v298
        %v464 = vunpack.c.h.bf16 %v298
        %v465 = vunpack.c.l.bf16 %v299
        %v466 = vunpack.c.h.bf16 %v299
        %v467 = vunpack.c.l.bf16 %v300
        %v468 = vunpack.c.h.bf16 %v300
        %v469 = vunpack.c.l.bf16 %v301
        %v470 = vunpack.c.h.bf16 %v301
        %v471 = vunpack.c.l.bf16 %v302
        %v472 = vunpack.c.h.bf16 %v302
        %v473 = vunpack.c.l.bf16 %v303
        %v474 = vunpack.c.h.bf16 %v303
        %v475 = vunpack.c.l.bf16 %v304
        %v476 = vunpack.c.h.bf16 %v304
        %v477 = vunpack.c.l.bf16 %v305
        %v478 = vunpack.c.h.bf16 %v305
        %v479 = vunpack.c.l.bf16 %v306
        %v480 = vunpack.c.h.bf16 %v306
        %v481 = vunpack.c.l.bf16 %v307
        %v482 = vunpack.c.h.bf16 %v307
        %v483 = vunpack.c.l.bf16 %v308
        %v484 = vunpack.c.h.bf16 %v308
        %v485 = vunpack.c.l.bf16 %v309
        %v486 = vunpack.c.h.bf16 %v309
        %v487 = vunpack.c.l.bf16 %v310
        %v488 = vunpack.c.h.bf16 %v310
        %v489 = vunpack.c.l.bf16 %v311
        %v490 = vunpack.c.h.bf16 %v311
        %v491 = vunpack.c.l.bf16 %v312
        %v492 = vunpack.c.h.bf16 %v312
        %v493 = vunpack.c.l.bf16 %v313
        %v494 = vunpack.c.h.bf16 %v313
        %v495 = vunpack.c.l.bf16 %v314
        %v496 = vunpack.c.h.bf16 %v314
        %v497 = vunpack.c.l.bf16 %v315
        %v498 = vunpack.c.h.bf16 %v315
        %v499 = vunpack.c.l.bf16 %v316
        %v500 = vunpack.c.h.bf16 %v316
        %v501 = vunpack.c.l.bf16 %v317
        %v502 = vunpack.c.h.bf16 %v317
        %v503 = vunpack.c.l.bf16 %v318
        %v504 = vunpack.c.h.bf16 %v318
        %v505 = vunpack.c.l.bf16 %v319
        %v506 = vunpack.c.h.bf16 %v319
        %v507 = vunpack.c.l.bf16 %v320
        %v508 = vunpack.c.h.bf16 %v320
        %v509 = vunpack.c.l.bf16 %v321
        %v510 = vunpack.c.h.bf16 %v321
        %v511 = vunpack.c.l.bf16 %v322
        %v512 = vunpack.c.h.bf16 %v322
        %v513 = vunpack.c.l.bf16 %v323
        %v514 = vunpack.c.h.bf16 %v323
        %v515 = vunpack.c.l.bf16 %v324
        %v516 = vunpack.c.h.bf16 %v324
        %v517 = vunpack.c.l.bf16 %v325
        %v518 = vunpack.c.h.bf16 %v325
        %v519 = vunpack.c.l.bf16 %v326
        %v520 = vunpack.c.h.bf16 %v326
        %v521 = vunpack.c.l.bf16 %v327
        %v522 = vunpack.c.h.bf16 %v327
        %v523 = vunpack.c.l.bf16 %v328
        %v524 = vunpack.c.h.bf16 %v328
        %v525 = vunpack.c.l.bf16 %v329
        %v526 = vunpack.c.h.bf16 %v329
        %v527 = vunpack.c.l.bf16 %v330
        %v528 = vunpack.c.h.bf16 %v330
        %v529 = vunpack.c.l.bf16 %v331
        %v530 = vunpack.c.h.bf16 %v331
        %v531 = vunpack.c.l.bf16 %v332
        %v532 = vunpack.c.h.bf16 %v332
        %v533 = vunpack.c.l.bf16 %v333
        %v534 = vunpack.c.h.bf16 %v333
        %v535 = vunpack.c.l.bf16 %v334
        %v536 = vunpack.c.h.bf16 %v334
        %v537 = vunpack.c.l.bf16 %v335
        %v538 = vunpack.c.h.bf16 %v335
        %v539 = vunpack.c.l.bf16 %v336
        %v540 = vunpack.c.h.bf16 %v336
        %v541 = vunpack.c.l.bf16 %v337
        %v542 = vunpack.c.h.bf16 %v337
        %v543 = vunpack.c.l.bf16 %v338
        %v544 = vunpack.c.h.bf16 %v338
        %v545 = vunpack.c.l.bf16 %v339
        %v546 = vunpack.c.h.bf16 %v339
        %v547 = vunpack.c.l.bf16 %v340
        %v548 = vunpack.c.h.bf16 %v340
        %v549 = vunpack.c.l.bf16 %v341
        %v550 = vunpack.c.h.bf16 %v341
        %v551 = vunpack.c.l.bf16 %v342
        %v552 = vunpack.c.h.bf16 %v342
        %v553 = vunpack.c.l.bf16 %v343
        %v554 = vunpack.c.h.bf16 %v343
        %v555 = vunpack.c.l.bf16 %v344
        %v556 = vunpack.c.h.bf16 %v344
        %v557 = vunpack.c.l.bf16 %v345
        %v558 = vunpack.c.h.bf16 %v345
        %v559 = vunpack.c.l.bf16 %v346
        %v560 = vunpack.c.h.bf16 %v346
        %v561 = vunpack.c.l.bf16 %v347
        %v562 = vunpack.c.h.bf16 %v347
        %v563 = vunpack.c.l.bf16 %v348
        %v564 = vunpack.c.h.bf16 %v348
        %v565 = vunpack.c.l.bf16 %v349
        %v566 = vunpack.c.h.bf16 %v349
        %v567 = vunpack.c.l.bf16 %v350
        %v568 = vunpack.c.h.bf16 %v350
        %v569 = vunpack.c.l.bf16 %v351
        %v570 = vunpack.c.h.bf16 %v351
        %v571 = vunpack.c.l.bf16 %v352
        %v572 = vunpack.c.h.bf16 %v352
        %v573 = vunpack.c.l.bf16 %v353
        %v574 = vunpack.c.h.bf16 %v353
        %v575 = vunpack.c.l.bf16 %v354
        %v576 = vunpack.c.h.bf16 %v354
        %v577 = vunpack.c.l.bf16 %v355
        %v578 = vunpack.c.h.bf16 %v355
        %v579 = vunpack.c.l.bf16 %v356
        %v580 = vunpack.c.h.bf16 %v356
        %v581 = vunpack.c.l.bf16 %v357
        %v582 = vunpack.c.h.bf16 %v357
        %v583 = vunpack.c.l.bf16 %v358
        %v584 = vunpack.c.h.bf16 %v358
        %v585 = vunpack.c.l.bf16 %v359
        %v586 = vunpack.c.h.bf16 %v359
        %v587 = vunpack.c.l.bf16 %v360
        %v588 = vunpack.c.h.bf16 %v360
        %v589 = vunpack.c.l.bf16 %v361
        %v590 = vunpack.c.h.bf16 %v361
        %v591 = vunpack.c.l.bf16 %v362
        %v592 = vunpack.c.h.bf16 %v362
        %v593 = vunpack.c.l.bf16 %v363
        %v594 = vunpack.c.h.bf16 %v363
        %v595 = vunpack.c.l.bf16 %v364
        %v596 = vunpack.c.h.bf16 %v364
        %v597 = vunpack.c.l.bf16 %v365
        %v598 = vunpack.c.h.bf16 %v365
        %v599 = vunpack.c.l.bf16 %v366
        %v600 = vunpack.c.h.bf16 %v366
        %v601 = vunpack.c.l.bf16 %v367
        %v602 = vunpack.c.h.bf16 %v367
        %v603 = vunpack.c.l.bf16 %v368
        %v604 = vunpack.c.h.bf16 %v368
        %v605 = vunpack.c.l.bf16 %v369
        %v606 = vunpack.c.h.bf16 %v369
        %v607 = vunpack.c.l.bf16 %v370
        %v608 = vunpack.c.h.bf16 %v370
        %v609 = vunpack.c.l.bf16 %v371
        %v610 = vunpack.c.h.bf16 %v371
        %v611 = vunpack.c.l.bf16 %v372
        %v612 = vunpack.c.h.bf16 %v372
        %v613 = vunpack.c.l.bf16 %v373
        %v614 = vunpack.c.h.bf16 %v373
        %v615 = vunpack.c.l.bf16 %v374
        %v616 = vunpack.c.h.bf16 %v374
        %v617 = vunpack.c.l.bf16 %v375
        %v618 = vunpack.c.h.bf16 %v375
        %v619 = vunpack.c.l.bf16 %v376
        %v620 = vunpack.c.h.bf16 %v376
        %v621 = vunpack.c.l.bf16 %v377
        %v622 = vunpack.c.h.bf16 %v377
        %v623 = vunpack.c.l.bf16 %v378
        %v624 = vunpack.c.h.bf16 %v378
        %v625 = vunpack.c.l.bf16 %v379
        %v626 = vunpack.c.h.bf16 %v379
        %v627 = vunpack.c.l.bf16 %v380
        %v628 = vunpack.c.h.bf16 %v380
        %v629 = vunpack.c.l.bf16 %v381
        %v630 = vunpack.c.h.bf16 %v381
        %v631 = vunpack.c.l.bf16 %v382
        %v632 = vunpack.c.h.bf16 %v382
        %v633 = vunpack.c.l.bf16 %v383
        %v634 = vunpack.c.h.bf16 %v383
        %v635 = vunpack.c.l.bf16 %v384
        %v636 = vunpack.c.h.bf16 %v384
        %v637 = vunpack.c.l.bf16 %v385
        %v638 = vunpack.c.h.bf16 %v385
        %v639 = vunpack.c.l.bf16 %v386
        %v640 = vunpack.c.h.bf16 %v386
        %v641 = vunpack.c.l.bf16 %v387
        %v642 = vunpack.c.h.bf16 %v387
        %v643 = vunpack.c.l.bf16 %v388
        %v644 = vunpack.c.h.bf16 %v388
        %v645 = vadd.f32 %v389, %v405
        %v646 = vrot.slane %v645, 4
        %v647 = vadd.f32 %v645, %v646
        %v648 = vrot.slane %v647, 2
        %v649 = vadd.f32 %v647, %v648
        %v650 = vrot.slane %v649, 1
        %v651 = vadd.f32 %v649, %v650
        %v652 = vadd.f32 %v390, %v406
        %v653 = vrot.slane %v652, 4
        %v654 = vadd.f32 %v652, %v653
        %v655 = vrot.slane %v654, 2
        %v656 = vadd.f32 %v654, %v655
        %v657 = vrot.slane %v656, 1
        %v658 = vadd.f32 %v656, %v657
        %v659 = vadd.f32 %v391, %v407
        %v660 = vrot.slane %v659, 4
        %v661 = vadd.f32 %v659, %v660
        %v662 = vrot.slane %v661, 2
        %v663 = vadd.f32 %v661, %v662
        %v664 = vrot.slane %v663, 1
        %v665 = vadd.f32 %v663, %v664
        %v666 = vadd.f32 %v392, %v408
        %v667 = vrot.slane %v666, 4
        %v668 = vadd.f32 %v666, %v667
        %v669 = vrot.slane %v668, 2
        %v670 = vadd.f32 %v668, %v669
        %v671 = vrot.slane %v670, 1
        %v672 = vadd.f32 %v670, %v671
        %v673 = vadd.f32 %v393, %v409
        %v674 = vrot.slane %v673, 4
        %v675 = vadd.f32 %v673, %v674
        %v676 = vrot.slane %v675, 2
        %v677 = vadd.f32 %v675, %v676
        %v678 = vrot.slane %v677, 1
        %v679 = vadd.f32 %v677, %v678
        %v680 = vadd.f32 %v394, %v410
        %v681 = vrot.slane %v680, 4
        %v682 = vadd.f32 %v680, %v681
        %v683 = vrot.slane %v682, 2
        %v684 = vadd.f32 %v682, %v683
        %v685 = vrot.slane %v684, 1
        %v686 = vadd.f32 %v684, %v685
        %v687 = vadd.f32 %v395, %v411
        %v688 = vrot.slane %v687, 4
        %v689 = vadd.f32 %v687, %v688
        %v690 = vrot.slane %v689, 2
        %v691 = vadd.f32 %v689, %v690
        %v692 = vrot.slane %v691, 1
        %v693 = vadd.f32 %v691, %v692
        %v694 = vadd.f32 %v396, %v412
        %v695 = vrot.slane %v694, 4
        %v696 = vadd.f32 %v694, %v695
        %v697 = vrot.slane %v696, 2
        %v698 = vadd.f32 %v696, %v697
        %v699 = vrot.slane %v698, 1
        %v700 = vadd.f32 %v698, %v699
        %v701 = vadd.f32 %v397, %v413
        %v702 = vrot.slane %v701, 4
        %v703 = vadd.f32 %v701, %v702
        %v704 = vrot.slane %v703, 2
        %v705 = vadd.f32 %v703, %v704
        %v706 = vrot.slane %v705, 1
        %v707 = vadd.f32 %v705, %v706
        %v708 = vadd.f32 %v398, %v414
        %v709 = vrot.slane %v708, 4
        %v710 = vadd.f32 %v708, %v709
        %v711 = vrot.slane %v710, 2
        %v712 = vadd.f32 %v710, %v711
        %v713 = vrot.slane %v712, 1
        %v714 = vadd.f32 %v712, %v713
        %v715 = vadd.f32 %v399, %v415
        %v716 = vrot.slane %v715, 4
        %v717 = vadd.f32 %v715, %v716
        %v718 = vrot.slane %v717, 2
        %v719 = vadd.f32 %v717, %v718
        %v720 = vrot.slane %v719, 1
        %v721 = vadd.f32 %v719, %v720
        %v722 = vadd.f32 %v400, %v416
        %v723 = vrot.slane %v722, 4
        %v724 = vadd.f32 %v722, %v723
        %v725 = vrot.slane %v724, 2
        %v726 = vadd.f32 %v724, %v725
        %v727 = vrot.slane %v726, 1
        %v728 = vadd.f32 %v726, %v727
        %v729 = vadd.f32 %v401, %v417
        %v730 = vrot.slane %v729, 4
        %v731 = vadd.f32 %v729, %v730
        %v732 = vrot.slane %v731, 2
        %v733 = vadd.f32 %v731, %v732
        %v734 = vrot.slane %v733, 1
        %v735 = vadd.f32 %v733, %v734
        %v736 = vadd.f32 %v402, %v418
        %v737 = vrot.slane %v736, 4
        %v738 = vadd.f32 %v736, %v737
        %v739 = vrot.slane %v738, 2
        %v740 = vadd.f32 %v738, %v739
        %v741 = vrot.slane %v740, 1
        %v742 = vadd.f32 %v740, %v741
        %v743 = vadd.f32 %v403, %v419
        %v744 = vrot.slane %v743, 4
        %v745 = vadd.f32 %v743, %v744
        %v746 = vrot.slane %v745, 2
        %v747 = vadd.f32 %v745, %v746
        %v748 = vrot.slane %v747, 1
        %v749 = vadd.f32 %v747, %v748
        %v750 = vadd.f32 %v404, %v420
        %v751 = vrot.slane %v750, 4
        %v752 = vadd.f32 %v750, %v751
        %v753 = vrot.slane %v752, 2
        %v754 = vadd.f32 %v752, %v753
        %v755 = vrot.slane %v754, 1
        %v756 = vadd.f32 %v754, %v755
        %v757 = vadd.f32 %v421, %v437
        %v758 = vrot.slane %v757, 4
        %v759 = vadd.f32 %v757, %v758
        %v760 = vrot.slane %v759, 2
        %v761 = vadd.f32 %v759, %v760
        %v762 = vrot.slane %v761, 1
        %v763 = vadd.f32 %v761, %v762
        %v764 = vadd.f32 %v422, %v438
        %v765 = vrot.slane %v764, 4
        %v766 = vadd.f32 %v764, %v765
        %v767 = vrot.slane %v766, 2
        %v768 = vadd.f32 %v766, %v767
        %v769 = vrot.slane %v768, 1
        %v770 = vadd.f32 %v768, %v769
        %v771 = vadd.f32 %v423, %v439
        %v772 = vrot.slane %v771, 4
        %v773 = vadd.f32 %v771, %v772
        %v774 = vrot.slane %v773, 2
        %v775 = vadd.f32 %v773, %v774
        %v776 = vrot.slane %v775, 1
        %v777 = vadd.f32 %v775, %v776
        %v778 = vadd.f32 %v424, %v440
        %v779 = vrot.slane %v778, 4
        %v780 = vadd.f32 %v778, %v779
        %v781 = vrot.slane %v780, 2
        %v782 = vadd.f32 %v780, %v781
        %v783 = vrot.slane %v782, 1
        %v784 = vadd.f32 %v782, %v783
        %v785 = vadd.f32 %v425, %v441
        %v786 = vrot.slane %v785, 4
        %v787 = vadd.f32 %v785, %v786
        %v788 = vrot.slane %v787, 2
        %v789 = vadd.f32 %v787, %v788
        %v790 = vrot.slane %v789, 1
        %v791 = vadd.f32 %v789, %v790
        %v792 = vadd.f32 %v426, %v442
        %v793 = vrot.slane %v792, 4
        %v794 = vadd.f32 %v792, %v793
        %v795 = vrot.slane %v794, 2
        %v796 = vadd.f32 %v794, %v795
        %v797 = vrot.slane %v796, 1
        %v798 = vadd.f32 %v796, %v797
        %v799 = vadd.f32 %v427, %v443
        %v800 = vrot.slane %v799, 4
        %v801 = vadd.f32 %v799, %v800
        %v802 = vrot.slane %v801, 2
        %v803 = vadd.f32 %v801, %v802
        %v804 = vrot.slane %v803, 1
        %v805 = vadd.f32 %v803, %v804
        %v806 = vadd.f32 %v428, %v444
        %v807 = vrot.slane %v806, 4
        %v808 = vadd.f32 %v806, %v807
        %v809 = vrot.slane %v808, 2
        %v810 = vadd.f32 %v808, %v809
        %v811 = vrot.slane %v810, 1
        %v812 = vadd.f32 %v810, %v811
        %v813 = vadd.f32 %v429, %v445
        %v814 = vrot.slane %v813, 4
        %v815 = vadd.f32 %v813, %v814
        %v816 = vrot.slane %v815, 2
        %v817 = vadd.f32 %v815, %v816
        %v818 = vrot.slane %v817, 1
        %v819 = vadd.f32 %v817, %v818
        %v820 = vadd.f32 %v430, %v446
        %v821 = vrot.slane %v820, 4
        %v822 = vadd.f32 %v820, %v821
        %v823 = vrot.slane %v822, 2
        %v824 = vadd.f32 %v822, %v823
        %v825 = vrot.slane %v824, 1
        %v826 = vadd.f32 %v824, %v825
        %v827 = vadd.f32 %v431, %v447
        %v828 = vrot.slane %v827, 4
        %v829 = vadd.f32 %v827, %v828
        %v830 = vrot.slane %v829, 2
        %v831 = vadd.f32 %v829, %v830
        %v832 = vrot.slane %v831, 1
        %v833 = vadd.f32 %v831, %v832
        %v834 = vadd.f32 %v432, %v448
        %v835 = vrot.slane %v834, 4
        %v836 = vadd.f32 %v834, %v835
        %v837 = vrot.slane %v836, 2
        %v838 = vadd.f32 %v836, %v837
        %v839 = vrot.slane %v838, 1
        %v840 = vadd.f32 %v838, %v839
        %v841 = vadd.f32 %v433, %v449
        %v842 = vrot.slane %v841, 4
        %v843 = vadd.f32 %v841, %v842
        %v844 = vrot.slane %v843, 2
        %v845 = vadd.f32 %v843, %v844
        %v846 = vrot.slane %v845, 1
        %v847 = vadd.f32 %v845, %v846
        %v848 = vadd.f32 %v434, %v450
        %v849 = vrot.slane %v848, 4
        %v850 = vadd.f32 %v848, %v849
        %v851 = vrot.slane %v850, 2
        %v852 = vadd.f32 %v850, %v851
        %v853 = vrot.slane %v852, 1
        %v854 = vadd.f32 %v852, %v853
        %v855 = vadd.f32 %v435, %v451
        %v856 = vrot.slane %v855, 4
        %v857 = vadd.f32 %v855, %v856
        %v858 = vrot.slane %v857, 2
        %v859 = vadd.f32 %v857, %v858
        %v860 = vrot.slane %v859, 1
        %v861 = vadd.f32 %v859, %v860
        %v862 = vadd.f32 %v436, %v452
        %v863 = vrot.slane %v862, 4
        %v864 = vadd.f32 %v862, %v863
        %v865 = vrot.slane %v864, 2
        %v866 = vadd.f32 %v864, %v865
        %v867 = vrot.slane %v866, 1
        %v868 = vadd.f32 %v866, %v867
        %v869 = vadd.f32 %v453, %v469
        %v870 = vrot.slane %v869, 4
        %v871 = vadd.f32 %v869, %v870
        %v872 = vrot.slane %v871, 2
        %v873 = vadd.f32 %v871, %v872
        %v874 = vrot.slane %v873, 1
        %v875 = vadd.f32 %v873, %v874
        %v876 = vadd.f32 %v454, %v470
        %v877 = vrot.slane %v876, 4
        %v878 = vadd.f32 %v876, %v877
        %v879 = vrot.slane %v878, 2
        %v880 = vadd.f32 %v878, %v879
        %v881 = vrot.slane %v880, 1
        %v882 = vadd.f32 %v880, %v881
        %v883 = vadd.f32 %v455, %v471
        %v884 = vrot.slane %v883, 4
        %v885 = vadd.f32 %v883, %v884
        %v886 = vrot.slane %v885, 2
        %v887 = vadd.f32 %v885, %v886
        %v888 = vrot.slane %v887, 1
        %v889 = vadd.f32 %v887, %v888
        %v890 = vadd.f32 %v456, %v472
        %v891 = vrot.slane %v890, 4
        %v892 = vadd.f32 %v890, %v891
        %v893 = vrot.slane %v892, 2
        %v894 = vadd.f32 %v892, %v893
        %v895 = vrot.slane %v894, 1
        %v896 = vadd.f32 %v894, %v895
        %v897 = vadd.f32 %v457, %v473
        %v898 = vrot.slane %v897, 4
        %v899 = vadd.f32 %v897, %v898
        %v900 = vrot.slane %v899, 2
        %v901 = vadd.f32 %v899, %v900
        %v902 = vrot.slane %v901, 1
        %v903 = vadd.f32 %v901, %v902
        %v904 = vadd.f32 %v458, %v474
        %v905 = vrot.slane %v904, 4
        %v906 = vadd.f32 %v904, %v905
        %v907 = vrot.slane %v906, 2
        %v908 = vadd.f32 %v906, %v907
        %v909 = vrot.slane %v908, 1
        %v910 = vadd.f32 %v908, %v909
        %v911 = vadd.f32 %v459, %v475
        %v912 = vrot.slane %v911, 4
        %v913 = vadd.f32 %v911, %v912
        %v914 = vrot.slane %v913, 2
        %v915 = vadd.f32 %v913, %v914
        %v916 = vrot.slane %v915, 1
        %v917 = vadd.f32 %v915, %v916
        %v918 = vadd.f32 %v460, %v476
        %v919 = vrot.slane %v918, 4
        %v920 = vadd.f32 %v918, %v919
        %v921 = vrot.slane %v920, 2
        %v922 = vadd.f32 %v920, %v921
        %v923 = vrot.slane %v922, 1
        %v924 = vadd.f32 %v922, %v923
        %v925 = vadd.f32 %v461, %v477
        %v926 = vrot.slane %v925, 4
        %v927 = vadd.f32 %v925, %v926
        %v928 = vrot.slane %v927, 2
        %v929 = vadd.f32 %v927, %v928
        %v930 = vrot.slane %v929, 1
        %v931 = vadd.f32 %v929, %v930
        %v932 = vadd.f32 %v462, %v478
        %v933 = vrot.slane %v932, 4
        %v934 = vadd.f32 %v932, %v933
        %v935 = vrot.slane %v934, 2
        %v936 = vadd.f32 %v934, %v935
        %v937 = vrot.slane %v936, 1
        %v938 = vadd.f32 %v936, %v937
        %v939 = vadd.f32 %v463, %v479
        %v940 = vrot.slane %v939, 4
        %v941 = vadd.f32 %v939, %v940
        %v942 = vrot.slane %v941, 2
        %v943 = vadd.f32 %v941, %v942
        %v944 = vrot.slane %v943, 1
        %v945 = vadd.f32 %v943, %v944
        %v946 = vadd.f32 %v464, %v480
        %v947 = vrot.slane %v946, 4
        %v948 = vadd.f32 %v946, %v947
        %v949 = vrot.slane %v948, 2
        %v950 = vadd.f32 %v948, %v949
        %v951 = vrot.slane %v950, 1
        %v952 = vadd.f32 %v950, %v951
        %v953 = vadd.f32 %v465, %v481
        %v954 = vrot.slane %v953, 4
        %v955 = vadd.f32 %v953, %v954
        %v956 = vrot.slane %v955, 2
        %v957 = vadd.f32 %v955, %v956
        %v958 = vrot.slane %v957, 1
        %v959 = vadd.f32 %v957, %v958
        %v960 = vadd.f32 %v466, %v482
        %v961 = vrot.slane %v960, 4
        %v962 = vadd.f32 %v960, %v961
        %v963 = vrot.slane %v962, 2
        %v964 = vadd.f32 %v962, %v963
        %v965 = vrot.slane %v964, 1
        %v966 = vadd.f32 %v964, %v965
        %v967 = vadd.f32 %v467, %v483
        %v968 = vrot.slane %v967, 4
        %v969 = vadd.f32 %v967, %v968
        %v970 = vrot.slane %v969, 2
        %v971 = vadd.f32 %v969, %v970
        %v972 = vrot.slane %v971, 1
        %v973 = vadd.f32 %v971, %v972
        %v974 = vadd.f32 %v468, %v484
        %v975 = vrot.slane %v974, 4
        %v976 = vadd.f32 %v974, %v975
        %v977 = vrot.slane %v976, 2
        %v978 = vadd.f32 %v976, %v977
        %v979 = vrot.slane %v978, 1
        %v980 = vadd.f32 %v978, %v979
        %v981 = vadd.f32 %v485, %v501
        %v982 = vrot.slane %v981, 4
        %v983 = vadd.f32 %v981, %v982
        %v984 = vrot.slane %v983, 2
        %v985 = vadd.f32 %v983, %v984
        %v986 = vrot.slane %v985, 1
        %v987 = vadd.f32 %v985, %v986
        %v988 = vadd.f32 %v486, %v502
        %v989 = vrot.slane %v988, 4
        %v990 = vadd.f32 %v988, %v989
        %v991 = vrot.slane %v990, 2
        %v992 = vadd.f32 %v990, %v991
        %v993 = vrot.slane %v992, 1
        %v994 = vadd.f32 %v992, %v993
        %v995 = vadd.f32 %v487, %v503
        %v996 = vrot.slane %v995, 4
        %v997 = vadd.f32 %v995, %v996
        %v998 = vrot.slane %v997, 2
        %v999 = vadd.f32 %v997, %v998
        %v1000 = vrot.slane %v999, 1
        %v1001 = vadd.f32 %v999, %v1000
        %v1002 = vadd.f32 %v488, %v504
        %v1003 = vrot.slane %v1002, 4
        %v1004 = vadd.f32 %v1002, %v1003
        %v1005 = vrot.slane %v1004, 2
        %v1006 = vadd.f32 %v1004, %v1005
        %v1007 = vrot.slane %v1006, 1
        %v1008 = vadd.f32 %v1006, %v1007
        %v1009 = vadd.f32 %v489, %v505
        %v1010 = vrot.slane %v1009, 4
        %v1011 = vadd.f32 %v1009, %v1010
        %v1012 = vrot.slane %v1011, 2
        %v1013 = vadd.f32 %v1011, %v1012
        %v1014 = vrot.slane %v1013, 1
        %v1015 = vadd.f32 %v1013, %v1014
        %v1016 = vadd.f32 %v490, %v506
        %v1017 = vrot.slane %v1016, 4
        %v1018 = vadd.f32 %v1016, %v1017
        %v1019 = vrot.slane %v1018, 2
        %v1020 = vadd.f32 %v1018, %v1019
        %v1021 = vrot.slane %v1020, 1
        %v1022 = vadd.f32 %v1020, %v1021
        %v1023 = vadd.f32 %v491, %v507
        %v1024 = vrot.slane %v1023, 4
        %v1025 = vadd.f32 %v1023, %v1024
        %v1026 = vrot.slane %v1025, 2
        %v1027 = vadd.f32 %v1025, %v1026
        %v1028 = vrot.slane %v1027, 1
        %v1029 = vadd.f32 %v1027, %v1028
        %v1030 = vadd.f32 %v492, %v508
        %v1031 = vrot.slane %v1030, 4
        %v1032 = vadd.f32 %v1030, %v1031
        %v1033 = vrot.slane %v1032, 2
        %v1034 = vadd.f32 %v1032, %v1033
        %v1035 = vrot.slane %v1034, 1
        %v1036 = vadd.f32 %v1034, %v1035
        %v1037 = vadd.f32 %v493, %v509
        %v1038 = vrot.slane %v1037, 4
        %v1039 = vadd.f32 %v1037, %v1038
        %v1040 = vrot.slane %v1039, 2
        %v1041 = vadd.f32 %v1039, %v1040
        %v1042 = vrot.slane %v1041, 1
        %v1043 = vadd.f32 %v1041, %v1042
        %v1044 = vadd.f32 %v494, %v510
        %v1045 = vrot.slane %v1044, 4
        %v1046 = vadd.f32 %v1044, %v1045
        %v1047 = vrot.slane %v1046, 2
        %v1048 = vadd.f32 %v1046, %v1047
        %v1049 = vrot.slane %v1048, 1
        %v1050 = vadd.f32 %v1048, %v1049
        %v1051 = vadd.f32 %v495, %v511
        %v1052 = vrot.slane %v1051, 4
        %v1053 = vadd.f32 %v1051, %v1052
        %v1054 = vrot.slane %v1053, 2
        %v1055 = vadd.f32 %v1053, %v1054
        %v1056 = vrot.slane %v1055, 1
        %v1057 = vadd.f32 %v1055, %v1056
        %v1058 = vadd.f32 %v496, %v512
        %v1059 = vrot.slane %v1058, 4
        %v1060 = vadd.f32 %v1058, %v1059
        %v1061 = vrot.slane %v1060, 2
        %v1062 = vadd.f32 %v1060, %v1061
        %v1063 = vrot.slane %v1062, 1
        %v1064 = vadd.f32 %v1062, %v1063
        %v1065 = vadd.f32 %v497, %v513
        %v1066 = vrot.slane %v1065, 4
        %v1067 = vadd.f32 %v1065, %v1066
        %v1068 = vrot.slane %v1067, 2
        %v1069 = vadd.f32 %v1067, %v1068
        %v1070 = vrot.slane %v1069, 1
        %v1071 = vadd.f32 %v1069, %v1070
        %v1072 = vadd.f32 %v498, %v514
        %v1073 = vrot.slane %v1072, 4
        %v1074 = vadd.f32 %v1072, %v1073
        %v1075 = vrot.slane %v1074, 2
        %v1076 = vadd.f32 %v1074, %v1075
        %v1077 = vrot.slane %v1076, 1
        %v1078 = vadd.f32 %v1076, %v1077
        %v1079 = vadd.f32 %v499, %v515
        %v1080 = vrot.slane %v1079, 4
        %v1081 = vadd.f32 %v1079, %v1080
        %v1082 = vrot.slane %v1081, 2
        %v1083 = vadd.f32 %v1081, %v1082
        %v1084 = vrot.slane %v1083, 1
        %v1085 = vadd.f32 %v1083, %v1084
        %v1086 = vadd.f32 %v500, %v516
        %v1087 = vrot.slane %v1086, 4
        %v1088 = vadd.f32 %v1086, %v1087
        %v1089 = vrot.slane %v1088, 2
        %v1090 = vadd.f32 %v1088, %v1089
        %v1091 = vrot.slane %v1090, 1
        %v1092 = vadd.f32 %v1090, %v1091
        %v1093 = vadd.f32 %v517, %v533
        %v1094 = vrot.slane %v1093, 4
        %v1095 = vadd.f32 %v1093, %v1094
        %v1096 = vrot.slane %v1095, 2
        %v1097 = vadd.f32 %v1095, %v1096
        %v1098 = vrot.slane %v1097, 1
        %v1099 = vadd.f32 %v1097, %v1098
        %v1100 = vadd.f32 %v518, %v534
        %v1101 = vrot.slane %v1100, 4
        %v1102 = vadd.f32 %v1100, %v1101
        %v1103 = vrot.slane %v1102, 2
        %v1104 = vadd.f32 %v1102, %v1103
        %v1105 = vrot.slane %v1104, 1
        %v1106 = vadd.f32 %v1104, %v1105
        %v1107 = vadd.f32 %v519, %v535
        %v1108 = vrot.slane %v1107, 4
        %v1109 = vadd.f32 %v1107, %v1108
        %v1110 = vrot.slane %v1109, 2
        %v1111 = vadd.f32 %v1109, %v1110
        %v1112 = vrot.slane %v1111, 1
        %v1113 = vadd.f32 %v1111, %v1112
        %v1114 = vadd.f32 %v520, %v536
        %v1115 = vrot.slane %v1114, 4
        %v1116 = vadd.f32 %v1114, %v1115
        %v1117 = vrot.slane %v1116, 2
        %v1118 = vadd.f32 %v1116, %v1117
        %v1119 = vrot.slane %v1118, 1
        %v1120 = vadd.f32 %v1118, %v1119
        %v1121 = vadd.f32 %v521, %v537
        %v1122 = vrot.slane %v1121, 4
        %v1123 = vadd.f32 %v1121, %v1122
        %v1124 = vrot.slane %v1123, 2
        %v1125 = vadd.f32 %v1123, %v1124
        %v1126 = vrot.slane %v1125, 1
        %v1127 = vadd.f32 %v1125, %v1126
        %v1128 = vadd.f32 %v522, %v538
        %v1129 = vrot.slane %v1128, 4
        %v1130 = vadd.f32 %v1128, %v1129
        %v1131 = vrot.slane %v1130, 2
        %v1132 = vadd.f32 %v1130, %v1131
        %v1133 = vrot.slane %v1132, 1
        %v1134 = vadd.f32 %v1132, %v1133
        %v1135 = vadd.f32 %v523, %v539
        %v1136 = vrot.slane %v1135, 4
        %v1137 = vadd.f32 %v1135, %v1136
        %v1138 = vrot.slane %v1137, 2
        %v1139 = vadd.f32 %v1137, %v1138
        %v1140 = vrot.slane %v1139, 1
        %v1141 = vadd.f32 %v1139, %v1140
        %v1142 = vadd.f32 %v524, %v540
        %v1143 = vrot.slane %v1142, 4
        %v1144 = vadd.f32 %v1142, %v1143
        %v1145 = vrot.slane %v1144, 2
        %v1146 = vadd.f32 %v1144, %v1145
        %v1147 = vrot.slane %v1146, 1
        %v1148 = vadd.f32 %v1146, %v1147
        %v1149 = vadd.f32 %v525, %v541
        %v1150 = vrot.slane %v1149, 4
        %v1151 = vadd.f32 %v1149, %v1150
        %v1152 = vrot.slane %v1151, 2
        %v1153 = vadd.f32 %v1151, %v1152
        %v1154 = vrot.slane %v1153, 1
        %v1155 = vadd.f32 %v1153, %v1154
        %v1156 = vadd.f32 %v526, %v542
        %v1157 = vrot.slane %v1156, 4
        %v1158 = vadd.f32 %v1156, %v1157
        %v1159 = vrot.slane %v1158, 2
        %v1160 = vadd.f32 %v1158, %v1159
        %v1161 = vrot.slane %v1160, 1
        %v1162 = vadd.f32 %v1160, %v1161
        %v1163 = vadd.f32 %v527, %v543
        %v1164 = vrot.slane %v1163, 4
        %v1165 = vadd.f32 %v1163, %v1164
        %v1166 = vrot.slane %v1165, 2
        %v1167 = vadd.f32 %v1165, %v1166
        %v1168 = vrot.slane %v1167, 1
        %v1169 = vadd.f32 %v1167, %v1168
        %v1170 = vadd.f32 %v528, %v544
        %v1171 = vrot.slane %v1170, 4
        %v1172 = vadd.f32 %v1170, %v1171
        %v1173 = vrot.slane %v1172, 2
        %v1174 = vadd.f32 %v1172, %v1173
        %v1175 = vrot.slane %v1174, 1
        %v1176 = vadd.f32 %v1174, %v1175
        %v1177 = vadd.f32 %v529, %v545
        %v1178 = vrot.slane %v1177, 4
        %v1179 = vadd.f32 %v1177, %v1178
        %v1180 = vrot.slane %v1179, 2
        %v1181 = vadd.f32 %v1179, %v1180
        %v1182 = vrot.slane %v1181, 1
        %v1183 = vadd.f32 %v1181, %v1182
        %v1184 = vadd.f32 %v530, %v546
        %v1185 = vrot.slane %v1184, 4
        %v1186 = vadd.f32 %v1184, %v1185
        %v1187 = vrot.slane %v1186, 2
        %v1188 = vadd.f32 %v1186, %v1187
        %v1189 = vrot.slane %v1188, 1
        %v1190 = vadd.f32 %v1188, %v1189
        %v1191 = vadd.f32 %v531, %v547
        %v1192 = vrot.slane %v1191, 4
        %v1193 = vadd.f32 %v1191, %v1192
        %v1194 = vrot.slane %v1193, 2
        %v1195 = vadd.f32 %v1193, %v1194
        %v1196 = vrot.slane %v1195, 1
        %v1197 = vadd.f32 %v1195, %v1196
        %v1198 = vadd.f32 %v532, %v548
        %v1199 = vrot.slane %v1198, 4
        %v1200 = vadd.f32 %v1198, %v1199
        %v1201 = vrot.slane %v1200, 2
        %v1202 = vadd.f32 %v1200, %v1201
        %v1203 = vrot.slane %v1202, 1
        %v1204 = vadd.f32 %v1202, %v1203
        %v1205 = vadd.f32 %v549, %v565
        %v1206 = vrot.slane %v1205, 4
        %v1207 = vadd.f32 %v1205, %v1206
        %v1208 = vrot.slane %v1207, 2
        %v1209 = vadd.f32 %v1207, %v1208
        %v1210 = vrot.slane %v1209, 1
        %v1211 = vadd.f32 %v1209, %v1210
        %v1212 = vadd.f32 %v550, %v566
        %v1213 = vrot.slane %v1212, 4
        %v1214 = vadd.f32 %v1212, %v1213
        %v1215 = vrot.slane %v1214, 2
        %v1216 = vadd.f32 %v1214, %v1215
        %v1217 = vrot.slane %v1216, 1
        %v1218 = vadd.f32 %v1216, %v1217
        %v1219 = vadd.f32 %v551, %v567
        %v1220 = vrot.slane %v1219, 4
        %v1221 = vadd.f32 %v1219, %v1220
        %v1222 = vrot.slane %v1221, 2
        %v1223 = vadd.f32 %v1221, %v1222
        %v1224 = vrot.slane %v1223, 1
        %v1225 = vadd.f32 %v1223, %v1224
        %v1226 = vadd.f32 %v552, %v568
        %v1227 = vrot.slane %v1226, 4
        %v1228 = vadd.f32 %v1226, %v1227
        %v1229 = vrot.slane %v1228, 2
        %v1230 = vadd.f32 %v1228, %v1229
        %v1231 = vrot.slane %v1230, 1
        %v1232 = vadd.f32 %v1230, %v1231
        %v1233 = vadd.f32 %v553, %v569
        %v1234 = vrot.slane %v1233, 4
        %v1235 = vadd.f32 %v1233, %v1234
        %v1236 = vrot.slane %v1235, 2
        %v1237 = vadd.f32 %v1235, %v1236
        %v1238 = vrot.slane %v1237, 1
        %v1239 = vadd.f32 %v1237, %v1238
        %v1240 = vadd.f32 %v554, %v570
        %v1241 = vrot.slane %v1240, 4
        %v1242 = vadd.f32 %v1240, %v1241
        %v1243 = vrot.slane %v1242, 2
        %v1244 = vadd.f32 %v1242, %v1243
        %v1245 = vrot.slane %v1244, 1
        %v1246 = vadd.f32 %v1244, %v1245
        %v1247 = vadd.f32 %v555, %v571
        %v1248 = vrot.slane %v1247, 4
        %v1249 = vadd.f32 %v1247, %v1248
        %v1250 = vrot.slane %v1249, 2
        %v1251 = vadd.f32 %v1249, %v1250
        %v1252 = vrot.slane %v1251, 1
        %v1253 = vadd.f32 %v1251, %v1252
        %v1254 = vadd.f32 %v556, %v572
        %v1255 = vrot.slane %v1254, 4
        %v1256 = vadd.f32 %v1254, %v1255
        %v1257 = vrot.slane %v1256, 2
        %v1258 = vadd.f32 %v1256, %v1257
        %v1259 = vrot.slane %v1258, 1
        %v1260 = vadd.f32 %v1258, %v1259
        %v1261 = vadd.f32 %v557, %v573
        %v1262 = vrot.slane %v1261, 4
        %v1263 = vadd.f32 %v1261, %v1262
        %v1264 = vrot.slane %v1263, 2
        %v1265 = vadd.f32 %v1263, %v1264
        %v1266 = vrot.slane %v1265, 1
        %v1267 = vadd.f32 %v1265, %v1266
        %v1268 = vadd.f32 %v558, %v574
        %v1269 = vrot.slane %v1268, 4
        %v1270 = vadd.f32 %v1268, %v1269
        %v1271 = vrot.slane %v1270, 2
        %v1272 = vadd.f32 %v1270, %v1271
        %v1273 = vrot.slane %v1272, 1
        %v1274 = vadd.f32 %v1272, %v1273
        %v1275 = vadd.f32 %v559, %v575
        %v1276 = vrot.slane %v1275, 4
        %v1277 = vadd.f32 %v1275, %v1276
        %v1278 = vrot.slane %v1277, 2
        %v1279 = vadd.f32 %v1277, %v1278
        %v1280 = vrot.slane %v1279, 1
        %v1281 = vadd.f32 %v1279, %v1280
        %v1282 = vadd.f32 %v560, %v576
        %v1283 = vrot.slane %v1282, 4
        %v1284 = vadd.f32 %v1282, %v1283
        %v1285 = vrot.slane %v1284, 2
        %v1286 = vadd.f32 %v1284, %v1285
        %v1287 = vrot.slane %v1286, 1
        %v1288 = vadd.f32 %v1286, %v1287
        %v1289 = vadd.f32 %v561, %v577
        %v1290 = vrot.slane %v1289, 4
        %v1291 = vadd.f32 %v1289, %v1290
        %v1292 = vrot.slane %v1291, 2
        %v1293 = vadd.f32 %v1291, %v1292
        %v1294 = vrot.slane %v1293, 1
        %v1295 = vadd.f32 %v1293, %v1294
        %v1296 = vadd.f32 %v562, %v578
        %v1297 = vrot.slane %v1296, 4
        %v1298 = vadd.f32 %v1296, %v1297
        %v1299 = vrot.slane %v1298, 2
        %v1300 = vadd.f32 %v1298, %v1299
        %v1301 = vrot.slane %v1300, 1
        %v1302 = vadd.f32 %v1300, %v1301
        %v1303 = vadd.f32 %v563, %v579
        %v1304 = vrot.slane %v1303, 4
        %v1305 = vadd.f32 %v1303, %v1304
        %v1306 = vrot.slane %v1305, 2
        %v1307 = vadd.f32 %v1305, %v1306
        %v1308 = vrot.slane %v1307, 1
        %v1309 = vadd.f32 %v1307, %v1308
        %v1310 = vadd.f32 %v564, %v580
        %v1311 = vrot.slane %v1310, 4
        %v1312 = vadd.f32 %v1310, %v1311
        %v1313 = vrot.slane %v1312, 2
        %v1314 = vadd.f32 %v1312, %v1313
        %v1315 = vrot.slane %v1314, 1
        %v1316 = vadd.f32 %v1314, %v1315
        %v1317 = vadd.f32 %v581, %v597
        %v1318 = vrot.slane %v1317, 4
        %v1319 = vadd.f32 %v1317, %v1318
        %v1320 = vrot.slane %v1319, 2
        %v1321 = vadd.f32 %v1319, %v1320
        %v1322 = vrot.slane %v1321, 1
        %v1323 = vadd.f32 %v1321, %v1322
        %v1324 = vadd.f32 %v582, %v598
        %v1325 = vrot.slane %v1324, 4
        %v1326 = vadd.f32 %v1324, %v1325
        %v1327 = vrot.slane %v1326, 2
        %v1328 = vadd.f32 %v1326, %v1327
        %v1329 = vrot.slane %v1328, 1
        %v1330 = vadd.f32 %v1328, %v1329
        %v1331 = vadd.f32 %v583, %v599
        %v1332 = vrot.slane %v1331, 4
        %v1333 = vadd.f32 %v1331, %v1332
        %v1334 = vrot.slane %v1333, 2
        %v1335 = vadd.f32 %v1333, %v1334
        %v1336 = vrot.slane %v1335, 1
        %v1337 = vadd.f32 %v1335, %v1336
        %v1338 = vadd.f32 %v584, %v600
        %v1339 = vrot.slane %v1338, 4
        %v1340 = vadd.f32 %v1338, %v1339
        %v1341 = vrot.slane %v1340, 2
        %v1342 = vadd.f32 %v1340, %v1341
        %v1343 = vrot.slane %v1342, 1
        %v1344 = vadd.f32 %v1342, %v1343
        %v1345 = vadd.f32 %v585, %v601
        %v1346 = vrot.slane %v1345, 4
        %v1347 = vadd.f32 %v1345, %v1346
        %v1348 = vrot.slane %v1347, 2
        %v1349 = vadd.f32 %v1347, %v1348
        %v1350 = vrot.slane %v1349, 1
        %v1351 = vadd.f32 %v1349, %v1350
        %v1352 = vadd.f32 %v586, %v602
        %v1353 = vrot.slane %v1352, 4
        %v1354 = vadd.f32 %v1352, %v1353
        %v1355 = vrot.slane %v1354, 2
        %v1356 = vadd.f32 %v1354, %v1355
        %v1357 = vrot.slane %v1356, 1
        %v1358 = vadd.f32 %v1356, %v1357
        %v1359 = vadd.f32 %v587, %v603
        %v1360 = vrot.slane %v1359, 4
        %v1361 = vadd.f32 %v1359, %v1360
        %v1362 = vrot.slane %v1361, 2
        %v1363 = vadd.f32 %v1361, %v1362
        %v1364 = vrot.slane %v1363, 1
        %v1365 = vadd.f32 %v1363, %v1364
        %v1366 = vadd.f32 %v588, %v604
        %v1367 = vrot.slane %v1366, 4
        %v1368 = vadd.f32 %v1366, %v1367
        %v1369 = vrot.slane %v1368, 2
        %v1370 = vadd.f32 %v1368, %v1369
        %v1371 = vrot.slane %v1370, 1
        %v1372 = vadd.f32 %v1370, %v1371
        %v1373 = vadd.f32 %v589, %v605
        %v1374 = vrot.slane %v1373, 4
        %v1375 = vadd.f32 %v1373, %v1374
        %v1376 = vrot.slane %v1375, 2
        %v1377 = vadd.f32 %v1375, %v1376
        %v1378 = vrot.slane %v1377, 1
        %v1379 = vadd.f32 %v1377, %v1378
        %v1380 = vadd.f32 %v590, %v606
        %v1381 = vrot.slane %v1380, 4
        %v1382 = vadd.f32 %v1380, %v1381
        %v1383 = vrot.slane %v1382, 2
        %v1384 = vadd.f32 %v1382, %v1383
        %v1385 = vrot.slane %v1384, 1
        %v1386 = vadd.f32 %v1384, %v1385
        %v1387 = vadd.f32 %v591, %v607
        %v1388 = vrot.slane %v1387, 4
        %v1389 = vadd.f32 %v1387, %v1388
        %v1390 = vrot.slane %v1389, 2
        %v1391 = vadd.f32 %v1389, %v1390
        %v1392 = vrot.slane %v1391, 1
        %v1393 = vadd.f32 %v1391, %v1392
        %v1394 = vadd.f32 %v592, %v608
        %v1395 = vrot.slane %v1394, 4
        %v1396 = vadd.f32 %v1394, %v1395
        %v1397 = vrot.slane %v1396, 2
        %v1398 = vadd.f32 %v1396, %v1397
        %v1399 = vrot.slane %v1398, 1
        %v1400 = vadd.f32 %v1398, %v1399
        %v1401 = vadd.f32 %v593, %v609
        %v1402 = vrot.slane %v1401, 4
        %v1403 = vadd.f32 %v1401, %v1402
        %v1404 = vrot.slane %v1403, 2
        %v1405 = vadd.f32 %v1403, %v1404
        %v1406 = vrot.slane %v1405, 1
        %v1407 = vadd.f32 %v1405, %v1406
        %v1408 = vadd.f32 %v594, %v610
        %v1409 = vrot.slane %v1408, 4
        %v1410 = vadd.f32 %v1408, %v1409
        %v1411 = vrot.slane %v1410, 2
        %v1412 = vadd.f32 %v1410, %v1411
        %v1413 = vrot.slane %v1412, 1
        %v1414 = vadd.f32 %v1412, %v1413
        %v1415 = vadd.f32 %v595, %v611
        %v1416 = vrot.slane %v1415, 4
        %v1417 = vadd.f32 %v1415, %v1416
        %v1418 = vrot.slane %v1417, 2
        %v1419 = vadd.f32 %v1417, %v1418
        %v1420 = vrot.slane %v1419, 1
        %v1421 = vadd.f32 %v1419, %v1420
        %v1422 = vadd.f32 %v596, %v612
        %v1423 = vrot.slane %v1422, 4
        %v1424 = vadd.f32 %v1422, %v1423
        %v1425 = vrot.slane %v1424, 2
        %v1426 = vadd.f32 %v1424, %v1425
        %v1427 = vrot.slane %v1426, 1
        %v1428 = vadd.f32 %v1426, %v1427
        %v1429 = vadd.f32 %v613, %v629
        %v1430 = vrot.slane %v1429, 4
        %v1431 = vadd.f32 %v1429, %v1430
        %v1432 = vrot.slane %v1431, 2
        %v1433 = vadd.f32 %v1431, %v1432
        %v1434 = vrot.slane %v1433, 1
        %v1435 = vadd.f32 %v1433, %v1434
        %v1436 = vadd.f32 %v614, %v630
        %v1437 = vrot.slane %v1436, 4
        %v1438 = vadd.f32 %v1436, %v1437
        %v1439 = vrot.slane %v1438, 2
        %v1440 = vadd.f32 %v1438, %v1439
        %v1441 = vrot.slane %v1440, 1
        %v1442 = vadd.f32 %v1440, %v1441
        %v1443 = vadd.f32 %v615, %v631
        %v1444 = vrot.slane %v1443, 4
        %v1445 = vadd.f32 %v1443, %v1444
        %v1446 = vrot.slane %v1445, 2
        %v1447 = vadd.f32 %v1445, %v1446
        %v1448 = vrot.slane %v1447, 1
        %v1449 = vadd.f32 %v1447, %v1448
        %v1450 = vadd.f32 %v616, %v632
        %v1451 = vrot.slane %v1450, 4
        %v1452 = vadd.f32 %v1450, %v1451
        %v1453 = vrot.slane %v1452, 2
        %v1454 = vadd.f32 %v1452, %v1453
        %v1455 = vrot.slane %v1454, 1
        %v1456 = vadd.f32 %v1454, %v1455
        %v1457 = vadd.f32 %v617, %v633
        %v1458 = vrot.slane %v1457, 4
        %v1459 = vadd.f32 %v1457, %v1458
        %v1460 = vrot.slane %v1459, 2
        %v1461 = vadd.f32 %v1459, %v1460
        %v1462 = vrot.slane %v1461, 1
        %v1463 = vadd.f32 %v1461, %v1462
        %v1464 = vadd.f32 %v618, %v634
        %v1465 = vrot.slane %v1464, 4
        %v1466 = vadd.f32 %v1464, %v1465
        %v1467 = vrot.slane %v1466, 2
        %v1468 = vadd.f32 %v1466, %v1467
        %v1469 = vrot.slane %v1468, 1
        %v1470 = vadd.f32 %v1468, %v1469
        %v1471 = vadd.f32 %v619, %v635
        %v1472 = vrot.slane %v1471, 4
        %v1473 = vadd.f32 %v1471, %v1472
        %v1474 = vrot.slane %v1473, 2
        %v1475 = vadd.f32 %v1473, %v1474
        %v1476 = vrot.slane %v1475, 1
        %v1477 = vadd.f32 %v1475, %v1476
        %v1478 = vadd.f32 %v620, %v636
        %v1479 = vrot.slane %v1478, 4
        %v1480 = vadd.f32 %v1478, %v1479
        %v1481 = vrot.slane %v1480, 2
        %v1482 = vadd.f32 %v1480, %v1481
        %v1483 = vrot.slane %v1482, 1
        %v1484 = vadd.f32 %v1482, %v1483
        %v1485 = vadd.f32 %v621, %v637
        %v1486 = vrot.slane %v1485, 4
        %v1487 = vadd.f32 %v1485, %v1486
        %v1488 = vrot.slane %v1487, 2
        %v1489 = vadd.f32 %v1487, %v1488
        %v1490 = vrot.slane %v1489, 1
        %v1491 = vadd.f32 %v1489, %v1490
        %v1492 = vadd.f32 %v622, %v638
        %v1493 = vrot.slane %v1492, 4
        %v1494 = vadd.f32 %v1492, %v1493
        %v1495 = vrot.slane %v1494, 2
        %v1496 = vadd.f32 %v1494, %v1495
        %v1497 = vrot.slane %v1496, 1
        %v1498 = vadd.f32 %v1496, %v1497
        %v1499 = vadd.f32 %v623, %v639
        %v1500 = vrot.slane %v1499, 4
        %v1501 = vadd.f32 %v1499, %v1500
        %v1502 = vrot.slane %v1501, 2
        %v1503 = vadd.f32 %v1501, %v1502
        %v1504 = vrot.slane %v1503, 1
        %v1505 = vadd.f32 %v1503, %v1504
        %v1506 = vadd.f32 %v624, %v640
        %v1507 = vrot.slane %v1506, 4
        %v1508 = vadd.f32 %v1506, %v1507
        %v1509 = vrot.slane %v1508, 2
        %v1510 = vadd.f32 %v1508, %v1509
        %v1511 = vrot.slane %v1510, 1
        %v1512 = vadd.f32 %v1510, %v1511
        %v1513 = vadd.f32 %v625, %v641
        %v1514 = vrot.slane %v1513, 4
        %v1515 = vadd.f32 %v1513, %v1514
        %v1516 = vrot.slane %v1515, 2
        %v1517 = vadd.f32 %v1515, %v1516
        %v1518 = vrot.slane %v1517, 1
        %v1519 = vadd.f32 %v1517, %v1518
        %v1520 = vadd.f32 %v626, %v642
        %v1521 = vrot.slane %v1520, 4
        %v1522 = vadd.f32 %v1520, %v1521
        %v1523 = vrot.slane %v1522, 2
        %v1524 = vadd.f32 %v1522, %v1523
        %v1525 = vrot.slane %v1524, 1
        %v1526 = vadd.f32 %v1524, %v1525
        %v1527 = vadd.f32 %v627, %v643
        %v1528 = vrot.slane %v1527, 4
        %v1529 = vadd.f32 %v1527, %v1528
        %v1530 = vrot.slane %v1529, 2
        %v1531 = vadd.f32 %v1529, %v1530
        %v1532 = vrot.slane %v1531, 1
        %v1533 = vadd.f32 %v1531, %v1532
        %v1534 = vadd.f32 %v628, %v644
        %v1535 = vrot.slane %v1534, 4
        %v1536 = vadd.f32 %v1534, %v1535
        %v1537 = vrot.slane %v1536, 2
        %v1538 = vadd.f32 %v1536, %v1537
        %v1539 = vrot.slane %v1538, 1
        %v1540 = vadd.f32 %v1538, %v1539
        %v1541 = vpack.c.bf16 %v651, %v651
        %v1542 = vpack.c.bf16 %v658, %v658
        %v1543 = vpack.c.bf16 %v665, %v665
        %v1544 = vpack.c.bf16 %v672, %v672
        %v1545 = vpack.c.bf16 %v679, %v679
        %v1546 = vpack.c.bf16 %v686, %v686
        %v1547 = vpack.c.bf16 %v693, %v693
        %v1548 = vpack.c.bf16 %v700, %v700
        %v1549 = vpack.c.bf16 %v707, %v707
        %v1550 = vpack.c.bf16 %v714, %v714
        %v1551 = vpack.c.bf16 %v721, %v721
        %v1552 = vpack.c.bf16 %v728, %v728
        %v1553 = vpack.c.bf16 %v735, %v735
        %v1554 = vpack.c.bf16 %v742, %v742
        %v1555 = vpack.c.bf16 %v749, %v749
        %v1556 = vpack.c.bf16 %v756, %v756
        %v1557 = vpack.c.bf16 %v763, %v763
        %v1558 = vpack.c.bf16 %v770, %v770
        %v1559 = vpack.c.bf16 %v777, %v777
        %v1560 = vpack.c.bf16 %v784, %v784
        %v1561 = vpack.c.bf16 %v791, %v791
        %v1562 = vpack.c.bf16 %v798, %v798
        %v1563 = vpack.c.bf16 %v805, %v805
        %v1564 = vpack.c.bf16 %v812, %v812
        %v1565 = vpack.c.bf16 %v819, %v819
        %v1566 = vpack.c.bf16 %v826, %v826
        %v1567 = vpack.c.bf16 %v833, %v833
        %v1568 = vpack.c.bf16 %v840, %v840
        %v1569 = vpack.c.bf16 %v847, %v847
        %v1570 = vpack.c.bf16 %v854, %v854
        %v1571 = vpack.c.bf16 %v861, %v861
        %v1572 = vpack.c.bf16 %v868, %v868
        %v1573 = vpack.c.bf16 %v875, %v875
        %v1574 = vpack.c.bf16 %v882, %v882
        %v1575 = vpack.c.bf16 %v889, %v889
        %v1576 = vpack.c.bf16 %v896, %v896
        %v1577 = vpack.c.bf16 %v903, %v903
        %v1578 = vpack.c.bf16 %v910, %v910
        %v1579 = vpack.c.bf16 %v917, %v917
        %v1580 = vpack.c.bf16 %v924, %v924
        %v1581 = vpack.c.bf16 %v931, %v931
        %v1582 = vpack.c.bf16 %v938, %v938
        %v1583 = vpack.c.bf16 %v945, %v945
        %v1584 = vpack.c.bf16 %v952, %v952
        %v1585 = vpack.c.bf16 %v959, %v959
        %v1586 = vpack.c.bf16 %v966, %v966
        %v1587 = vpack.c.bf16 %v973, %v973
        %v1588 = vpack.c.bf16 %v980, %v980
        %v1589 = vpack.c.bf16 %v987, %v987
        %v1590 = vpack.c.bf16 %v994, %v994
        %v1591 = vpack.c.bf16 %v1001, %v1001
        %v1592 = vpack.c.bf16 %v1008, %v1008
        %v1593 = vpack.c.bf16 %v1015, %v1015
        %v1594 = vpack.c.bf16 %v1022, %v1022
        %v1595 = vpack.c.bf16 %v1029, %v1029
        %v1596 = vpack.c.bf16 %v1036, %v1036
        %v1597 = vpack.c.bf16 %v1043, %v1043
        %v1598 = vpack.c.bf16 %v1050, %v1050
        %v1599 = vpack.c.bf16 %v1057, %v1057
        %v1600 = vpack.c.bf16 %v1064, %v1064
        %v1601 = vpack.c.bf16 %v1071, %v1071
        %v1602 = vpack.c.bf16 %v1078, %v1078
        %v1603 = vpack.c.bf16 %v1085, %v1085
        %v1604 = vpack.c.bf16 %v1092, %v1092
        %v1605 = vpack.c.bf16 %v1099, %v1099
        %v1606 = vpack.c.bf16 %v1106, %v1106
        %v1607 = vpack.c.bf16 %v1113, %v1113
        %v1608 = vpack.c.bf16 %v1120, %v1120
        %v1609 = vpack.c.bf16 %v1127, %v1127
        %v1610 = vpack.c.bf16 %v1134, %v1134
        %v1611 = vpack.c.bf16 %v1141, %v1141
        %v1612 = vpack.c.bf16 %v1148, %v1148
        %v1613 = vpack.c.bf16 %v1155, %v1155
        %v1614 = vpack.c.bf16 %v1162, %v1162
        %v1615 = vpack.c.bf16 %v1169, %v1169
        %v1616 = vpack.c.bf16 %v1176, %v1176
        %v1617 = vpack.c.bf16 %v1183, %v1183
        %v1618 = vpack.c.bf16 %v1190, %v1190
        %v1619 = vpack.c.bf16 %v1197, %v1197
        %v1620 = vpack.c.bf16 %v1204, %v1204
        %v1621 = vpack.c.bf16 %v1211, %v1211
        %v1622 = vpack.c.bf16 %v1218, %v1218
        %v1623 = vpack.c.bf16 %v1225, %v1225
        %v1624 = vpack.c.bf16 %v1232, %v1232
        %v1625 = vpack.c.bf16 %v1239, %v1239
        %v1626 = vpack.c.bf16 %v1246, %v1246
        %v1627 = vpack.c.bf16 %v1253, %v1253
        %v1628 = vpack.c.bf16 %v1260, %v1260
        %v1629 = vpack.c.bf16 %v1267, %v1267
        %v1630 = vpack.c.bf16 %v1274, %v1274
        %v1631 = vpack.c.bf16 %v1281, %v1281
        %v1632 = vpack.c.bf16 %v1288, %v1288
        %v1633 = vpack.c.bf16 %v1295, %v1295
        %v1634 = vpack.c.bf16 %v1302, %v1302
        %v1635 = vpack.c.bf16 %v1309, %v1309
        %v1636 = vpack.c.bf16 %v1316, %v1316
        %v1637 = vpack.c.bf16 %v1323, %v1323
        %v1638 = vpack.c.bf16 %v1330, %v1330
        %v1639 = vpack.c.bf16 %v1337, %v1337
        %v1640 = vpack.c.bf16 %v1344, %v1344
        %v1641 = vpack.c.bf16 %v1351, %v1351
        %v1642 = vpack.c.bf16 %v1358, %v1358
        %v1643 = vpack.c.bf16 %v1365, %v1365
        %v1644 = vpack.c.bf16 %v1372, %v1372
        %v1645 = vpack.c.bf16 %v1379, %v1379
        %v1646 = vpack.c.bf16 %v1386, %v1386
        %v1647 = vpack.c.bf16 %v1393, %v1393
        %v1648 = vpack.c.bf16 %v1400, %v1400
        %v1649 = vpack.c.bf16 %v1407, %v1407
        %v1650 = vpack.c.bf16 %v1414, %v1414
        %v1651 = vpack.c.bf16 %v1421, %v1421
        %v1652 = vpack.c.bf16 %v1428, %v1428
        %v1653 = vpack.c.bf16 %v1435, %v1435
        %v1654 = vpack.c.bf16 %v1442, %v1442
        %v1655 = vpack.c.bf16 %v1449, %v1449
        %v1656 = vpack.c.bf16 %v1456, %v1456
        %v1657 = vpack.c.bf16 %v1463, %v1463
        %v1658 = vpack.c.bf16 %v1470, %v1470
        %v1659 = vpack.c.bf16 %v1477, %v1477
        %v1660 = vpack.c.bf16 %v1484, %v1484
        %v1661 = vpack.c.bf16 %v1491, %v1491
        %v1662 = vpack.c.bf16 %v1498, %v1498
        %v1663 = vpack.c.bf16 %v1505, %v1505
        %v1664 = vpack.c.bf16 %v1512, %v1512
        %v1665 = vpack.c.bf16 %v1519, %v1519
        %v1666 = vpack.c.bf16 %v1526, %v1526
        %v1667 = vpack.c.bf16 %v1533, %v1533
        %v1668 = vpack.c.bf16 %v1540, %v1540
        %v1669 = vld [vmem:[#allocation5] sm:$0xff]
        %v1670 = vld [vmem:[#allocation5 + $0x8] sm:$0xff]
        %v1671 = vld [vmem:[#allocation5 + $0x10] sm:$0xff]
        %v1672 = vld [vmem:[#allocation5 + $0x18] sm:$0xff]
        %v1673 = vld [vmem:[#allocation5 + $0x20] sm:$0xff]
        %v1674 = vld [vmem:[#allocation5 + $0x28] sm:$0xff]
        %v1675 = vld [vmem:[#allocation5 + $0x30] sm:$0xff]
        %v1676 = vld [vmem:[#allocation5 + $0x38] sm:$0xff]
        %v1677 = vld [vmem:[#allocation5 + $0x40] sm:$0xff]
        %v1678 = vld [vmem:[#allocation5 + $0x48] sm:$0xff]
        %v1679 = vld [vmem:[#allocation5 + $0x50] sm:$0xff]
        %v1680 = vld [vmem:[#allocation5 + $0x58] sm:$0xff]
        %v1681 = vld [vmem:[#allocation5 + $0x60] sm:$0xff]
        %v1682 = vld [vmem:[#allocation5 + $0x68] sm:$0xff]
        %v1683 = vld [vmem:[#allocation5 + $0x70] sm:$0xff]
        %v1684 = vld [vmem:[#allocation5 + $0x78] sm:$0xff]
        %v1685 = vld [vmem:[#allocation5 + $0x80] sm:$0xff]
        %v1686 = vld [vmem:[#allocation5 + $0x88] sm:$0xff]
        %v1687 = vld [vmem:[#allocation5 + $0x90] sm:$0xff]
        %v1688 = vld [vmem:[#allocation5 + $0x98] sm:$0xff]
        %v1689 = vld [vmem:[#allocation5 + $0xa0] sm:$0xff]
        %v1690 = vld [vmem:[#allocation5 + $0xa8] sm:$0xff]
        %v1691 = vld [vmem:[#allocation5 + $0xb0] sm:$0xff]
        %v1692 = vld [vmem:[#allocation5 + $0xb8] sm:$0xff]
        %v1693 = vld [vmem:[#allocation5 + $0xc0] sm:$0xff]
        %v1694 = vld [vmem:[#allocation5 + $0xc8] sm:$0xff]
        %v1695 = vld [vmem:[#allocation5 + $0xd0] sm:$0xff]
        %v1696 = vld [vmem:[#allocation5 + $0xd8] sm:$0xff]
        %v1697 = vld [vmem:[#allocation5 + $0xe0] sm:$0xff]
        %v1698 = vld [vmem:[#allocation5 + $0xe8] sm:$0xff]
        %v1699 = vld [vmem:[#allocation5 + $0xf0] sm:$0xff]
        %v1700 = vld [vmem:[#allocation5 + $0xf8] sm:$0xff]
        %v1701 = vld [vmem:[#allocation5 + $0x100] sm:$0xff]
        %v1702 = vld [vmem:[#allocation5 + $0x108] sm:$0xff]
        %v1703 = vld [vmem:[#allocation5 + $0x110] sm:$0xff]
        %v1704 = vld [vmem:[#allocation5 + $0x118] sm:$0xff]
        %v1705 = vld [vmem:[#allocation5 + $0x120] sm:$0xff]
        %v1706 = vld [vmem:[#allocation5 + $0x128] sm:$0xff]
        %v1707 = vld [vmem:[#allocation5 + $0x130] sm:$0xff]
        %v1708 = vld [vmem:[#allocation5 + $0x138] sm:$0xff]
        %v1709 = vld [vmem:[#allocation5 + $0x140] sm:$0xff]
        %v1710 = vld [vmem:[#allocation5 + $0x148] sm:$0xff]
        %v1711 = vld [vmem:[#allocation5 + $0x150] sm:$0xff]
        %v1712 = vld [vmem:[#allocation5 + $0x158] sm:$0xff]
        %v1713 = vld [vmem:[#allocation5 + $0x160] sm:$0xff]
        %v1714 = vld [vmem:[#allocation5 + $0x168] sm:$0xff]
        %v1715 = vld [vmem:[#allocation5 + $0x170] sm:$0xff]
        %v1716 = vld [vmem:[#allocation5 + $0x178] sm:$0xff]
        %v1717 = vld [vmem:[#allocation5 + $0x180] sm:$0xff]
        %v1718 = vld [vmem:[#allocation5 + $0x188] sm:$0xff]
        %v1719 = vld [vmem:[#allocation5 + $0x190] sm:$0xff]
        %v1720 = vld [vmem:[#allocation5 + $0x198] sm:$0xff]
        %v1721 = vld [vmem:[#allocation5 + $0x1a0] sm:$0xff]
        %v1722 = vld [vmem:[#allocation5 + $0x1a8] sm:$0xff]
        %v1723 = vld [vmem:[#allocation5 + $0x1b0] sm:$0xff]
        %v1724 = vld [vmem:[#allocation5 + $0x1b8] sm:$0xff]
        %v1725 = vld [vmem:[#allocation5 + $0x1c0] sm:$0xff]
        %v1726 = vld [vmem:[#allocation5 + $0x1c8] sm:$0xff]
        %v1727 = vld [vmem:[#allocation5 + $0x1d0] sm:$0xff]
        %v1728 = vld [vmem:[#allocation5 + $0x1d8] sm:$0xff]
        %v1729 = vld [vmem:[#allocation5 + $0x1e0] sm:$0xff]
        %v1730 = vld [vmem:[#allocation5 + $0x1e8] sm:$0xff]
        %v1731 = vld [vmem:[#allocation5 + $0x1f0] sm:$0xff]
        %v1732 = vld [vmem:[#allocation5 + $0x1f8] sm:$0xff]
        %v1733 = vld [vmem:[#allocation5 + $0x200] sm:$0xff]
        %v1734 = vld [vmem:[#allocation5 + $0x208] sm:$0xff]
        %v1735 = vld [vmem:[#allocation5 + $0x210] sm:$0xff]
        %v1736 = vld [vmem:[#allocation5 + $0x218] sm:$0xff]
        %v1737 = vld [vmem:[#allocation5 + $0x220] sm:$0xff]
        %v1738 = vld [vmem:[#allocation5 + $0x228] sm:$0xff]
        %v1739 = vld [vmem:[#allocation5 + $0x230] sm:$0xff]
        %v1740 = vld [vmem:[#allocation5 + $0x238] sm:$0xff]
        %v1741 = vld [vmem:[#allocation5 + $0x240] sm:$0xff]
        %v1742 = vld [vmem:[#allocation5 + $0x248] sm:$0xff]
        %v1743 = vld [vmem:[#allocation5 + $0x250] sm:$0xff]
        %v1744 = vld [vmem:[#allocation5 + $0x258] sm:$0xff]
        %v1745 = vld [vmem:[#allocation5 + $0x260] sm:$0xff]
        %v1746 = vld [vmem:[#allocation5 + $0x268] sm:$0xff]
        %v1747 = vld [vmem:[#allocation5 + $0x270] sm:$0xff]
        %v1748 = vld [vmem:[#allocation5 + $0x278] sm:$0xff]
        %v1749 = vld [vmem:[#allocation5 + $0x280] sm:$0xff]
        %v1750 = vld [vmem:[#allocation5 + $0x288] sm:$0xff]
        %v1751 = vld [vmem:[#allocation5 + $0x290] sm:$0xff]
        %v1752 = vld [vmem:[#allocation5 + $0x298] sm:$0xff]
        %v1753 = vld [vmem:[#allocation5 + $0x2a0] sm:$0xff]
        %v1754 = vld [vmem:[#allocation5 + $0x2a8] sm:$0xff]
        %v1755 = vld [vmem:[#allocation5 + $0x2b0] sm:$0xff]
        %v1756 = vld [vmem:[#allocation5 + $0x2b8] sm:$0xff]
        %v1757 = vld [vmem:[#allocation5 + $0x2c0] sm:$0xff]
        %v1758 = vld [vmem:[#allocation5 + $0x2c8] sm:$0xff]
        %v1759 = vld [vmem:[#allocation5 + $0x2d0] sm:$0xff]
        %v1760 = vld [vmem:[#allocation5 + $0x2d8] sm:$0xff]
        %v1761 = vld [vmem:[#allocation5 + $0x2e0] sm:$0xff]
        %v1762 = vld [vmem:[#allocation5 + $0x2e8] sm:$0xff]
        %v1763 = vld [vmem:[#allocation5 + $0x2f0] sm:$0xff]
        %v1764 = vld [vmem:[#allocation5 + $0x2f8] sm:$0xff]
        %v1765 = vld [vmem:[#allocation5 + $0x300] sm:$0xff]
        %v1766 = vld [vmem:[#allocation5 + $0x308] sm:$0xff]
        %v1767 = vld [vmem:[#allocation5 + $0x310] sm:$0xff]
        %v1768 = vld [vmem:[#allocation5 + $0x318] sm:$0xff]
        %v1769 = vld [vmem:[#allocation5 + $0x320] sm:$0xff]
        %v1770 = vld [vmem:[#allocation5 + $0x328] sm:$0xff]
        %v1771 = vld [vmem:[#allocation5 + $0x330] sm:$0xff]
        %v1772 = vld [vmem:[#allocation5 + $0x338] sm:$0xff]
        %v1773 = vld [vmem:[#allocation5 + $0x340] sm:$0xff]
        %v1774 = vld [vmem:[#allocation5 + $0x348] sm:$0xff]
        %v1775 = vld [vmem:[#allocation5 + $0x350] sm:$0xff]
        %v1776 = vld [vmem:[#allocation5 + $0x358] sm:$0xff]
        %v1777 = vld [vmem:[#allocation5 + $0x360] sm:$0xff]
        %v1778 = vld [vmem:[#allocation5 + $0x368] sm:$0xff]
        %v1779 = vld [vmem:[#allocation5 + $0x370] sm:$0xff]
        %v1780 = vld [vmem:[#allocation5 + $0x378] sm:$0xff]
        %v1781 = vld [vmem:[#allocation5 + $0x380] sm:$0xff]
        %v1782 = vld [vmem:[#allocation5 + $0x388] sm:$0xff]
        %v1783 = vld [vmem:[#allocation5 + $0x390] sm:$0xff]
        %v1784 = vld [vmem:[#allocation5 + $0x398] sm:$0xff]
        %v1785 = vld [vmem:[#allocation5 + $0x3a0] sm:$0xff]
        %v1786 = vld [vmem:[#allocation5 + $0x3a8] sm:$0xff]
        %v1787 = vld [vmem:[#allocation5 + $0x3b0] sm:$0xff]
        %v1788 = vld [vmem:[#allocation5 + $0x3b8] sm:$0xff]
        %v1789 = vld [vmem:[#allocation5 + $0x3c0] sm:$0xff]
        %v1790 = vld [vmem:[#allocation5 + $0x3c8] sm:$0xff]
        %v1791 = vld [vmem:[#allocation5 + $0x3d0] sm:$0xff]
        %v1792 = vld [vmem:[#allocation5 + $0x3d8] sm:$0xff]
        %v1793 = vld [vmem:[#allocation5 + $0x3e0] sm:$0xff]
        %v1794 = vld [vmem:[#allocation5 + $0x3e8] sm:$0xff]
        %v1795 = vld [vmem:[#allocation5 + $0x3f0] sm:$0xff]
        %v1796 = vld [vmem:[#allocation5 + $0x3f8] sm:$0xff]
        %v1797 = vld [vmem:[#allocation5 + $0x400] sm:$0xff]
        %v1798 = vld [vmem:[#allocation5 + $0x408] sm:$0xff]
        %v1799 = vld [vmem:[#allocation5 + $0x410] sm:$0xff]
        %v1800 = vld [vmem:[#allocation5 + $0x418] sm:$0xff]
        %v1801 = vld [vmem:[#allocation5 + $0x420] sm:$0xff]
        %v1802 = vld [vmem:[#allocation5 + $0x428] sm:$0xff]
        %v1803 = vld [vmem:[#allocation5 + $0x430] sm:$0xff]
        %v1804 = vld [vmem:[#allocation5 + $0x438] sm:$0xff]
        %v1805 = vld [vmem:[#allocation5 + $0x440] sm:$0xff]
        %v1806 = vld [vmem:[#allocation5 + $0x448] sm:$0xff]
        %v1807 = vld [vmem:[#allocation5 + $0x450] sm:$0xff]
        %v1808 = vld [vmem:[#allocation5 + $0x458] sm:$0xff]
        %v1809 = vld [vmem:[#allocation5 + $0x460] sm:$0xff]
        %v1810 = vld [vmem:[#allocation5 + $0x468] sm:$0xff]
        %v1811 = vld [vmem:[#allocation5 + $0x470] sm:$0xff]
        %v1812 = vld [vmem:[#allocation5 + $0x478] sm:$0xff]
        %v1813 = vld [vmem:[#allocation5 + $0x480] sm:$0xff]
        %v1814 = vld [vmem:[#allocation5 + $0x488] sm:$0xff]
        %v1815 = vld [vmem:[#allocation5 + $0x490] sm:$0xff]
        %v1816 = vld [vmem:[#allocation5 + $0x498] sm:$0xff]
        %v1817 = vld [vmem:[#allocation5 + $0x4a0] sm:$0xff]
        %v1818 = vld [vmem:[#allocation5 + $0x4a8] sm:$0xff]
        %v1819 = vld [vmem:[#allocation5 + $0x4b0] sm:$0xff]
        %v1820 = vld [vmem:[#allocation5 + $0x4b8] sm:$0xff]
        %v1821 = vld [vmem:[#allocation5 + $0x4c0] sm:$0xff]
        %v1822 = vld [vmem:[#allocation5 + $0x4c8] sm:$0xff]
        %v1823 = vld [vmem:[#allocation5 + $0x4d0] sm:$0xff]
        %v1824 = vld [vmem:[#allocation5 + $0x4d8] sm:$0xff]
        %v1825 = vld [vmem:[#allocation5 + $0x4e0] sm:$0xff]
        %v1826 = vld [vmem:[#allocation5 + $0x4e8] sm:$0xff]
        %v1827 = vld [vmem:[#allocation5 + $0x4f0] sm:$0xff]
        %v1828 = vld [vmem:[#allocation5 + $0x4f8] sm:$0xff]
        %v1829 = vld [vmem:[#allocation5 + $0x500] sm:$0xff]
        %v1830 = vld [vmem:[#allocation5 + $0x508] sm:$0xff]
        %v1831 = vld [vmem:[#allocation5 + $0x510] sm:$0xff]
        %v1832 = vld [vmem:[#allocation5 + $0x518] sm:$0xff]
        %v1833 = vld [vmem:[#allocation5 + $0x520] sm:$0xff]
        %v1834 = vld [vmem:[#allocation5 + $0x528] sm:$0xff]
        %v1835 = vld [vmem:[#allocation5 + $0x530] sm:$0xff]
        %v1836 = vld [vmem:[#allocation5 + $0x538] sm:$0xff]
        %v1837 = vld [vmem:[#allocation5 + $0x540] sm:$0xff]
        %v1838 = vld [vmem:[#allocation5 + $0x548] sm:$0xff]
        %v1839 = vld [vmem:[#allocation5 + $0x550] sm:$0xff]
        %v1840 = vld [vmem:[#allocation5 + $0x558] sm:$0xff]
        %v1841 = vld [vmem:[#allocation5 + $0x560] sm:$0xff]
        %v1842 = vld [vmem:[#allocation5 + $0x568] sm:$0xff]
        %v1843 = vld [vmem:[#allocation5 + $0x570] sm:$0xff]
        %v1844 = vld [vmem:[#allocation5 + $0x578] sm:$0xff]
        %v1845 = vld [vmem:[#allocation5 + $0x580] sm:$0xff]
        %v1846 = vld [vmem:[#allocation5 + $0x588] sm:$0xff]
        %v1847 = vld [vmem:[#allocation5 + $0x590] sm:$0xff]
        %v1848 = vld [vmem:[#allocation5 + $0x598] sm:$0xff]
        %v1849 = vld [vmem:[#allocation5 + $0x5a0] sm:$0xff]
        %v1850 = vld [vmem:[#allocation5 + $0x5a8] sm:$0xff]
        %v1851 = vld [vmem:[#allocation5 + $0x5b0] sm:$0xff]
        %v1852 = vld [vmem:[#allocation5 + $0x5b8] sm:$0xff]
        %v1853 = vld [vmem:[#allocation5 + $0x5c0] sm:$0xff]
        %v1854 = vld [vmem:[#allocation5 + $0x5c8] sm:$0xff]
        %v1855 = vld [vmem:[#allocation5 + $0x5d0] sm:$0xff]
        %v1856 = vld [vmem:[#allocation5 + $0x5d8] sm:$0xff]
        %v1857 = vld [vmem:[#allocation5 + $0x5e0] sm:$0xff]
        %v1858 = vld [vmem:[#allocation5 + $0x5e8] sm:$0xff]
        %v1859 = vld [vmem:[#allocation5 + $0x5f0] sm:$0xff]
        %v1860 = vld [vmem:[#allocation5 + $0x5f8] sm:$0xff]
        %v1861 = vld [vmem:[#allocation5 + $0x600] sm:$0xff]
        %v1862 = vld [vmem:[#allocation5 + $0x608] sm:$0xff]
        %v1863 = vld [vmem:[#allocation5 + $0x610] sm:$0xff]
        %v1864 = vld [vmem:[#allocation5 + $0x618] sm:$0xff]
        %v1865 = vld [vmem:[#allocation5 + $0x620] sm:$0xff]
        %v1866 = vld [vmem:[#allocation5 + $0x628] sm:$0xff]
        %v1867 = vld [vmem:[#allocation5 + $0x630] sm:$0xff]
        %v1868 = vld [vmem:[#allocation5 + $0x638] sm:$0xff]
        %v1869 = vld [vmem:[#allocation5 + $0x640] sm:$0xff]
        %v1870 = vld [vmem:[#allocation5 + $0x648] sm:$0xff]
        %v1871 = vld [vmem:[#allocation5 + $0x650] sm:$0xff]
        %v1872 = vld [vmem:[#allocation5 + $0x658] sm:$0xff]
        %v1873 = vld [vmem:[#allocation5 + $0x660] sm:$0xff]
        %v1874 = vld [vmem:[#allocation5 + $0x668] sm:$0xff]
        %v1875 = vld [vmem:[#allocation5 + $0x670] sm:$0xff]
        %v1876 = vld [vmem:[#allocation5 + $0x678] sm:$0xff]
        %v1877 = vld [vmem:[#allocation5 + $0x680] sm:$0xff]
        %v1878 = vld [vmem:[#allocation5 + $0x688] sm:$0xff]
        %v1879 = vld [vmem:[#allocation5 + $0x690] sm:$0xff]
        %v1880 = vld [vmem:[#allocation5 + $0x698] sm:$0xff]
        %v1881 = vld [vmem:[#allocation5 + $0x6a0] sm:$0xff]
        %v1882 = vld [vmem:[#allocation5 + $0x6a8] sm:$0xff]
        %v1883 = vld [vmem:[#allocation5 + $0x6b0] sm:$0xff]
        %v1884 = vld [vmem:[#allocation5 + $0x6b8] sm:$0xff]
        %v1885 = vld [vmem:[#allocation5 + $0x6c0] sm:$0xff]
        %v1886 = vld [vmem:[#allocation5 + $0x6c8] sm:$0xff]
        %v1887 = vld [vmem:[#allocation5 + $0x6d0] sm:$0xff]
        %v1888 = vld [vmem:[#allocation5 + $0x6d8] sm:$0xff]
        %v1889 = vld [vmem:[#allocation5 + $0x6e0] sm:$0xff]
        %v1890 = vld [vmem:[#allocation5 + $0x6e8] sm:$0xff]
        %v1891 = vld [vmem:[#allocation5 + $0x6f0] sm:$0xff]
        %v1892 = vld [vmem:[#allocation5 + $0x6f8] sm:$0xff]
        %v1893 = vld [vmem:[#allocation5 + $0x700] sm:$0xff]
        %v1894 = vld [vmem:[#allocation5 + $0x708] sm:$0xff]
        %v1895 = vld [vmem:[#allocation5 + $0x710] sm:$0xff]
        %v1896 = vld [vmem:[#allocation5 + $0x718] sm:$0xff]
        %v1897 = vld [vmem:[#allocation5 + $0x720] sm:$0xff]
        %v1898 = vld [vmem:[#allocation5 + $0x728] sm:$0xff]
        %v1899 = vld [vmem:[#allocation5 + $0x730] sm:$0xff]
        %v1900 = vld [vmem:[#allocation5 + $0x738] sm:$0xff]
        %v1901 = vld [vmem:[#allocation5 + $0x740] sm:$0xff]
        %v1902 = vld [vmem:[#allocation5 + $0x748] sm:$0xff]
        %v1903 = vld [vmem:[#allocation5 + $0x750] sm:$0xff]
        %v1904 = vld [vmem:[#allocation5 + $0x758] sm:$0xff]
        %v1905 = vld [vmem:[#allocation5 + $0x760] sm:$0xff]
        %v1906 = vld [vmem:[#allocation5 + $0x768] sm:$0xff]
        %v1907 = vld [vmem:[#allocation5 + $0x770] sm:$0xff]
        %v1908 = vld [vmem:[#allocation5 + $0x778] sm:$0xff]
        %v1909 = vld [vmem:[#allocation5 + $0x780] sm:$0xff]
        %v1910 = vld [vmem:[#allocation5 + $0x788] sm:$0xff]
        %v1911 = vld [vmem:[#allocation5 + $0x790] sm:$0xff]
        %v1912 = vld [vmem:[#allocation5 + $0x798] sm:$0xff]
        %v1913 = vld [vmem:[#allocation5 + $0x7a0] sm:$0xff]
        %v1914 = vld [vmem:[#allocation5 + $0x7a8] sm:$0xff]
        %v1915 = vld [vmem:[#allocation5 + $0x7b0] sm:$0xff]
        %v1916 = vld [vmem:[#allocation5 + $0x7b8] sm:$0xff]
        %v1917 = vld [vmem:[#allocation5 + $0x7c0] sm:$0xff]
        %v1918 = vld [vmem:[#allocation5 + $0x7c8] sm:$0xff]
        %v1919 = vld [vmem:[#allocation5 + $0x7d0] sm:$0xff]
        %v1920 = vld [vmem:[#allocation5 + $0x7d8] sm:$0xff]
        %v1921 = vld [vmem:[#allocation5 + $0x7e0] sm:$0xff]
        %v1922 = vld [vmem:[#allocation5 + $0x7e8] sm:$0xff]
        %v1923 = vld [vmem:[#allocation5 + $0x7f0] sm:$0xff]
        %v1924 = vld [vmem:[#allocation5 + $0x7f8] sm:$0xff]
        %v1925 = vld [vmem:[#allocation5 + $0x800] sm:$0xff]
        %v1926 = vld [vmem:[#allocation5 + $0x808] sm:$0xff]
        %v1927 = vld [vmem:[#allocation5 + $0x810] sm:$0xff]
        %v1928 = vld [vmem:[#allocation5 + $0x818] sm:$0xff]
        %v1929 = vld [vmem:[#allocation5 + $0x820] sm:$0xff]
        %v1930 = vld [vmem:[#allocation5 + $0x828] sm:$0xff]
        %v1931 = vld [vmem:[#allocation5 + $0x830] sm:$0xff]
        %v1932 = vld [vmem:[#allocation5 + $0x838] sm:$0xff]
        %v1933 = vld [vmem:[#allocation5 + $0x840] sm:$0xff]
        %v1934 = vld [vmem:[#allocation5 + $0x848] sm:$0xff]
        %v1935 = vld [vmem:[#allocation5 + $0x850] sm:$0xff]
        %v1936 = vld [vmem:[#allocation5 + $0x858] sm:$0xff]
        %v1937 = vld [vmem:[#allocation5 + $0x860] sm:$0xff]
        %v1938 = vld [vmem:[#allocation5 + $0x868] sm:$0xff]
        %v1939 = vld [vmem:[#allocation5 + $0x870] sm:$0xff]
        %v1940 = vld [vmem:[#allocation5 + $0x878] sm:$0xff]
        %v1941 = vld [vmem:[#allocation5 + $0x880] sm:$0xff]
        %v1942 = vld [vmem:[#allocation5 + $0x888] sm:$0xff]
        %v1943 = vld [vmem:[#allocation5 + $0x890] sm:$0xff]
        %v1944 = vld [vmem:[#allocation5 + $0x898] sm:$0xff]
        %v1945 = vld [vmem:[#allocation5 + $0x8a0] sm:$0xff]
        %v1946 = vld [vmem:[#allocation5 + $0x8a8] sm:$0xff]
        %v1947 = vld [vmem:[#allocation5 + $0x8b0] sm:$0xff]
        %v1948 = vld [vmem:[#allocation5 + $0x8b8] sm:$0xff]
        %v1949 = vld [vmem:[#allocation5 + $0x8c0] sm:$0xff]
        %v1950 = vld [vmem:[#allocation5 + $0x8c8] sm:$0xff]
        %v1951 = vld [vmem:[#allocation5 + $0x8d0] sm:$0xff]
        %v1952 = vld [vmem:[#allocation5 + $0x8d8] sm:$0xff]
        %v1953 = vld [vmem:[#allocation5 + $0x8e0] sm:$0xff]
        %v1954 = vld [vmem:[#allocation5 + $0x8e8] sm:$0xff]
        %v1955 = vld [vmem:[#allocation5 + $0x8f0] sm:$0xff]
        %v1956 = vld [vmem:[#allocation5 + $0x8f8] sm:$0xff]
        %v1957 = vld [vmem:[#allocation5 + $0x900] sm:$0xff]
        %v1958 = vld [vmem:[#allocation5 + $0x908] sm:$0xff]
        %v1959 = vld [vmem:[#allocation5 + $0x910] sm:$0xff]
        %v1960 = vld [vmem:[#allocation5 + $0x918] sm:$0xff]
        %v1961 = vld [vmem:[#allocation5 + $0x920] sm:$0xff]
        %v1962 = vld [vmem:[#allocation5 + $0x928] sm:$0xff]
        %v1963 = vld [vmem:[#allocation5 + $0x930] sm:$0xff]
        %v1964 = vld [vmem:[#allocation5 + $0x938] sm:$0xff]
        %v1965 = vld [vmem:[#allocation5 + $0x940] sm:$0xff]
        %v1966 = vld [vmem:[#allocation5 + $0x948] sm:$0xff]
        %v1967 = vld [vmem:[#allocation5 + $0x950] sm:$0xff]
        %v1968 = vld [vmem:[#allocation5 + $0x958] sm:$0xff]
        %v1969 = vld [vmem:[#allocation5 + $0x960] sm:$0xff]
        %v1970 = vld [vmem:[#allocation5 + $0x968] sm:$0xff]
        %v1971 = vld [vmem:[#allocation5 + $0x970] sm:$0xff]
        %v1972 = vld [vmem:[#allocation5 + $0x978] sm:$0xff]
        %v1973 = vld [vmem:[#allocation5 + $0x980] sm:$0xff]
        %v1974 = vld [vmem:[#allocation5 + $0x988] sm:$0xff]
        %v1975 = vld [vmem:[#allocation5 + $0x990] sm:$0xff]
        %v1976 = vld [vmem:[#allocation5 + $0x998] sm:$0xff]
        %v1977 = vld [vmem:[#allocation5 + $0x9a0] sm:$0xff]
        %v1978 = vld [vmem:[#allocation5 + $0x9a8] sm:$0xff]
        %v1979 = vld [vmem:[#allocation5 + $0x9b0] sm:$0xff]
        %v1980 = vld [vmem:[#allocation5 + $0x9b8] sm:$0xff]
        %v1981 = vld [vmem:[#allocation5 + $0x9c0] sm:$0xff]
        %v1982 = vld [vmem:[#allocation5 + $0x9c8] sm:$0xff]
        %v1983 = vld [vmem:[#allocation5 + $0x9d0] sm:$0xff]
        %v1984 = vld [vmem:[#allocation5 + $0x9d8] sm:$0xff]
        %v1985 = vld [vmem:[#allocation5 + $0x9e0] sm:$0xff]
        %v1986 = vld [vmem:[#allocation5 + $0x9e8] sm:$0xff]
        %v1987 = vld [vmem:[#allocation5 + $0x9f0] sm:$0xff]
        %v1988 = vld [vmem:[#allocation5 + $0x9f8] sm:$0xff]
        %v1989 = vld [vmem:[#allocation5 + $0xa00] sm:$0xff]
        %v1990 = vld [vmem:[#allocation5 + $0xa08] sm:$0xff]
        %v1991 = vld [vmem:[#allocation5 + $0xa10] sm:$0xff]
        %v1992 = vld [vmem:[#allocation5 + $0xa18] sm:$0xff]
        %v1993 = vld [vmem:[#allocation5 + $0xa20] sm:$0xff]
        %v1994 = vld [vmem:[#allocation5 + $0xa28] sm:$0xff]
        %v1995 = vld [vmem:[#allocation5 + $0xa30] sm:$0xff]
        %v1996 = vld [vmem:[#allocation5 + $0xa38] sm:$0xff]
        %v1997 = vld [vmem:[#allocation5 + $0xa40] sm:$0xff]
        %v1998 = vld [vmem:[#allocation5 + $0xa48] sm:$0xff]
        %v1999 = vld [vmem:[#allocation5 + $0xa50] sm:$0xff]
        %v2000 = vld [vmem:[#allocation5 + $0xa58] sm:$0xff]
        %v2001 = vld [vmem:[#allocation5 + $0xa60] sm:$0xff]
        %v2002 = vld [vmem:[#allocation5 + $0xa68] sm:$0xff]
        %v2003 = vld [vmem:[#allocation5 + $0xa70] sm:$0xff]
        %v2004 = vld [vmem:[#allocation5 + $0xa78] sm:$0xff]
        %v2005 = vld [vmem:[#allocation5 + $0xa80] sm:$0xff]
        %v2006 = vld [vmem:[#allocation5 + $0xa88] sm:$0xff]
        %v2007 = vld [vmem:[#allocation5 + $0xa90] sm:$0xff]
        %v2008 = vld [vmem:[#allocation5 + $0xa98] sm:$0xff]
        %v2009 = vld [vmem:[#allocation5 + $0xaa0] sm:$0xff]
        %v2010 = vld [vmem:[#allocation5 + $0xaa8] sm:$0xff]
        %v2011 = vld [vmem:[#allocation5 + $0xab0] sm:$0xff]
        %v2012 = vld [vmem:[#allocation5 + $0xab8] sm:$0xff]
        %v2013 = vld [vmem:[#allocation5 + $0xac0] sm:$0xff]
        %v2014 = vld [vmem:[#allocation5 + $0xac8] sm:$0xff]
        %v2015 = vld [vmem:[#allocation5 + $0xad0] sm:$0xff]
        %v2016 = vld [vmem:[#allocation5 + $0xad8] sm:$0xff]
        %v2017 = vld [vmem:[#allocation5 + $0xae0] sm:$0xff]
        %v2018 = vld [vmem:[#allocation5 + $0xae8] sm:$0xff]
        %v2019 = vld [vmem:[#allocation5 + $0xaf0] sm:$0xff]
        %v2020 = vld [vmem:[#allocation5 + $0xaf8] sm:$0xff]
        %v2021 = vld [vmem:[#allocation5 + $0xb00] sm:$0xff]
        %v2022 = vld [vmem:[#allocation5 + $0xb08] sm:$0xff]
        %v2023 = vld [vmem:[#allocation5 + $0xb10] sm:$0xff]
        %v2024 = vld [vmem:[#allocation5 + $0xb18] sm:$0xff]
        %v2025 = vld [vmem:[#allocation5 + $0xb20] sm:$0xff]
        %v2026 = vld [vmem:[#allocation5 + $0xb28] sm:$0xff]
        %v2027 = vld [vmem:[#allocation5 + $0xb30] sm:$0xff]
        %v2028 = vld [vmem:[#allocation5 + $0xb38] sm:$0xff]
        %v2029 = vld [vmem:[#allocation5 + $0xb40] sm:$0xff]
        %v2030 = vld [vmem:[#allocation5 + $0xb48] sm:$0xff]
        %v2031 = vld [vmem:[#allocation5 + $0xb50] sm:$0xff]
        %v2032 = vld [vmem:[#allocation5 + $0xb58] sm:$0xff]
        %v2033 = vld [vmem:[#allocation5 + $0xb60] sm:$0xff]
        %v2034 = vld [vmem:[#allocation5 + $0xb68] sm:$0xff]
        %v2035 = vld [vmem:[#allocation5 + $0xb70] sm:$0xff]
        %v2036 = vld [vmem:[#allocation5 + $0xb78] sm:$0xff]
        %v2037 = vld [vmem:[#allocation5 + $0xb80] sm:$0xff]
        %v2038 = vld [vmem:[#allocation5 + $0xb88] sm:$0xff]
        %v2039 = vld [vmem:[#allocation5 + $0xb90] sm:$0xff]
        %v2040 = vld [vmem:[#allocation5 + $0xb98] sm:$0xff]
        %v2041 = vld [vmem:[#allocation5 + $0xba0] sm:$0xff]
        %v2042 = vld [vmem:[#allocation5 + $0xba8] sm:$0xff]
        %v2043 = vld [vmem:[#allocation5 + $0xbb0] sm:$0xff]
        %v2044 = vld [vmem:[#allocation5 + $0xbb8] sm:$0xff]
        %v2045 = vld [vmem:[#allocation5 + $0xbc0] sm:$0xff]
        %v2046 = vld [vmem:[#allocation5 + $0xbc8] sm:$0xff]
        %v2047 = vld [vmem:[#allocation5 + $0xbd0] sm:$0xff]
        %v2048 = vld [vmem:[#allocation5 + $0xbd8] sm:$0xff]
        %v2049 = vld [vmem:[#allocation5 + $0xbe0] sm:$0xff]
        %v2050 = vld [vmem:[#allocation5 + $0xbe8] sm:$0xff]
        %v2051 = vld [vmem:[#allocation5 + $0xbf0] sm:$0xff]
        %v2052 = vld [vmem:[#allocation5 + $0xbf8] sm:$0xff]
        %v2053 = vld [vmem:[#allocation5 + $0xc00] sm:$0xff]
        %v2054 = vld [vmem:[#allocation5 + $0xc08] sm:$0xff]
        %v2055 = vld [vmem:[#allocation5 + $0xc10] sm:$0xff]
        %v2056 = vld [vmem:[#allocation5 + $0xc18] sm:$0xff]
        %v2057 = vld [vmem:[#allocation5 + $0xc20] sm:$0xff]
        %v2058 = vld [vmem:[#allocation5 + $0xc28] sm:$0xff]
        %v2059 = vld [vmem:[#allocation5 + $0xc30] sm:$0xff]
        %v2060 = vld [vmem:[#allocation5 + $0xc38] sm:$0xff]
        %v2061 = vld [vmem:[#allocation5 + $0xc40] sm:$0xff]
        %v2062 = vld [vmem:[#allocation5 + $0xc48] sm:$0xff]
        %v2063 = vld [vmem:[#allocation5 + $0xc50] sm:$0xff]
        %v2064 = vld [vmem:[#allocation5 + $0xc58] sm:$0xff]
        %v2065 = vld [vmem:[#allocation5 + $0xc60] sm:$0xff]
        %v2066 = vld [vmem:[#allocation5 + $0xc68] sm:$0xff]
        %v2067 = vld [vmem:[#allocation5 + $0xc70] sm:$0xff]
        %v2068 = vld [vmem:[#allocation5 + $0xc78] sm:$0xff]
        %v2069 = vld [vmem:[#allocation5 + $0xc80] sm:$0xff]
        %v2070 = vld [vmem:[#allocation5 + $0xc88] sm:$0xff]
        %v2071 = vld [vmem:[#allocation5 + $0xc90] sm:$0xff]
        %v2072 = vld [vmem:[#allocation5 + $0xc98] sm:$0xff]
        %v2073 = vld [vmem:[#allocation5 + $0xca0] sm:$0xff]
        %v2074 = vld [vmem:[#allocation5 + $0xca8] sm:$0xff]
        %v2075 = vld [vmem:[#allocation5 + $0xcb0] sm:$0xff]
        %v2076 = vld [vmem:[#allocation5 + $0xcb8] sm:$0xff]
        %v2077 = vld [vmem:[#allocation5 + $0xcc0] sm:$0xff]
        %v2078 = vld [vmem:[#allocation5 + $0xcc8] sm:$0xff]
        %v2079 = vld [vmem:[#allocation5 + $0xcd0] sm:$0xff]
        %v2080 = vld [vmem:[#allocation5 + $0xcd8] sm:$0xff]
        %v2081 = vld [vmem:[#allocation5 + $0xce0] sm:$0xff]
        %v2082 = vld [vmem:[#allocation5 + $0xce8] sm:$0xff]
        %v2083 = vld [vmem:[#allocation5 + $0xcf0] sm:$0xff]
        %v2084 = vld [vmem:[#allocation5 + $0xcf8] sm:$0xff]
        %v2085 = vld [vmem:[#allocation5 + $0xd00] sm:$0xff]
        %v2086 = vld [vmem:[#allocation5 + $0xd08] sm:$0xff]
        %v2087 = vld [vmem:[#allocation5 + $0xd10] sm:$0xff]
        %v2088 = vld [vmem:[#allocation5 + $0xd18] sm:$0xff]
        %v2089 = vld [vmem:[#allocation5 + $0xd20] sm:$0xff]
        %v2090 = vld [vmem:[#allocation5 + $0xd28] sm:$0xff]
        %v2091 = vld [vmem:[#allocation5 + $0xd30] sm:$0xff]
        %v2092 = vld [vmem:[#allocation5 + $0xd38] sm:$0xff]
        %v2093 = vld [vmem:[#allocation5 + $0xd40] sm:$0xff]
        %v2094 = vld [vmem:[#allocation5 + $0xd48] sm:$0xff]
        %v2095 = vld [vmem:[#allocation5 + $0xd50] sm:$0xff]
        %v2096 = vld [vmem:[#allocation5 + $0xd58] sm:$0xff]
        %v2097 = vld [vmem:[#allocation5 + $0xd60] sm:$0xff]
        %v2098 = vld [vmem:[#allocation5 + $0xd68] sm:$0xff]
        %v2099 = vld [vmem:[#allocation5 + $0xd70] sm:$0xff]
        %v2100 = vld [vmem:[#allocation5 + $0xd78] sm:$0xff]
        %v2101 = vld [vmem:[#allocation5 + $0xd80] sm:$0xff]
        %v2102 = vld [vmem:[#allocation5 + $0xd88] sm:$0xff]
        %v2103 = vld [vmem:[#allocation5 + $0xd90] sm:$0xff]
        %v2104 = vld [vmem:[#allocation5 + $0xd98] sm:$0xff]
        %v2105 = vld [vmem:[#allocation5 + $0xda0] sm:$0xff]
        %v2106 = vld [vmem:[#allocation5 + $0xda8] sm:$0xff]
        %v2107 = vld [vmem:[#allocation5 + $0xdb0] sm:$0xff]
        %v2108 = vld [vmem:[#allocation5 + $0xdb8] sm:$0xff]
        %v2109 = vld [vmem:[#allocation5 + $0xdc0] sm:$0xff]
        %v2110 = vld [vmem:[#allocation5 + $0xdc8] sm:$0xff]
        %v2111 = vld [vmem:[#allocation5 + $0xdd0] sm:$0xff]
        %v2112 = vld [vmem:[#allocation5 + $0xdd8] sm:$0xff]
        %v2113 = vld [vmem:[#allocation5 + $0xde0] sm:$0xff]
        %v2114 = vld [vmem:[#allocation5 + $0xde8] sm:$0xff]
        %v2115 = vld [vmem:[#allocation5 + $0xdf0] sm:$0xff]
        %v2116 = vld [vmem:[#allocation5 + $0xdf8] sm:$0xff]
        %v2117 = vld [vmem:[#allocation5 + $0xe00] sm:$0xff]
        %v2118 = vld [vmem:[#allocation5 + $0xe08] sm:$0xff]
        %v2119 = vld [vmem:[#allocation5 + $0xe10] sm:$0xff]
        %v2120 = vld [vmem:[#allocation5 + $0xe18] sm:$0xff]
        %v2121 = vld [vmem:[#allocation5 + $0xe20] sm:$0xff]
        %v2122 = vld [vmem:[#allocation5 + $0xe28] sm:$0xff]
        %v2123 = vld [vmem:[#allocation5 + $0xe30] sm:$0xff]
        %v2124 = vld [vmem:[#allocation5 + $0xe38] sm:$0xff]
        %v2125 = vld [vmem:[#allocation5 + $0xe40] sm:$0xff]
        %v2126 = vld [vmem:[#allocation5 + $0xe48] sm:$0xff]
        %v2127 = vld [vmem:[#allocation5 + $0xe50] sm:$0xff]
        %v2128 = vld [vmem:[#allocation5 + $0xe58] sm:$0xff]
        %v2129 = vld [vmem:[#allocation5 + $0xe60] sm:$0xff]
        %v2130 = vld [vmem:[#allocation5 + $0xe68] sm:$0xff]
        %v2131 = vld [vmem:[#allocation5 + $0xe70] sm:$0xff]
        %v2132 = vld [vmem:[#allocation5 + $0xe78] sm:$0xff]
        %v2133 = vld [vmem:[#allocation5 + $0xe80] sm:$0xff]
        %v2134 = vld [vmem:[#allocation5 + $0xe88] sm:$0xff]
        %v2135 = vld [vmem:[#allocation5 + $0xe90] sm:$0xff]
        %v2136 = vld [vmem:[#allocation5 + $0xe98] sm:$0xff]
        %v2137 = vld [vmem:[#allocation5 + $0xea0] sm:$0xff]
        %v2138 = vld [vmem:[#allocation5 + $0xea8] sm:$0xff]
        %v2139 = vld [vmem:[#allocation5 + $0xeb0] sm:$0xff]
        %v2140 = vld [vmem:[#allocation5 + $0xeb8] sm:$0xff]
        %v2141 = vld [vmem:[#allocation5 + $0xec0] sm:$0xff]
        %v2142 = vld [vmem:[#allocation5 + $0xec8] sm:$0xff]
        %v2143 = vld [vmem:[#allocation5 + $0xed0] sm:$0xff]
        %v2144 = vld [vmem:[#allocation5 + $0xed8] sm:$0xff]
        %v2145 = vld [vmem:[#allocation5 + $0xee0] sm:$0xff]
        %v2146 = vld [vmem:[#allocation5 + $0xee8] sm:$0xff]
        %v2147 = vld [vmem:[#allocation5 + $0xef0] sm:$0xff]
        %v2148 = vld [vmem:[#allocation5 + $0xef8] sm:$0xff]
        %v2149 = vld [vmem:[#allocation5 + $0xf00] sm:$0xff]
        %v2150 = vld [vmem:[#allocation5 + $0xf08] sm:$0xff]
        %v2151 = vld [vmem:[#allocation5 + $0xf10] sm:$0xff]
        %v2152 = vld [vmem:[#allocation5 + $0xf18] sm:$0xff]
        %v2153 = vld [vmem:[#allocation5 + $0xf20] sm:$0xff]
        %v2154 = vld [vmem:[#allocation5 + $0xf28] sm:$0xff]
        %v2155 = vld [vmem:[#allocation5 + $0xf30] sm:$0xff]
        %v2156 = vld [vmem:[#allocation5 + $0xf38] sm:$0xff]
        %v2157 = vld [vmem:[#allocation5 + $0xf40] sm:$0xff]
        %v2158 = vld [vmem:[#allocation5 + $0xf48] sm:$0xff]
        %v2159 = vld [vmem:[#allocation5 + $0xf50] sm:$0xff]
        %v2160 = vld [vmem:[#allocation5 + $0xf58] sm:$0xff]
        %v2161 = vld [vmem:[#allocation5 + $0xf60] sm:$0xff]
        %v2162 = vld [vmem:[#allocation5 + $0xf68] sm:$0xff]
        %v2163 = vld [vmem:[#allocation5 + $0xf70] sm:$0xff]
        %v2164 = vld [vmem:[#allocation5 + $0xf78] sm:$0xff]
        %v2165 = vld [vmem:[#allocation5 + $0xf80] sm:$0xff]
        %v2166 = vld [vmem:[#allocation5 + $0xf88] sm:$0xff]
        %v2167 = vld [vmem:[#allocation5 + $0xf90] sm:$0xff]
        %v2168 = vld [vmem:[#allocation5 + $0xf98] sm:$0xff]
        %v2169 = vld [vmem:[#allocation5 + $0xfa0] sm:$0xff]
        %v2170 = vld [vmem:[#allocation5 + $0xfa8] sm:$0xff]
        %v2171 = vld [vmem:[#allocation5 + $0xfb0] sm:$0xff]
        %v2172 = vld [vmem:[#allocation5 + $0xfb8] sm:$0xff]
        %v2173 = vld [vmem:[#allocation5 + $0xfc0] sm:$0xff]
        %v2174 = vld [vmem:[#allocation5 + $0xfc8] sm:$0xff]
        %v2175 = vld [vmem:[#allocation5 + $0xfd0] sm:$0xff]
        %v2176 = vld [vmem:[#allocation5 + $0xfd8] sm:$0xff]
        %v2177 = vld [vmem:[#allocation5 + $0xfe0] sm:$0xff]
        %v2178 = vld [vmem:[#allocation5 + $0xfe8] sm:$0xff]
        %v2179 = vld [vmem:[#allocation5 + $0xff0] sm:$0xff]
        %v2180 = vld [vmem:[#allocation5 + $0xff8] sm:$0xff]
        %v2181 = vld [vmem:[#allocation7] sm:$0xf]
        %v2182 = vunpack.c.l.bf16 %v2181
        %v2184 = vlaneseq
        %v2185 = vshrl.u32 %v2184, 7
        %v2186 = vsub.s32 0, %v2185
        %v2187 = vrot.slane %v2182, %v2186
        %v2188 = vlaneseq
        %v2189 = vshrl.u32 %v2188, 7
        %v2190 = vsub.s32 2, %v2189
        %v2191 = vrot.slane %v2182, %v2190
        %v2192 = vlaneseq
        %v2193 = vshrl.u32 %v2192, 7
        %v2194 = vsub.s32 4, %v2193
        %v2195 = vrot.slane %v2182, %v2194
        %v2196 = vlaneseq
        %v2197 = vshrl.u32 %v2196, 7
        %v2198 = vsub.s32 6, %v2197
        %v2199 = vrot.slane %v2182, %v2198
        %v2204 = vlaneseq
        %v2205 = vshrl.u32 %v2204, 7
        %v2206 = vsub.s32 0, %v2205
        %v2207 = vrot.slane %v2187, %v2206
        %v2208 = vlaneseq
        %v2209 = vshrl.u32 %v2208, 7
        %v2210 = vsub.s32 0, %v2209
        %v2211 = vrot.slane %v2191, %v2210
        %v2212 = vlaneseq
        %v2213 = vshrl.u32 %v2212, 7
        %v2214 = vsub.s32 0, %v2213
        %v2215 = vrot.slane %v2195, %v2214
        %v2216 = vlaneseq
        %v2217 = vshrl.u32 %v2216, 7
        %v2218 = vsub.s32 0, %v2217
        %v2219 = vrot.slane %v2199, %v2218
        %v2348 = vunpack.c.l.b16 %v1541
        %v2349 = vunpack.c.l.b16 %v1542
        %v2350 = vunpack.c.l.b16 %v1543
        %v2351 = vunpack.c.l.b16 %v1544
        %v2352 = vunpack.c.l.b16 %v1545
        %v2353 = vunpack.c.l.b16 %v1546
        %v2354 = vunpack.c.l.b16 %v1547
        %v2355 = vunpack.c.l.b16 %v1548
        %v2356 = vunpack.c.l.b16 %v1549
        %v2357 = vunpack.c.l.b16 %v1550
        %v2358 = vunpack.c.l.b16 %v1551
        %v2359 = vunpack.c.l.b16 %v1552
        %v2360 = vunpack.c.l.b16 %v1553
        %v2361 = vunpack.c.l.b16 %v1554
        %v2362 = vunpack.c.l.b16 %v1555
        %v2363 = vunpack.c.l.b16 %v1556
        %v2364 = vunpack.c.l.b16 %v1557
        %v2365 = vunpack.c.l.b16 %v1558
        %v2366 = vunpack.c.l.b16 %v1559
        %v2367 = vunpack.c.l.b16 %v1560
        %v2368 = vunpack.c.l.b16 %v1561
        %v2369 = vunpack.c.l.b16 %v1562
        %v2370 = vunpack.c.l.b16 %v1563
        %v2371 = vunpack.c.l.b16 %v1564
        %v2372 = vunpack.c.l.b16 %v1565
        %v2373 = vunpack.c.l.b16 %v1566
        %v2374 = vunpack.c.l.b16 %v1567
        %v2375 = vunpack.c.l.b16 %v1568
        %v2376 = vunpack.c.l.b16 %v1569
        %v2377 = vunpack.c.l.b16 %v1570
        %v2378 = vunpack.c.l.b16 %v1571
        %v2379 = vunpack.c.l.b16 %v1572
        %v2380 = vunpack.c.l.b16 %v1573
        %v2381 = vunpack.c.l.b16 %v1574
        %v2382 = vunpack.c.l.b16 %v1575
        %v2383 = vunpack.c.l.b16 %v1576
        %v2384 = vunpack.c.l.b16 %v1577
        %v2385 = vunpack.c.l.b16 %v1578
        %v2386 = vunpack.c.l.b16 %v1579
        %v2387 = vunpack.c.l.b16 %v1580
        %v2388 = vunpack.c.l.b16 %v1581
        %v2389 = vunpack.c.l.b16 %v1582
        %v2390 = vunpack.c.l.b16 %v1583
        %v2391 = vunpack.c.l.b16 %v1584
        %v2392 = vunpack.c.l.b16 %v1585
        %v2393 = vunpack.c.l.b16 %v1586
        %v2394 = vunpack.c.l.b16 %v1587
        %v2395 = vunpack.c.l.b16 %v1588
        %v2396 = vunpack.c.l.b16 %v1589
        %v2397 = vunpack.c.l.b16 %v1590
        %v2398 = vunpack.c.l.b16 %v1591
        %v2399 = vunpack.c.l.b16 %v1592
        %v2400 = vunpack.c.l.b16 %v1593
        %v2401 = vunpack.c.l.b16 %v1594
        %v2402 = vunpack.c.l.b16 %v1595
        %v2403 = vunpack.c.l.b16 %v1596
        %v2404 = vunpack.c.l.b16 %v1597
        %v2405 = vunpack.c.l.b16 %v1598
        %v2406 = vunpack.c.l.b16 %v1599
        %v2407 = vunpack.c.l.b16 %v1600
        %v2408 = vunpack.c.l.b16 %v1601
        %v2409 = vunpack.c.l.b16 %v1602
        %v2410 = vunpack.c.l.b16 %v1603
        %v2411 = vunpack.c.l.b16 %v1604
        %v2412 = vunpack.c.l.b16 %v1605
        %v2413 = vunpack.c.l.b16 %v1606
        %v2414 = vunpack.c.l.b16 %v1607
        %v2415 = vunpack.c.l.b16 %v1608
        %v2416 = vunpack.c.l.b16 %v1609
        %v2417 = vunpack.c.l.b16 %v1610
        %v2418 = vunpack.c.l.b16 %v1611
        %v2419 = vunpack.c.l.b16 %v1612
        %v2420 = vunpack.c.l.b16 %v1613
        %v2421 = vunpack.c.l.b16 %v1614
        %v2422 = vunpack.c.l.b16 %v1615
        %v2423 = vunpack.c.l.b16 %v1616
        %v2424 = vunpack.c.l.b16 %v1617
        %v2425 = vunpack.c.l.b16 %v1618
        %v2426 = vunpack.c.l.b16 %v1619
        %v2427 = vunpack.c.l.b16 %v1620
        %v2428 = vunpack.c.l.b16 %v1621
        %v2429 = vunpack.c.l.b16 %v1622
        %v2430 = vunpack.c.l.b16 %v1623
        %v2431 = vunpack.c.l.b16 %v1624
        %v2432 = vunpack.c.l.b16 %v1625
        %v2433 = vunpack.c.l.b16 %v1626
        %v2434 = vunpack.c.l.b16 %v1627
        %v2435 = vunpack.c.l.b16 %v1628
        %v2436 = vunpack.c.l.b16 %v1629
        %v2437 = vunpack.c.l.b16 %v1630
        %v2438 = vunpack.c.l.b16 %v1631
        %v2439 = vunpack.c.l.b16 %v1632
        %v2440 = vunpack.c.l.b16 %v1633
        %v2441 = vunpack.c.l.b16 %v1634
        %v2442 = vunpack.c.l.b16 %v1635
        %v2443 = vunpack.c.l.b16 %v1636
        %v2444 = vunpack.c.l.b16 %v1637
        %v2445 = vunpack.c.l.b16 %v1638
        %v2446 = vunpack.c.l.b16 %v1639
        %v2447 = vunpack.c.l.b16 %v1640
        %v2448 = vunpack.c.l.b16 %v1641
        %v2449 = vunpack.c.l.b16 %v1642
        %v2450 = vunpack.c.l.b16 %v1643
        %v2451 = vunpack.c.l.b16 %v1644
        %v2452 = vunpack.c.l.b16 %v1645
        %v2453 = vunpack.c.l.b16 %v1646
        %v2454 = vunpack.c.l.b16 %v1647
        %v2455 = vunpack.c.l.b16 %v1648
        %v2456 = vunpack.c.l.b16 %v1649
        %v2457 = vunpack.c.l.b16 %v1650
        %v2458 = vunpack.c.l.b16 %v1651
        %v2459 = vunpack.c.l.b16 %v1652
        %v2460 = vunpack.c.l.b16 %v1653
        %v2461 = vunpack.c.l.b16 %v1654
        %v2462 = vunpack.c.l.b16 %v1655
        %v2463 = vunpack.c.l.b16 %v1656
        %v2464 = vunpack.c.l.b16 %v1657
        %v2465 = vunpack.c.l.b16 %v1658
        %v2466 = vunpack.c.l.b16 %v1659
        %v2467 = vunpack.c.l.b16 %v1660
        %v2468 = vunpack.c.l.b16 %v1661
        %v2469 = vunpack.c.l.b16 %v1662
        %v2470 = vunpack.c.l.b16 %v1663
        %v2471 = vunpack.c.l.b16 %v1664
        %v2472 = vunpack.c.l.b16 %v1665
        %v2473 = vunpack.c.l.b16 %v1666
        %v2474 = vunpack.c.l.b16 %v1667
        %v2475 = vunpack.c.l.b16 %v1668
        %vm2476 = vcmask 1041409
        %v2477 = vsel %vm2476, %v2364, %v2348
        %vm2478 = vcmask 1042434
        %v2479 = vsel %vm2478, %v2380, %v2477
        %vm2480 = vcmask 1043459
        %v2481 = vsel %vm2480, %v2396, %v2479
        %vm2482 = vcmask 1044484
        %v2483 = vsel %vm2482, %v2412, %v2481
        %vm2484 = vcmask 1045509
        %v2485 = vsel %vm2484, %v2428, %v2483
        %vm2486 = vcmask 1046534
        %v2487 = vsel %vm2486, %v2444, %v2485
        %vm2488 = vcmask 1047559
        %v2489 = vsel %vm2488, %v2460, %v2487
        %v2490 = vsel %vm2476, %v2365, %v2349
        %v2491 = vsel %vm2478, %v2381, %v2490
        %v2492 = vsel %vm2480, %v2397, %v2491
        %v2493 = vsel %vm2482, %v2413, %v2492
        %v2494 = vsel %vm2484, %v2429, %v2493
        %v2495 = vsel %vm2486, %v2445, %v2494
        %v2496 = vsel %vm2488, %v2461, %v2495
        %v2497 = vsel %vm2476, %v2366, %v2350
        %v2498 = vsel %vm2478, %v2382, %v2497
        %v2499 = vsel %vm2480, %v2398, %v2498
        %v2500 = vsel %vm2482, %v2414, %v2499
        %v2501 = vsel %vm2484, %v2430, %v2500
        %v2502 = vsel %vm2486, %v2446, %v2501
        %v2503 = vsel %vm2488, %v2462, %v2502
        %v2504 = vsel %vm2476, %v2367, %v2351
        %v2505 = vsel %vm2478, %v2383, %v2504
        %v2506 = vsel %vm2480, %v2399, %v2505
        %v2507 = vsel %vm2482, %v2415, %v2506
        %v2508 = vsel %vm2484, %v2431, %v2507
        %v2509 = vsel %vm2486, %v2447, %v2508
        %v2510 = vsel %vm2488, %v2463, %v2509
        %v2511 = vsel %vm2476, %v2368, %v2352
        %v2512 = vsel %vm2478, %v2384, %v2511
        %v2513 = vsel %vm2480, %v2400, %v2512
        %v2514 = vsel %vm2482, %v2416, %v2513
        %v2515 = vsel %vm2484, %v2432, %v2514
        %v2516 = vsel %vm2486, %v2448, %v2515
        %v2517 = vsel %vm2488, %v2464, %v2516
        %v2518 = vsel %vm2476, %v2369, %v2353
        %v2519 = vsel %vm2478, %v2385, %v2518
        %v2520 = vsel %vm2480, %v2401, %v2519
        %v2521 = vsel %vm2482, %v2417, %v2520
        %v2522 = vsel %vm2484, %v2433, %v2521
        %v2523 = vsel %vm2486, %v2449, %v2522
        %v2524 = vsel %vm2488, %v2465, %v2523
        %v2525 = vsel %vm2476, %v2370, %v2354
        %v2526 = vsel %vm2478, %v2386, %v2525
        %v2527 = vsel %vm2480, %v2402, %v2526
        %v2528 = vsel %vm2482, %v2418, %v2527
        %v2529 = vsel %vm2484, %v2434, %v2528
        %v2530 = vsel %vm2486, %v2450, %v2529
        %v2531 = vsel %vm2488, %v2466, %v2530
        %v2532 = vsel %vm2476, %v2371, %v2355
        %v2533 = vsel %vm2478, %v2387, %v2532
        %v2534 = vsel %vm2480, %v2403, %v2533
        %v2535 = vsel %vm2482, %v2419, %v2534
        %v2536 = vsel %vm2484, %v2435, %v2535
        %v2537 = vsel %vm2486, %v2451, %v2536
        %v2538 = vsel %vm2488, %v2467, %v2537
        %v2539 = vsel %vm2476, %v2372, %v2356
        %v2540 = vsel %vm2478, %v2388, %v2539
        %v2541 = vsel %vm2480, %v2404, %v2540
        %v2542 = vsel %vm2482, %v2420, %v2541
        %v2543 = vsel %vm2484, %v2436, %v2542
        %v2544 = vsel %vm2486, %v2452, %v2543
        %v2545 = vsel %vm2488, %v2468, %v2544
        %v2546 = vsel %vm2476, %v2373, %v2357
        %v2547 = vsel %vm2478, %v2389, %v2546
        %v2548 = vsel %vm2480, %v2405, %v2547
        %v2549 = vsel %vm2482, %v2421, %v2548
        %v2550 = vsel %vm2484, %v2437, %v2549
        %v2551 = vsel %vm2486, %v2453, %v2550
        %v2552 = vsel %vm2488, %v2469, %v2551
        %v2553 = vsel %vm2476, %v2374, %v2358
        %v2554 = vsel %vm2478, %v2390, %v2553
        %v2555 = vsel %vm2480, %v2406, %v2554
        %v2556 = vsel %vm2482, %v2422, %v2555
        %v2557 = vsel %vm2484, %v2438, %v2556
        %v2558 = vsel %vm2486, %v2454, %v2557
        %v2559 = vsel %vm2488, %v2470, %v2558
        %v2560 = vsel %vm2476, %v2375, %v2359
        %v2561 = vsel %vm2478, %v2391, %v2560
        %v2562 = vsel %vm2480, %v2407, %v2561
        %v2563 = vsel %vm2482, %v2423, %v2562
        %v2564 = vsel %vm2484, %v2439, %v2563
        %v2565 = vsel %vm2486, %v2455, %v2564
        %v2566 = vsel %vm2488, %v2471, %v2565
        %v2567 = vsel %vm2476, %v2376, %v2360
        %v2568 = vsel %vm2478, %v2392, %v2567
        %v2569 = vsel %vm2480, %v2408, %v2568
        %v2570 = vsel %vm2482, %v2424, %v2569
        %v2571 = vsel %vm2484, %v2440, %v2570
        %v2572 = vsel %vm2486, %v2456, %v2571
        %v2573 = vsel %vm2488, %v2472, %v2572
        %v2574 = vsel %vm2476, %v2377, %v2361
        %v2575 = vsel %vm2478, %v2393, %v2574
        %v2576 = vsel %vm2480, %v2409, %v2575
        %v2577 = vsel %vm2482, %v2425, %v2576
        %v2578 = vsel %vm2484, %v2441, %v2577
        %v2579 = vsel %vm2486, %v2457, %v2578
        %v2580 = vsel %vm2488, %v2473, %v2579
        %v2581 = vsel %vm2476, %v2378, %v2362
        %v2582 = vsel %vm2478, %v2394, %v2581
        %v2583 = vsel %vm2480, %v2410, %v2582
        %v2584 = vsel %vm2482, %v2426, %v2583
        %v2585 = vsel %vm2484, %v2442, %v2584
        %v2586 = vsel %vm2486, %v2458, %v2585
        %v2587 = vsel %vm2488, %v2474, %v2586
        %v2588 = vsel %vm2476, %v2379, %v2363
        %v2589 = vsel %vm2478, %v2395, %v2588
        %v2590 = vsel %vm2480, %v2411, %v2589
        %v2591 = vsel %vm2482, %v2427, %v2590
        %v2592 = vsel %vm2484, %v2443, %v2591
        %v2593 = vsel %vm2486, %v2459, %v2592
        %v2594 = vsel %vm2488, %v2475, %v2593
        %v2595 = vpack.c.b16 %v2489, %v2489
        %v2596 = vpack.c.b16 %v2496, %v2496
        %v2597 = vpack.c.b16 %v2503, %v2503
        %v2598 = vpack.c.b16 %v2510, %v2510
        %v2599 = vpack.c.b16 %v2517, %v2517
        %v2600 = vpack.c.b16 %v2524, %v2524
        %v2601 = vpack.c.b16 %v2531, %v2531
        %v2602 = vpack.c.b16 %v2538, %v2538
        %v2603 = vpack.c.b16 %v2545, %v2545
        %v2604 = vpack.c.b16 %v2552, %v2552
        %v2605 = vpack.c.b16 %v2559, %v2559
        %v2606 = vpack.c.b16 %v2566, %v2566
        %v2607 = vpack.c.b16 %v2573, %v2573
        %v2608 = vpack.c.b16 %v2580, %v2580
        %v2609 = vpack.c.b16 %v2587, %v2587
        %v2610 = vpack.c.b16 %v2594, %v2594
        %v3139 = vunpack.c.l.b16 %v1669
        %v3140 = vunpack.c.h.b16 %v1669
        %v3141 = vunpack.c.l.b16 %v1670
        %v3142 = vunpack.c.h.b16 %v1670
        %v3143 = vunpack.c.l.b16 %v1671
        %v3144 = vunpack.c.h.b16 %v1671
        %v3145 = vunpack.c.l.b16 %v1672
        %v3146 = vunpack.c.h.b16 %v1672
        %v3147 = vunpack.c.l.b16 %v1673
        %v3148 = vunpack.c.h.b16 %v1673
        %v3149 = vunpack.c.l.b16 %v1674
        %v3150 = vunpack.c.h.b16 %v1674
        %v3151 = vunpack.c.l.b16 %v1675
        %v3152 = vunpack.c.h.b16 %v1675
        %v3153 = vunpack.c.l.b16 %v1676
        %v3154 = vunpack.c.h.b16 %v1676
        %v3155 = vunpack.c.l.b16 %v1677
        %v3156 = vunpack.c.h.b16 %v1677
        %v3157 = vunpack.c.l.b16 %v1678
        %v3158 = vunpack.c.h.b16 %v1678
        %v3159 = vunpack.c.l.b16 %v1679
        %v3160 = vunpack.c.h.b16 %v1679
        %v3161 = vunpack.c.l.b16 %v1680
        %v3162 = vunpack.c.h.b16 %v1680
        %v3163 = vunpack.c.l.b16 %v1681
        %v3164 = vunpack.c.h.b16 %v1681
        %v3165 = vunpack.c.l.b16 %v1682
        %v3166 = vunpack.c.h.b16 %v1682
        %v3167 = vunpack.c.l.b16 %v1683
        %v3168 = vunpack.c.h.b16 %v1683
        %v3169 = vunpack.c.l.b16 %v1684
        %v3170 = vunpack.c.h.b16 %v1684
        %v3171 = vunpack.c.l.b16 %v1685
        %v3172 = vunpack.c.h.b16 %v1685
        %v3173 = vunpack.c.l.b16 %v1686
        %v3174 = vunpack.c.h.b16 %v1686
        %v3175 = vunpack.c.l.b16 %v1687
        %v3176 = vunpack.c.h.b16 %v1687
        %v3177 = vunpack.c.l.b16 %v1688
        %v3178 = vunpack.c.h.b16 %v1688
        %v3179 = vunpack.c.l.b16 %v1689
        %v3180 = vunpack.c.h.b16 %v1689
        %v3181 = vunpack.c.l.b16 %v1690
        %v3182 = vunpack.c.h.b16 %v1690
        %v3183 = vunpack.c.l.b16 %v1691
        %v3184 = vunpack.c.h.b16 %v1691
        %v3185 = vunpack.c.l.b16 %v1692
        %v3186 = vunpack.c.h.b16 %v1692
        %v3187 = vunpack.c.l.b16 %v1693
        %v3188 = vunpack.c.h.b16 %v1693
        %v3189 = vunpack.c.l.b16 %v1694
        %v3190 = vunpack.c.h.b16 %v1694
        %v3191 = vunpack.c.l.b16 %v1695
        %v3192 = vunpack.c.h.b16 %v1695
        %v3193 = vunpack.c.l.b16 %v1696
        %v3194 = vunpack.c.h.b16 %v1696
        %v3195 = vunpack.c.l.b16 %v1697
        %v3196 = vunpack.c.h.b16 %v1697
        %v3197 = vunpack.c.l.b16 %v1698
        %v3198 = vunpack.c.h.b16 %v1698
        %v3199 = vunpack.c.l.b16 %v1699
        %v3200 = vunpack.c.h.b16 %v1699
        %v3201 = vunpack.c.l.b16 %v1700
        %v3202 = vunpack.c.h.b16 %v1700
        %v3203 = vunpack.c.l.b16 %v1701
        %v3204 = vunpack.c.h.b16 %v1701
        %v3205 = vunpack.c.l.b16 %v1702
        %v3206 = vunpack.c.h.b16 %v1702
        %v3207 = vunpack.c.l.b16 %v1703
        %v3208 = vunpack.c.h.b16 %v1703
        %v3209 = vunpack.c.l.b16 %v1704
        %v3210 = vunpack.c.h.b16 %v1704
        %v3211 = vunpack.c.l.b16 %v1705
        %v3212 = vunpack.c.h.b16 %v1705
        %v3213 = vunpack.c.l.b16 %v1706
        %v3214 = vunpack.c.h.b16 %v1706
        %v3215 = vunpack.c.l.b16 %v1707
        %v3216 = vunpack.c.h.b16 %v1707
        %v3217 = vunpack.c.l.b16 %v1708
        %v3218 = vunpack.c.h.b16 %v1708
        %v3219 = vunpack.c.l.b16 %v1709
        %v3220 = vunpack.c.h.b16 %v1709
        %v3221 = vunpack.c.l.b16 %v1710
        %v3222 = vunpack.c.h.b16 %v1710
        %v3223 = vunpack.c.l.b16 %v1711
        %v3224 = vunpack.c.h.b16 %v1711
        %v3225 = vunpack.c.l.b16 %v1712
        %v3226 = vunpack.c.h.b16 %v1712
        %v3227 = vunpack.c.l.b16 %v1713
        %v3228 = vunpack.c.h.b16 %v1713
        %v3229 = vunpack.c.l.b16 %v1714
        %v3230 = vunpack.c.h.b16 %v1714
        %v3231 = vunpack.c.l.b16 %v1715
        %v3232 = vunpack.c.h.b16 %v1715
        %v3233 = vunpack.c.l.b16 %v1716
        %v3234 = vunpack.c.h.b16 %v1716
        %v3235 = vunpack.c.l.b16 %v1717
        %v3236 = vunpack.c.h.b16 %v1717
        %v3237 = vunpack.c.l.b16 %v1718
        %v3238 = vunpack.c.h.b16 %v1718
        %v3239 = vunpack.c.l.b16 %v1719
        %v3240 = vunpack.c.h.b16 %v1719
        %v3241 = vunpack.c.l.b16 %v1720
        %v3242 = vunpack.c.h.b16 %v1720
        %v3243 = vunpack.c.l.b16 %v1721
        %v3244 = vunpack.c.h.b16 %v1721
        %v3245 = vunpack.c.l.b16 %v1722
        %v3246 = vunpack.c.h.b16 %v1722
        %v3247 = vunpack.c.l.b16 %v1723
        %v3248 = vunpack.c.h.b16 %v1723
        %v3249 = vunpack.c.l.b16 %v1724
        %v3250 = vunpack.c.h.b16 %v1724
        %v3251 = vunpack.c.l.b16 %v1725
        %v3252 = vunpack.c.h.b16 %v1725
        %v3253 = vunpack.c.l.b16 %v1726
        %v3254 = vunpack.c.h.b16 %v1726
        %v3255 = vunpack.c.l.b16 %v1727
        %v3256 = vunpack.c.h.b16 %v1727
        %v3257 = vunpack.c.l.b16 %v1728
        %v3258 = vunpack.c.h.b16 %v1728
        %v3259 = vunpack.c.l.b16 %v1729
        %v3260 = vunpack.c.h.b16 %v1729
        %v3261 = vunpack.c.l.b16 %v1730
        %v3262 = vunpack.c.h.b16 %v1730
        %v3263 = vunpack.c.l.b16 %v1731
        %v3264 = vunpack.c.h.b16 %v1731
        %v3265 = vunpack.c.l.b16 %v1732
        %v3266 = vunpack.c.h.b16 %v1732
        %v3267 = vunpack.c.l.b16 %v1733
        %v3268 = vunpack.c.h.b16 %v1733
        %v3269 = vunpack.c.l.b16 %v1734
        %v3270 = vunpack.c.h.b16 %v1734
        %v3271 = vunpack.c.l.b16 %v1735
        %v3272 = vunpack.c.h.b16 %v1735
        %v3273 = vunpack.c.l.b16 %v1736
        %v3274 = vunpack.c.h.b16 %v1736
        %v3275 = vunpack.c.l.b16 %v1737
        %v3276 = vunpack.c.h.b16 %v1737
        %v3277 = vunpack.c.l.b16 %v1738
        %v3278 = vunpack.c.h.b16 %v1738
        %v3279 = vunpack.c.l.b16 %v1739
        %v3280 = vunpack.c.h.b16 %v1739
        %v3281 = vunpack.c.l.b16 %v1740
        %v3282 = vunpack.c.h.b16 %v1740
        %v3283 = vunpack.c.l.b16 %v1741
        %v3284 = vunpack.c.h.b16 %v1741
        %v3285 = vunpack.c.l.b16 %v1742
        %v3286 = vunpack.c.h.b16 %v1742
        %v3287 = vunpack.c.l.b16 %v1743
        %v3288 = vunpack.c.h.b16 %v1743
        %v3289 = vunpack.c.l.b16 %v1744
        %v3290 = vunpack.c.h.b16 %v1744
        %v3291 = vunpack.c.l.b16 %v1745
        %v3292 = vunpack.c.h.b16 %v1745
        %v3293 = vunpack.c.l.b16 %v1746
        %v3294 = vunpack.c.h.b16 %v1746
        %v3295 = vunpack.c.l.b16 %v1747
        %v3296 = vunpack.c.h.b16 %v1747
        %v3297 = vunpack.c.l.b16 %v1748
        %v3298 = vunpack.c.h.b16 %v1748
        %v3299 = vunpack.c.l.b16 %v1749
        %v3300 = vunpack.c.h.b16 %v1749
        %v3301 = vunpack.c.l.b16 %v1750
        %v3302 = vunpack.c.h.b16 %v1750
        %v3303 = vunpack.c.l.b16 %v1751
        %v3304 = vunpack.c.h.b16 %v1751
        %v3305 = vunpack.c.l.b16 %v1752
        %v3306 = vunpack.c.h.b16 %v1752
        %v3307 = vunpack.c.l.b16 %v1753
        %v3308 = vunpack.c.h.b16 %v1753
        %v3309 = vunpack.c.l.b16 %v1754
        %v3310 = vunpack.c.h.b16 %v1754
        %v3311 = vunpack.c.l.b16 %v1755
        %v3312 = vunpack.c.h.b16 %v1755
        %v3313 = vunpack.c.l.b16 %v1756
        %v3314 = vunpack.c.h.b16 %v1756
        %v3315 = vunpack.c.l.b16 %v1757
        %v3316 = vunpack.c.h.b16 %v1757
        %v3317 = vunpack.c.l.b16 %v1758
        %v3318 = vunpack.c.h.b16 %v1758
        %v3319 = vunpack.c.l.b16 %v1759
        %v3320 = vunpack.c.h.b16 %v1759
        %v3321 = vunpack.c.l.b16 %v1760
        %v3322 = vunpack.c.h.b16 %v1760
        %v3323 = vunpack.c.l.b16 %v1761
        %v3324 = vunpack.c.h.b16 %v1761
        %v3325 = vunpack.c.l.b16 %v1762
        %v3326 = vunpack.c.h.b16 %v1762
        %v3327 = vunpack.c.l.b16 %v1763
        %v3328 = vunpack.c.h.b16 %v1763
        %v3329 = vunpack.c.l.b16 %v1764
        %v3330 = vunpack.c.h.b16 %v1764
        %v3331 = vunpack.c.l.b16 %v1765
        %v3332 = vunpack.c.h.b16 %v1765
        %v3333 = vunpack.c.l.b16 %v1766
        %v3334 = vunpack.c.h.b16 %v1766
        %v3335 = vunpack.c.l.b16 %v1767
        %v3336 = vunpack.c.h.b16 %v1767
        %v3337 = vunpack.c.l.b16 %v1768
        %v3338 = vunpack.c.h.b16 %v1768
        %v3339 = vunpack.c.l.b16 %v1769
        %v3340 = vunpack.c.h.b16 %v1769
        %v3341 = vunpack.c.l.b16 %v1770
        %v3342 = vunpack.c.h.b16 %v1770
        %v3343 = vunpack.c.l.b16 %v1771
        %v3344 = vunpack.c.h.b16 %v1771
        %v3345 = vunpack.c.l.b16 %v1772
        %v3346 = vunpack.c.h.b16 %v1772
        %v3347 = vunpack.c.l.b16 %v1773
        %v3348 = vunpack.c.h.b16 %v1773
        %v3349 = vunpack.c.l.b16 %v1774
        %v3350 = vunpack.c.h.b16 %v1774
        %v3351 = vunpack.c.l.b16 %v1775
        %v3352 = vunpack.c.h.b16 %v1775
        %v3353 = vunpack.c.l.b16 %v1776
        %v3354 = vunpack.c.h.b16 %v1776
        %v3355 = vunpack.c.l.b16 %v1777
        %v3356 = vunpack.c.h.b16 %v1777
        %v3357 = vunpack.c.l.b16 %v1778
        %v3358 = vunpack.c.h.b16 %v1778
        %v3359 = vunpack.c.l.b16 %v1779
        %v3360 = vunpack.c.h.b16 %v1779
        %v3361 = vunpack.c.l.b16 %v1780
        %v3362 = vunpack.c.h.b16 %v1780
        %v3363 = vunpack.c.l.b16 %v1781
        %v3364 = vunpack.c.h.b16 %v1781
        %v3365 = vunpack.c.l.b16 %v1782
        %v3366 = vunpack.c.h.b16 %v1782
        %v3367 = vunpack.c.l.b16 %v1783
        %v3368 = vunpack.c.h.b16 %v1783
        %v3369 = vunpack.c.l.b16 %v1784
        %v3370 = vunpack.c.h.b16 %v1784
        %v3371 = vunpack.c.l.b16 %v1785
        %v3372 = vunpack.c.h.b16 %v1785
        %v3373 = vunpack.c.l.b16 %v1786
        %v3374 = vunpack.c.h.b16 %v1786
        %v3375 = vunpack.c.l.b16 %v1787
        %v3376 = vunpack.c.h.b16 %v1787
        %v3377 = vunpack.c.l.b16 %v1788
        %v3378 = vunpack.c.h.b16 %v1788
        %v3379 = vunpack.c.l.b16 %v1789
        %v3380 = vunpack.c.h.b16 %v1789
        %v3381 = vunpack.c.l.b16 %v1790
        %v3382 = vunpack.c.h.b16 %v1790
        %v3383 = vunpack.c.l.b16 %v1791
        %v3384 = vunpack.c.h.b16 %v1791
        %v3385 = vunpack.c.l.b16 %v1792
        %v3386 = vunpack.c.h.b16 %v1792
        %v3387 = vunpack.c.l.b16 %v1793
        %v3388 = vunpack.c.h.b16 %v1793
        %v3389 = vunpack.c.l.b16 %v1794
        %v3390 = vunpack.c.h.b16 %v1794
        %v3391 = vunpack.c.l.b16 %v1795
        %v3392 = vunpack.c.h.b16 %v1795
        %v3393 = vunpack.c.l.b16 %v1796
        %v3394 = vunpack.c.h.b16 %v1796
        %v3395 = vunpack.c.l.b16 %v1797
        %v3396 = vunpack.c.h.b16 %v1797
        %v3397 = vunpack.c.l.b16 %v1798
        %v3398 = vunpack.c.h.b16 %v1798
        %v3399 = vunpack.c.l.b16 %v1799
        %v3400 = vunpack.c.h.b16 %v1799
        %v3401 = vunpack.c.l.b16 %v1800
        %v3402 = vunpack.c.h.b16 %v1800
        %v3403 = vunpack.c.l.b16 %v1801
        %v3404 = vunpack.c.h.b16 %v1801
        %v3405 = vunpack.c.l.b16 %v1802
        %v3406 = vunpack.c.h.b16 %v1802
        %v3407 = vunpack.c.l.b16 %v1803
        %v3408 = vunpack.c.h.b16 %v1803
        %v3409 = vunpack.c.l.b16 %v1804
        %v3410 = vunpack.c.h.b16 %v1804
        %v3411 = vunpack.c.l.b16 %v1805
        %v3412 = vunpack.c.h.b16 %v1805
        %v3413 = vunpack.c.l.b16 %v1806
        %v3414 = vunpack.c.h.b16 %v1806
        %v3415 = vunpack.c.l.b16 %v1807
        %v3416 = vunpack.c.h.b16 %v1807
        %v3417 = vunpack.c.l.b16 %v1808
        %v3418 = vunpack.c.h.b16 %v1808
        %v3419 = vunpack.c.l.b16 %v1809
        %v3420 = vunpack.c.h.b16 %v1809
        %v3421 = vunpack.c.l.b16 %v1810
        %v3422 = vunpack.c.h.b16 %v1810
        %v3423 = vunpack.c.l.b16 %v1811
        %v3424 = vunpack.c.h.b16 %v1811
        %v3425 = vunpack.c.l.b16 %v1812
        %v3426 = vunpack.c.h.b16 %v1812
        %v3427 = vunpack.c.l.b16 %v1813
        %v3428 = vunpack.c.h.b16 %v1813
        %v3429 = vunpack.c.l.b16 %v1814
        %v3430 = vunpack.c.h.b16 %v1814
        %v3431 = vunpack.c.l.b16 %v1815
        %v3432 = vunpack.c.h.b16 %v1815
        %v3433 = vunpack.c.l.b16 %v1816
        %v3434 = vunpack.c.h.b16 %v1816
        %v3435 = vunpack.c.l.b16 %v1817
        %v3436 = vunpack.c.h.b16 %v1817
        %v3437 = vunpack.c.l.b16 %v1818
        %v3438 = vunpack.c.h.b16 %v1818
        %v3439 = vunpack.c.l.b16 %v1819
        %v3440 = vunpack.c.h.b16 %v1819
        %v3441 = vunpack.c.l.b16 %v1820
        %v3442 = vunpack.c.h.b16 %v1820
        %v3443 = vunpack.c.l.b16 %v1821
        %v3444 = vunpack.c.h.b16 %v1821
        %v3445 = vunpack.c.l.b16 %v1822
        %v3446 = vunpack.c.h.b16 %v1822
        %v3447 = vunpack.c.l.b16 %v1823
        %v3448 = vunpack.c.h.b16 %v1823
        %v3449 = vunpack.c.l.b16 %v1824
        %v3450 = vunpack.c.h.b16 %v1824
        %v3451 = vunpack.c.l.b16 %v1825
        %v3452 = vunpack.c.h.b16 %v1825
        %v3453 = vunpack.c.l.b16 %v1826
        %v3454 = vunpack.c.h.b16 %v1826
        %v3455 = vunpack.c.l.b16 %v1827
        %v3456 = vunpack.c.h.b16 %v1827
        %v3457 = vunpack.c.l.b16 %v1828
        %v3458 = vunpack.c.h.b16 %v1828
        %v3459 = vunpack.c.l.b16 %v1829
        %v3460 = vunpack.c.h.b16 %v1829
        %v3461 = vunpack.c.l.b16 %v1830
        %v3462 = vunpack.c.h.b16 %v1830
        %v3463 = vunpack.c.l.b16 %v1831
        %v3464 = vunpack.c.h.b16 %v1831
        %v3465 = vunpack.c.l.b16 %v1832
        %v3466 = vunpack.c.h.b16 %v1832
        %v3467 = vunpack.c.l.b16 %v1833
        %v3468 = vunpack.c.h.b16 %v1833
        %v3469 = vunpack.c.l.b16 %v1834
        %v3470 = vunpack.c.h.b16 %v1834
        %v3471 = vunpack.c.l.b16 %v1835
        %v3472 = vunpack.c.h.b16 %v1835
        %v3473 = vunpack.c.l.b16 %v1836
        %v3474 = vunpack.c.h.b16 %v1836
        %v3475 = vunpack.c.l.b16 %v1837
        %v3476 = vunpack.c.h.b16 %v1837
        %v3477 = vunpack.c.l.b16 %v1838
        %v3478 = vunpack.c.h.b16 %v1838
        %v3479 = vunpack.c.l.b16 %v1839
        %v3480 = vunpack.c.h.b16 %v1839
        %v3481 = vunpack.c.l.b16 %v1840
        %v3482 = vunpack.c.h.b16 %v1840
        %v3483 = vunpack.c.l.b16 %v1841
        %v3484 = vunpack.c.h.b16 %v1841
        %v3485 = vunpack.c.l.b16 %v1842
        %v3486 = vunpack.c.h.b16 %v1842
        %v3487 = vunpack.c.l.b16 %v1843
        %v3488 = vunpack.c.h.b16 %v1843
        %v3489 = vunpack.c.l.b16 %v1844
        %v3490 = vunpack.c.h.b16 %v1844
        %v3491 = vunpack.c.l.b16 %v1845
        %v3492 = vunpack.c.h.b16 %v1845
        %v3493 = vunpack.c.l.b16 %v1846
        %v3494 = vunpack.c.h.b16 %v1846
        %v3495 = vunpack.c.l.b16 %v1847
        %v3496 = vunpack.c.h.b16 %v1847
        %v3497 = vunpack.c.l.b16 %v1848
        %v3498 = vunpack.c.h.b16 %v1848
        %v3499 = vunpack.c.l.b16 %v1849
        %v3500 = vunpack.c.h.b16 %v1849
        %v3501 = vunpack.c.l.b16 %v1850
        %v3502 = vunpack.c.h.b16 %v1850
        %v3503 = vunpack.c.l.b16 %v1851
        %v3504 = vunpack.c.h.b16 %v1851
        %v3505 = vunpack.c.l.b16 %v1852
        %v3506 = vunpack.c.h.b16 %v1852
        %v3507 = vunpack.c.l.b16 %v1853
        %v3508 = vunpack.c.h.b16 %v1853
        %v3509 = vunpack.c.l.b16 %v1854
        %v3510 = vunpack.c.h.b16 %v1854
        %v3511 = vunpack.c.l.b16 %v1855
        %v3512 = vunpack.c.h.b16 %v1855
        %v3513 = vunpack.c.l.b16 %v1856
        %v3514 = vunpack.c.h.b16 %v1856
        %v3515 = vunpack.c.l.b16 %v1857
        %v3516 = vunpack.c.h.b16 %v1857
        %v3517 = vunpack.c.l.b16 %v1858
        %v3518 = vunpack.c.h.b16 %v1858
        %v3519 = vunpack.c.l.b16 %v1859
        %v3520 = vunpack.c.h.b16 %v1859
        %v3521 = vunpack.c.l.b16 %v1860
        %v3522 = vunpack.c.h.b16 %v1860
        %v3523 = vunpack.c.l.b16 %v1861
        %v3524 = vunpack.c.h.b16 %v1861
        %v3525 = vunpack.c.l.b16 %v1862
        %v3526 = vunpack.c.h.b16 %v1862
        %v3527 = vunpack.c.l.b16 %v1863
        %v3528 = vunpack.c.h.b16 %v1863
        %v3529 = vunpack.c.l.b16 %v1864
        %v3530 = vunpack.c.h.b16 %v1864
        %v3531 = vunpack.c.l.b16 %v1865
        %v3532 = vunpack.c.h.b16 %v1865
        %v3533 = vunpack.c.l.b16 %v1866
        %v3534 = vunpack.c.h.b16 %v1866
        %v3535 = vunpack.c.l.b16 %v1867
        %v3536 = vunpack.c.h.b16 %v1867
        %v3537 = vunpack.c.l.b16 %v1868
        %v3538 = vunpack.c.h.b16 %v1868
        %v3539 = vunpack.c.l.b16 %v1869
        %v3540 = vunpack.c.h.b16 %v1869
        %v3541 = vunpack.c.l.b16 %v1870
        %v3542 = vunpack.c.h.b16 %v1870
        %v3543 = vunpack.c.l.b16 %v1871
        %v3544 = vunpack.c.h.b16 %v1871
        %v3545 = vunpack.c.l.b16 %v1872
        %v3546 = vunpack.c.h.b16 %v1872
        %v3547 = vunpack.c.l.b16 %v1873
        %v3548 = vunpack.c.h.b16 %v1873
        %v3549 = vunpack.c.l.b16 %v1874
        %v3550 = vunpack.c.h.b16 %v1874
        %v3551 = vunpack.c.l.b16 %v1875
        %v3552 = vunpack.c.h.b16 %v1875
        %v3553 = vunpack.c.l.b16 %v1876
        %v3554 = vunpack.c.h.b16 %v1876
        %v3555 = vunpack.c.l.b16 %v1877
        %v3556 = vunpack.c.h.b16 %v1877
        %v3557 = vunpack.c.l.b16 %v1878
        %v3558 = vunpack.c.h.b16 %v1878
        %v3559 = vunpack.c.l.b16 %v1879
        %v3560 = vunpack.c.h.b16 %v1879
        %v3561 = vunpack.c.l.b16 %v1880
        %v3562 = vunpack.c.h.b16 %v1880
        %v3563 = vunpack.c.l.b16 %v1881
        %v3564 = vunpack.c.h.b16 %v1881
        %v3565 = vunpack.c.l.b16 %v1882
        %v3566 = vunpack.c.h.b16 %v1882
        %v3567 = vunpack.c.l.b16 %v1883
        %v3568 = vunpack.c.h.b16 %v1883
        %v3569 = vunpack.c.l.b16 %v1884
        %v3570 = vunpack.c.h.b16 %v1884
        %v3571 = vunpack.c.l.b16 %v1885
        %v3572 = vunpack.c.h.b16 %v1885
        %v3573 = vunpack.c.l.b16 %v1886
        %v3574 = vunpack.c.h.b16 %v1886
        %v3575 = vunpack.c.l.b16 %v1887
        %v3576 = vunpack.c.h.b16 %v1887
        %v3577 = vunpack.c.l.b16 %v1888
        %v3578 = vunpack.c.h.b16 %v1888
        %v3579 = vunpack.c.l.b16 %v1889
        %v3580 = vunpack.c.h.b16 %v1889
        %v3581 = vunpack.c.l.b16 %v1890
        %v3582 = vunpack.c.h.b16 %v1890
        %v3583 = vunpack.c.l.b16 %v1891
        %v3584 = vunpack.c.h.b16 %v1891
        %v3585 = vunpack.c.l.b16 %v1892
        %v3586 = vunpack.c.h.b16 %v1892
        %v3587 = vunpack.c.l.b16 %v1893
        %v3588 = vunpack.c.h.b16 %v1893
        %v3589 = vunpack.c.l.b16 %v1894
        %v3590 = vunpack.c.h.b16 %v1894
        %v3591 = vunpack.c.l.b16 %v1895
        %v3592 = vunpack.c.h.b16 %v1895
        %v3593 = vunpack.c.l.b16 %v1896
        %v3594 = vunpack.c.h.b16 %v1896
        %v3595 = vunpack.c.l.b16 %v1897
        %v3596 = vunpack.c.h.b16 %v1897
        %v3597 = vunpack.c.l.b16 %v1898
        %v3598 = vunpack.c.h.b16 %v1898
        %v3599 = vunpack.c.l.b16 %v1899
        %v3600 = vunpack.c.h.b16 %v1899
        %v3601 = vunpack.c.l.b16 %v1900
        %v3602 = vunpack.c.h.b16 %v1900
        %v3603 = vunpack.c.l.b16 %v1901
        %v3604 = vunpack.c.h.b16 %v1901
        %v3605 = vunpack.c.l.b16 %v1902
        %v3606 = vunpack.c.h.b16 %v1902
        %v3607 = vunpack.c.l.b16 %v1903
        %v3608 = vunpack.c.h.b16 %v1903
        %v3609 = vunpack.c.l.b16 %v1904
        %v3610 = vunpack.c.h.b16 %v1904
        %v3611 = vunpack.c.l.b16 %v1905
        %v3612 = vunpack.c.h.b16 %v1905
        %v3613 = vunpack.c.l.b16 %v1906
        %v3614 = vunpack.c.h.b16 %v1906
        %v3615 = vunpack.c.l.b16 %v1907
        %v3616 = vunpack.c.h.b16 %v1907
        %v3617 = vunpack.c.l.b16 %v1908
        %v3618 = vunpack.c.h.b16 %v1908
        %v3619 = vunpack.c.l.b16 %v1909
        %v3620 = vunpack.c.h.b16 %v1909
        %v3621 = vunpack.c.l.b16 %v1910
        %v3622 = vunpack.c.h.b16 %v1910
        %v3623 = vunpack.c.l.b16 %v1911
        %v3624 = vunpack.c.h.b16 %v1911
        %v3625 = vunpack.c.l.b16 %v1912
        %v3626 = vunpack.c.h.b16 %v1912
        %v3627 = vunpack.c.l.b16 %v1913
        %v3628 = vunpack.c.h.b16 %v1913
        %v3629 = vunpack.c.l.b16 %v1914
        %v3630 = vunpack.c.h.b16 %v1914
        %v3631 = vunpack.c.l.b16 %v1915
        %v3632 = vunpack.c.h.b16 %v1915
        %v3633 = vunpack.c.l.b16 %v1916
        %v3634 = vunpack.c.h.b16 %v1916
        %v3635 = vunpack.c.l.b16 %v1917
        %v3636 = vunpack.c.h.b16 %v1917
        %v3637 = vunpack.c.l.b16 %v1918
        %v3638 = vunpack.c.h.b16 %v1918
        %v3639 = vunpack.c.l.b16 %v1919
        %v3640 = vunpack.c.h.b16 %v1919
        %v3641 = vunpack.c.l.b16 %v1920
        %v3642 = vunpack.c.h.b16 %v1920
        %v3643 = vunpack.c.l.b16 %v1921
        %v3644 = vunpack.c.h.b16 %v1921
        %v3645 = vunpack.c.l.b16 %v1922
        %v3646 = vunpack.c.h.b16 %v1922
        %v3647 = vunpack.c.l.b16 %v1923
        %v3648 = vunpack.c.h.b16 %v1923
        %v3649 = vunpack.c.l.b16 %v1924
        %v3650 = vunpack.c.h.b16 %v1924
        %v3651 = vunpack.c.l.b16 %v1925
        %v3652 = vunpack.c.h.b16 %v1925
        %v3653 = vunpack.c.l.b16 %v1926
        %v3654 = vunpack.c.h.b16 %v1926
        %v3655 = vunpack.c.l.b16 %v1927
        %v3656 = vunpack.c.h.b16 %v1927
        %v3657 = vunpack.c.l.b16 %v1928
        %v3658 = vunpack.c.h.b16 %v1928
        %v3659 = vunpack.c.l.b16 %v1929
        %v3660 = vunpack.c.h.b16 %v1929
        %v3661 = vunpack.c.l.b16 %v1930
        %v3662 = vunpack.c.h.b16 %v1930
        %v3663 = vunpack.c.l.b16 %v1931
        %v3664 = vunpack.c.h.b16 %v1931
        %v3665 = vunpack.c.l.b16 %v1932
        %v3666 = vunpack.c.h.b16 %v1932
        %v3667 = vunpack.c.l.b16 %v1933
        %v3668 = vunpack.c.h.b16 %v1933
        %v3669 = vunpack.c.l.b16 %v1934
        %v3670 = vunpack.c.h.b16 %v1934
        %v3671 = vunpack.c.l.b16 %v1935
        %v3672 = vunpack.c.h.b16 %v1935
        %v3673 = vunpack.c.l.b16 %v1936
        %v3674 = vunpack.c.h.b16 %v1936
        %v3675 = vunpack.c.l.b16 %v1937
        %v3676 = vunpack.c.h.b16 %v1937
        %v3677 = vunpack.c.l.b16 %v1938
        %v3678 = vunpack.c.h.b16 %v1938
        %v3679 = vunpack.c.l.b16 %v1939
        %v3680 = vunpack.c.h.b16 %v1939
        %v3681 = vunpack.c.l.b16 %v1940
        %v3682 = vunpack.c.h.b16 %v1940
        %v3683 = vunpack.c.l.b16 %v1941
        %v3684 = vunpack.c.h.b16 %v1941
        %v3685 = vunpack.c.l.b16 %v1942
        %v3686 = vunpack.c.h.b16 %v1942
        %v3687 = vunpack.c.l.b16 %v1943
        %v3688 = vunpack.c.h.b16 %v1943
        %v3689 = vunpack.c.l.b16 %v1944
        %v3690 = vunpack.c.h.b16 %v1944
        %v3691 = vunpack.c.l.b16 %v1945
        %v3692 = vunpack.c.h.b16 %v1945
        %v3693 = vunpack.c.l.b16 %v1946
        %v3694 = vunpack.c.h.b16 %v1946
        %v3695 = vunpack.c.l.b16 %v1947
        %v3696 = vunpack.c.h.b16 %v1947
        %v3697 = vunpack.c.l.b16 %v1948
        %v3698 = vunpack.c.h.b16 %v1948
        %v3699 = vunpack.c.l.b16 %v1949
        %v3700 = vunpack.c.h.b16 %v1949
        %v3701 = vunpack.c.l.b16 %v1950
        %v3702 = vunpack.c.h.b16 %v1950
        %v3703 = vunpack.c.l.b16 %v1951
        %v3704 = vunpack.c.h.b16 %v1951
        %v3705 = vunpack.c.l.b16 %v1952
        %v3706 = vunpack.c.h.b16 %v1952
        %v3707 = vunpack.c.l.b16 %v1953
        %v3708 = vunpack.c.h.b16 %v1953
        %v3709 = vunpack.c.l.b16 %v1954
        %v3710 = vunpack.c.h.b16 %v1954
        %v3711 = vunpack.c.l.b16 %v1955
        %v3712 = vunpack.c.h.b16 %v1955
        %v3713 = vunpack.c.l.b16 %v1956
        %v3714 = vunpack.c.h.b16 %v1956
        %v3715 = vunpack.c.l.b16 %v1957
        %v3716 = vunpack.c.h.b16 %v1957
        %v3717 = vunpack.c.l.b16 %v1958
        %v3718 = vunpack.c.h.b16 %v1958
        %v3719 = vunpack.c.l.b16 %v1959
        %v3720 = vunpack.c.h.b16 %v1959
        %v3721 = vunpack.c.l.b16 %v1960
        %v3722 = vunpack.c.h.b16 %v1960
        %v3723 = vunpack.c.l.b16 %v1961
        %v3724 = vunpack.c.h.b16 %v1961
        %v3725 = vunpack.c.l.b16 %v1962
        %v3726 = vunpack.c.h.b16 %v1962
        %v3727 = vunpack.c.l.b16 %v1963
        %v3728 = vunpack.c.h.b16 %v1963
        %v3729 = vunpack.c.l.b16 %v1964
        %v3730 = vunpack.c.h.b16 %v1964
        %v3731 = vunpack.c.l.b16 %v1965
        %v3732 = vunpack.c.h.b16 %v1965
        %v3733 = vunpack.c.l.b16 %v1966
        %v3734 = vunpack.c.h.b16 %v1966
        %v3735 = vunpack.c.l.b16 %v1967
        %v3736 = vunpack.c.h.b16 %v1967
        %v3737 = vunpack.c.l.b16 %v1968
        %v3738 = vunpack.c.h.b16 %v1968
        %v3739 = vunpack.c.l.b16 %v1969
        %v3740 = vunpack.c.h.b16 %v1969
        %v3741 = vunpack.c.l.b16 %v1970
        %v3742 = vunpack.c.h.b16 %v1970
        %v3743 = vunpack.c.l.b16 %v1971
        %v3744 = vunpack.c.h.b16 %v1971
        %v3745 = vunpack.c.l.b16 %v1972
        %v3746 = vunpack.c.h.b16 %v1972
        %v3747 = vunpack.c.l.b16 %v1973
        %v3748 = vunpack.c.h.b16 %v1973
        %v3749 = vunpack.c.l.b16 %v1974
        %v3750 = vunpack.c.h.b16 %v1974
        %v3751 = vunpack.c.l.b16 %v1975
        %v3752 = vunpack.c.h.b16 %v1975
        %v3753 = vunpack.c.l.b16 %v1976
        %v3754 = vunpack.c.h.b16 %v1976
        %v3755 = vunpack.c.l.b16 %v1977
        %v3756 = vunpack.c.h.b16 %v1977
        %v3757 = vunpack.c.l.b16 %v1978
        %v3758 = vunpack.c.h.b16 %v1978
        %v3759 = vunpack.c.l.b16 %v1979
        %v3760 = vunpack.c.h.b16 %v1979
        %v3761 = vunpack.c.l.b16 %v1980
        %v3762 = vunpack.c.h.b16 %v1980
        %v3763 = vunpack.c.l.b16 %v1981
        %v3764 = vunpack.c.h.b16 %v1981
        %v3765 = vunpack.c.l.b16 %v1982
        %v3766 = vunpack.c.h.b16 %v1982
        %v3767 = vunpack.c.l.b16 %v1983
        %v3768 = vunpack.c.h.b16 %v1983
        %v3769 = vunpack.c.l.b16 %v1984
        %v3770 = vunpack.c.h.b16 %v1984
        %v3771 = vunpack.c.l.b16 %v1985
        %v3772 = vunpack.c.h.b16 %v1985
        %v3773 = vunpack.c.l.b16 %v1986
        %v3774 = vunpack.c.h.b16 %v1986
        %v3775 = vunpack.c.l.b16 %v1987
        %v3776 = vunpack.c.h.b16 %v1987
        %v3777 = vunpack.c.l.b16 %v1988
        %v3778 = vunpack.c.h.b16 %v1988
        %v3779 = vunpack.c.l.b16 %v1989
        %v3780 = vunpack.c.h.b16 %v1989
        %v3781 = vunpack.c.l.b16 %v1990
        %v3782 = vunpack.c.h.b16 %v1990
        %v3783 = vunpack.c.l.b16 %v1991
        %v3784 = vunpack.c.h.b16 %v1991
        %v3785 = vunpack.c.l.b16 %v1992
        %v3786 = vunpack.c.h.b16 %v1992
        %v3787 = vunpack.c.l.b16 %v1993
        %v3788 = vunpack.c.h.b16 %v1993
        %v3789 = vunpack.c.l.b16 %v1994
        %v3790 = vunpack.c.h.b16 %v1994
        %v3791 = vunpack.c.l.b16 %v1995
        %v3792 = vunpack.c.h.b16 %v1995
        %v3793 = vunpack.c.l.b16 %v1996
        %v3794 = vunpack.c.h.b16 %v1996
        %v3795 = vunpack.c.l.b16 %v1997
        %v3796 = vunpack.c.h.b16 %v1997
        %v3797 = vunpack.c.l.b16 %v1998
        %v3798 = vunpack.c.h.b16 %v1998
        %v3799 = vunpack.c.l.b16 %v1999
        %v3800 = vunpack.c.h.b16 %v1999
        %v3801 = vunpack.c.l.b16 %v2000
        %v3802 = vunpack.c.h.b16 %v2000
        %v3803 = vunpack.c.l.b16 %v2001
        %v3804 = vunpack.c.h.b16 %v2001
        %v3805 = vunpack.c.l.b16 %v2002
        %v3806 = vunpack.c.h.b16 %v2002
        %v3807 = vunpack.c.l.b16 %v2003
        %v3808 = vunpack.c.h.b16 %v2003
        %v3809 = vunpack.c.l.b16 %v2004
        %v3810 = vunpack.c.h.b16 %v2004
        %v3811 = vunpack.c.l.b16 %v2005
        %v3812 = vunpack.c.h.b16 %v2005
        %v3813 = vunpack.c.l.b16 %v2006
        %v3814 = vunpack.c.h.b16 %v2006
        %v3815 = vunpack.c.l.b16 %v2007
        %v3816 = vunpack.c.h.b16 %v2007
        %v3817 = vunpack.c.l.b16 %v2008
        %v3818 = vunpack.c.h.b16 %v2008
        %v3819 = vunpack.c.l.b16 %v2009
        %v3820 = vunpack.c.h.b16 %v2009
        %v3821 = vunpack.c.l.b16 %v2010
        %v3822 = vunpack.c.h.b16 %v2010
        %v3823 = vunpack.c.l.b16 %v2011
        %v3824 = vunpack.c.h.b16 %v2011
        %v3825 = vunpack.c.l.b16 %v2012
        %v3826 = vunpack.c.h.b16 %v2012
        %v3827 = vunpack.c.l.b16 %v2013
        %v3828 = vunpack.c.h.b16 %v2013
        %v3829 = vunpack.c.l.b16 %v2014
        %v3830 = vunpack.c.h.b16 %v2014
        %v3831 = vunpack.c.l.b16 %v2015
        %v3832 = vunpack.c.h.b16 %v2015
        %v3833 = vunpack.c.l.b16 %v2016
        %v3834 = vunpack.c.h.b16 %v2016
        %v3835 = vunpack.c.l.b16 %v2017
        %v3836 = vunpack.c.h.b16 %v2017
        %v3837 = vunpack.c.l.b16 %v2018
        %v3838 = vunpack.c.h.b16 %v2018
        %v3839 = vunpack.c.l.b16 %v2019
        %v3840 = vunpack.c.h.b16 %v2019
        %v3841 = vunpack.c.l.b16 %v2020
        %v3842 = vunpack.c.h.b16 %v2020
        %v3843 = vunpack.c.l.b16 %v2021
        %v3844 = vunpack.c.h.b16 %v2021
        %v3845 = vunpack.c.l.b16 %v2022
        %v3846 = vunpack.c.h.b16 %v2022
        %v3847 = vunpack.c.l.b16 %v2023
        %v3848 = vunpack.c.h.b16 %v2023
        %v3849 = vunpack.c.l.b16 %v2024
        %v3850 = vunpack.c.h.b16 %v2024
        %v3851 = vunpack.c.l.b16 %v2025
        %v3852 = vunpack.c.h.b16 %v2025
        %v3853 = vunpack.c.l.b16 %v2026
        %v3854 = vunpack.c.h.b16 %v2026
        %v3855 = vunpack.c.l.b16 %v2027
        %v3856 = vunpack.c.h.b16 %v2027
        %v3857 = vunpack.c.l.b16 %v2028
        %v3858 = vunpack.c.h.b16 %v2028
        %v3859 = vunpack.c.l.b16 %v2029
        %v3860 = vunpack.c.h.b16 %v2029
        %v3861 = vunpack.c.l.b16 %v2030
        %v3862 = vunpack.c.h.b16 %v2030
        %v3863 = vunpack.c.l.b16 %v2031
        %v3864 = vunpack.c.h.b16 %v2031
        %v3865 = vunpack.c.l.b16 %v2032
        %v3866 = vunpack.c.h.b16 %v2032
        %v3867 = vunpack.c.l.b16 %v2033
        %v3868 = vunpack.c.h.b16 %v2033
        %v3869 = vunpack.c.l.b16 %v2034
        %v3870 = vunpack.c.h.b16 %v2034
        %v3871 = vunpack.c.l.b16 %v2035
        %v3872 = vunpack.c.h.b16 %v2035
        %v3873 = vunpack.c.l.b16 %v2036
        %v3874 = vunpack.c.h.b16 %v2036
        %v3875 = vunpack.c.l.b16 %v2037
        %v3876 = vunpack.c.h.b16 %v2037
        %v3877 = vunpack.c.l.b16 %v2038
        %v3878 = vunpack.c.h.b16 %v2038
        %v3879 = vunpack.c.l.b16 %v2039
        %v3880 = vunpack.c.h.b16 %v2039
        %v3881 = vunpack.c.l.b16 %v2040
        %v3882 = vunpack.c.h.b16 %v2040
        %v3883 = vunpack.c.l.b16 %v2041
        %v3884 = vunpack.c.h.b16 %v2041
        %v3885 = vunpack.c.l.b16 %v2042
        %v3886 = vunpack.c.h.b16 %v2042
        %v3887 = vunpack.c.l.b16 %v2043
        %v3888 = vunpack.c.h.b16 %v2043
        %v3889 = vunpack.c.l.b16 %v2044
        %v3890 = vunpack.c.h.b16 %v2044
        %v3891 = vunpack.c.l.b16 %v2045
        %v3892 = vunpack.c.h.b16 %v2045
        %v3893 = vunpack.c.l.b16 %v2046
        %v3894 = vunpack.c.h.b16 %v2046
        %v3895 = vunpack.c.l.b16 %v2047
        %v3896 = vunpack.c.h.b16 %v2047
        %v3897 = vunpack.c.l.b16 %v2048
        %v3898 = vunpack.c.h.b16 %v2048
        %v3899 = vunpack.c.l.b16 %v2049
        %v3900 = vunpack.c.h.b16 %v2049
        %v3901 = vunpack.c.l.b16 %v2050
        %v3902 = vunpack.c.h.b16 %v2050
        %v3903 = vunpack.c.l.b16 %v2051
        %v3904 = vunpack.c.h.b16 %v2051
        %v3905 = vunpack.c.l.b16 %v2052
        %v3906 = vunpack.c.h.b16 %v2052
        %v3907 = vunpack.c.l.b16 %v2053
        %v3908 = vunpack.c.h.b16 %v2053
        %v3909 = vunpack.c.l.b16 %v2054
        %v3910 = vunpack.c.h.b16 %v2054
        %v3911 = vunpack.c.l.b16 %v2055
        %v3912 = vunpack.c.h.b16 %v2055
        %v3913 = vunpack.c.l.b16 %v2056
        %v3914 = vunpack.c.h.b16 %v2056
        %v3915 = vunpack.c.l.b16 %v2057
        %v3916 = vunpack.c.h.b16 %v2057
        %v3917 = vunpack.c.l.b16 %v2058
        %v3918 = vunpack.c.h.b16 %v2058
        %v3919 = vunpack.c.l.b16 %v2059
        %v3920 = vunpack.c.h.b16 %v2059
        %v3921 = vunpack.c.l.b16 %v2060
        %v3922 = vunpack.c.h.b16 %v2060
        %v3923 = vunpack.c.l.b16 %v2061
        %v3924 = vunpack.c.h.b16 %v2061
        %v3925 = vunpack.c.l.b16 %v2062
        %v3926 = vunpack.c.h.b16 %v2062
        %v3927 = vunpack.c.l.b16 %v2063
        %v3928 = vunpack.c.h.b16 %v2063
        %v3929 = vunpack.c.l.b16 %v2064
        %v3930 = vunpack.c.h.b16 %v2064
        %v3931 = vunpack.c.l.b16 %v2065
        %v3932 = vunpack.c.h.b16 %v2065
        %v3933 = vunpack.c.l.b16 %v2066
        %v3934 = vunpack.c.h.b16 %v2066
        %v3935 = vunpack.c.l.b16 %v2067
        %v3936 = vunpack.c.h.b16 %v2067
        %v3937 = vunpack.c.l.b16 %v2068
        %v3938 = vunpack.c.h.b16 %v2068
        %v3939 = vunpack.c.l.b16 %v2069
        %v3940 = vunpack.c.h.b16 %v2069
        %v3941 = vunpack.c.l.b16 %v2070
        %v3942 = vunpack.c.h.b16 %v2070
        %v3943 = vunpack.c.l.b16 %v2071
        %v3944 = vunpack.c.h.b16 %v2071
        %v3945 = vunpack.c.l.b16 %v2072
        %v3946 = vunpack.c.h.b16 %v2072
        %v3947 = vunpack.c.l.b16 %v2073
        %v3948 = vunpack.c.h.b16 %v2073
        %v3949 = vunpack.c.l.b16 %v2074
        %v3950 = vunpack.c.h.b16 %v2074
        %v3951 = vunpack.c.l.b16 %v2075
        %v3952 = vunpack.c.h.b16 %v2075
        %v3953 = vunpack.c.l.b16 %v2076
        %v3954 = vunpack.c.h.b16 %v2076
        %v3955 = vunpack.c.l.b16 %v2077
        %v3956 = vunpack.c.h.b16 %v2077
        %v3957 = vunpack.c.l.b16 %v2078
        %v3958 = vunpack.c.h.b16 %v2078
        %v3959 = vunpack.c.l.b16 %v2079
        %v3960 = vunpack.c.h.b16 %v2079
        %v3961 = vunpack.c.l.b16 %v2080
        %v3962 = vunpack.c.h.b16 %v2080
        %v3963 = vunpack.c.l.b16 %v2081
        %v3964 = vunpack.c.h.b16 %v2081
        %v3965 = vunpack.c.l.b16 %v2082
        %v3966 = vunpack.c.h.b16 %v2082
        %v3967 = vunpack.c.l.b16 %v2083
        %v3968 = vunpack.c.h.b16 %v2083
        %v3969 = vunpack.c.l.b16 %v2084
        %v3970 = vunpack.c.h.b16 %v2084
        %v3971 = vunpack.c.l.b16 %v2085
        %v3972 = vunpack.c.h.b16 %v2085
        %v3973 = vunpack.c.l.b16 %v2086
        %v3974 = vunpack.c.h.b16 %v2086
        %v3975 = vunpack.c.l.b16 %v2087
        %v3976 = vunpack.c.h.b16 %v2087
        %v3977 = vunpack.c.l.b16 %v2088
        %v3978 = vunpack.c.h.b16 %v2088
        %v3979 = vunpack.c.l.b16 %v2089
        %v3980 = vunpack.c.h.b16 %v2089
        %v3981 = vunpack.c.l.b16 %v2090
        %v3982 = vunpack.c.h.b16 %v2090
        %v3983 = vunpack.c.l.b16 %v2091
        %v3984 = vunpack.c.h.b16 %v2091
        %v3985 = vunpack.c.l.b16 %v2092
        %v3986 = vunpack.c.h.b16 %v2092
        %v3987 = vunpack.c.l.b16 %v2093
        %v3988 = vunpack.c.h.b16 %v2093
        %v3989 = vunpack.c.l.b16 %v2094
        %v3990 = vunpack.c.h.b16 %v2094
        %v3991 = vunpack.c.l.b16 %v2095
        %v3992 = vunpack.c.h.b16 %v2095
        %v3993 = vunpack.c.l.b16 %v2096
        %v3994 = vunpack.c.h.b16 %v2096
        %v3995 = vunpack.c.l.b16 %v2097
        %v3996 = vunpack.c.h.b16 %v2097
        %v3997 = vunpack.c.l.b16 %v2098
        %v3998 = vunpack.c.h.b16 %v2098
        %v3999 = vunpack.c.l.b16 %v2099
        %v4000 = vunpack.c.h.b16 %v2099
        %v4001 = vunpack.c.l.b16 %v2100
        %v4002 = vunpack.c.h.b16 %v2100
        %v4003 = vunpack.c.l.b16 %v2101
        %v4004 = vunpack.c.h.b16 %v2101
        %v4005 = vunpack.c.l.b16 %v2102
        %v4006 = vunpack.c.h.b16 %v2102
        %v4007 = vunpack.c.l.b16 %v2103
        %v4008 = vunpack.c.h.b16 %v2103
        %v4009 = vunpack.c.l.b16 %v2104
        %v4010 = vunpack.c.h.b16 %v2104
        %v4011 = vunpack.c.l.b16 %v2105
        %v4012 = vunpack.c.h.b16 %v2105
        %v4013 = vunpack.c.l.b16 %v2106
        %v4014 = vunpack.c.h.b16 %v2106
        %v4015 = vunpack.c.l.b16 %v2107
        %v4016 = vunpack.c.h.b16 %v2107
        %v4017 = vunpack.c.l.b16 %v2108
        %v4018 = vunpack.c.h.b16 %v2108
        %v4019 = vunpack.c.l.b16 %v2109
        %v4020 = vunpack.c.h.b16 %v2109
        %v4021 = vunpack.c.l.b16 %v2110
        %v4022 = vunpack.c.h.b16 %v2110
        %v4023 = vunpack.c.l.b16 %v2111
        %v4024 = vunpack.c.h.b16 %v2111
        %v4025 = vunpack.c.l.b16 %v2112
        %v4026 = vunpack.c.h.b16 %v2112
        %v4027 = vunpack.c.l.b16 %v2113
        %v4028 = vunpack.c.h.b16 %v2113
        %v4029 = vunpack.c.l.b16 %v2114
        %v4030 = vunpack.c.h.b16 %v2114
        %v4031 = vunpack.c.l.b16 %v2115
        %v4032 = vunpack.c.h.b16 %v2115
        %v4033 = vunpack.c.l.b16 %v2116
        %v4034 = vunpack.c.h.b16 %v2116
        %v4035 = vunpack.c.l.b16 %v2117
        %v4036 = vunpack.c.h.b16 %v2117
        %v4037 = vunpack.c.l.b16 %v2118
        %v4038 = vunpack.c.h.b16 %v2118
        %v4039 = vunpack.c.l.b16 %v2119
        %v4040 = vunpack.c.h.b16 %v2119
        %v4041 = vunpack.c.l.b16 %v2120
        %v4042 = vunpack.c.h.b16 %v2120
        %v4043 = vunpack.c.l.b16 %v2121
        %v4044 = vunpack.c.h.b16 %v2121
        %v4045 = vunpack.c.l.b16 %v2122
        %v4046 = vunpack.c.h.b16 %v2122
        %v4047 = vunpack.c.l.b16 %v2123
        %v4048 = vunpack.c.h.b16 %v2123
        %v4049 = vunpack.c.l.b16 %v2124
        %v4050 = vunpack.c.h.b16 %v2124
        %v4051 = vunpack.c.l.b16 %v2125
        %v4052 = vunpack.c.h.b16 %v2125
        %v4053 = vunpack.c.l.b16 %v2126
        %v4054 = vunpack.c.h.b16 %v2126
        %v4055 = vunpack.c.l.b16 %v2127
        %v4056 = vunpack.c.h.b16 %v2127
        %v4057 = vunpack.c.l.b16 %v2128
        %v4058 = vunpack.c.h.b16 %v2128
        %v4059 = vunpack.c.l.b16 %v2129
        %v4060 = vunpack.c.h.b16 %v2129
        %v4061 = vunpack.c.l.b16 %v2130
        %v4062 = vunpack.c.h.b16 %v2130
        %v4063 = vunpack.c.l.b16 %v2131
        %v4064 = vunpack.c.h.b16 %v2131
        %v4065 = vunpack.c.l.b16 %v2132
        %v4066 = vunpack.c.h.b16 %v2132
        %v4067 = vunpack.c.l.b16 %v2133
        %v4068 = vunpack.c.h.b16 %v2133
        %v4069 = vunpack.c.l.b16 %v2134
        %v4070 = vunpack.c.h.b16 %v2134
        %v4071 = vunpack.c.l.b16 %v2135
        %v4072 = vunpack.c.h.b16 %v2135
        %v4073 = vunpack.c.l.b16 %v2136
        %v4074 = vunpack.c.h.b16 %v2136
        %v4075 = vunpack.c.l.b16 %v2137
        %v4076 = vunpack.c.h.b16 %v2137
        %v4077 = vunpack.c.l.b16 %v2138
        %v4078 = vunpack.c.h.b16 %v2138
        %v4079 = vunpack.c.l.b16 %v2139
        %v4080 = vunpack.c.h.b16 %v2139
        %v4081 = vunpack.c.l.b16 %v2140
        %v4082 = vunpack.c.h.b16 %v2140
        %v4083 = vunpack.c.l.b16 %v2141
        %v4084 = vunpack.c.h.b16 %v2141
        %v4085 = vunpack.c.l.b16 %v2142
        %v4086 = vunpack.c.h.b16 %v2142
        %v4087 = vunpack.c.l.b16 %v2143
        %v4088 = vunpack.c.h.b16 %v2143
        %v4089 = vunpack.c.l.b16 %v2144
        %v4090 = vunpack.c.h.b16 %v2144
        %v4091 = vunpack.c.l.b16 %v2145
        %v4092 = vunpack.c.h.b16 %v2145
        %v4093 = vunpack.c.l.b16 %v2146
        %v4094 = vunpack.c.h.b16 %v2146
        %v4095 = vunpack.c.l.b16 %v2147
        %v4096 = vunpack.c.h.b16 %v2147
        %v4097 = vunpack.c.l.b16 %v2148
        %v4098 = vunpack.c.h.b16 %v2148
        %v4099 = vunpack.c.l.b16 %v2149
        %v4100 = vunpack.c.h.b16 %v2149
        %v4101 = vunpack.c.l.b16 %v2150
        %v4102 = vunpack.c.h.b16 %v2150
        %v4103 = vunpack.c.l.b16 %v2151
        %v4104 = vunpack.c.h.b16 %v2151
        %v4105 = vunpack.c.l.b16 %v2152
        %v4106 = vunpack.c.h.b16 %v2152
        %v4107 = vunpack.c.l.b16 %v2153
        %v4108 = vunpack.c.h.b16 %v2153
        %v4109 = vunpack.c.l.b16 %v2154
        %v4110 = vunpack.c.h.b16 %v2154
        %v4111 = vunpack.c.l.b16 %v2155
        %v4112 = vunpack.c.h.b16 %v2155
        %v4113 = vunpack.c.l.b16 %v2156
        %v4114 = vunpack.c.h.b16 %v2156
        %v4115 = vunpack.c.l.b16 %v2157
        %v4116 = vunpack.c.h.b16 %v2157
        %v4117 = vunpack.c.l.b16 %v2158
        %v4118 = vunpack.c.h.b16 %v2158
        %v4119 = vunpack.c.l.b16 %v2159
        %v4120 = vunpack.c.h.b16 %v2159
        %v4121 = vunpack.c.l.b16 %v2160
        %v4122 = vunpack.c.h.b16 %v2160
        %v4123 = vunpack.c.l.b16 %v2161
        %v4124 = vunpack.c.h.b16 %v2161
        %v4125 = vunpack.c.l.b16 %v2162
        %v4126 = vunpack.c.h.b16 %v2162
        %v4127 = vunpack.c.l.b16 %v2163
        %v4128 = vunpack.c.h.b16 %v2163
        %v4129 = vunpack.c.l.b16 %v2164
        %v4130 = vunpack.c.h.b16 %v2164
        %v4131 = vunpack.c.l.b16 %v2165
        %v4132 = vunpack.c.h.b16 %v2165
        %v4133 = vunpack.c.l.b16 %v2166
        %v4134 = vunpack.c.h.b16 %v2166
        %v4135 = vunpack.c.l.b16 %v2167
        %v4136 = vunpack.c.h.b16 %v2167
        %v4137 = vunpack.c.l.b16 %v2168
        %v4138 = vunpack.c.h.b16 %v2168
        %v4139 = vunpack.c.l.b16 %v2169
        %v4140 = vunpack.c.h.b16 %v2169
        %v4141 = vunpack.c.l.b16 %v2170
        %v4142 = vunpack.c.h.b16 %v2170
        %v4143 = vunpack.c.l.b16 %v2171
        %v4144 = vunpack.c.h.b16 %v2171
        %v4145 = vunpack.c.l.b16 %v2172
        %v4146 = vunpack.c.h.b16 %v2172
        %v4147 = vunpack.c.l.b16 %v2173
        %v4148 = vunpack.c.h.b16 %v2173
        %v4149 = vunpack.c.l.b16 %v2174
        %v4150 = vunpack.c.h.b16 %v2174
        %v4151 = vunpack.c.l.b16 %v2175
        %v4152 = vunpack.c.h.b16 %v2175
        %v4153 = vunpack.c.l.b16 %v2176
        %v4154 = vunpack.c.h.b16 %v2176
        %v4155 = vunpack.c.l.b16 %v2177
        %v4156 = vunpack.c.h.b16 %v2177
        %v4157 = vunpack.c.l.b16 %v2178
        %v4158 = vunpack.c.h.b16 %v2178
        %v4159 = vunpack.c.l.b16 %v2179
        %v4160 = vunpack.c.h.b16 %v2179
        %v4161 = vunpack.c.l.b16 %v2180
        %v4162 = vunpack.c.h.b16 %v2180
        %v4163 = vpack.c.b16 %v3143, %v3139
        %v4164 = vpack.c.b16 %v3144, %v3140
        %v4165 = vpack.c.b16 %v3145, %v3141
        %v4166 = vpack.c.b16 %v3146, %v3142
        %v4167 = vpack.c.b16 %v3151, %v3147
        %v4168 = vpack.c.b16 %v3152, %v3148
        %v4169 = vpack.c.b16 %v3153, %v3149
        %v4170 = vpack.c.b16 %v3154, %v3150
        %v4171 = vpack.c.b16 %v3159, %v3155
        %v4172 = vpack.c.b16 %v3160, %v3156
        %v4173 = vpack.c.b16 %v3161, %v3157
        %v4174 = vpack.c.b16 %v3162, %v3158
        %v4175 = vpack.c.b16 %v3167, %v3163
        %v4176 = vpack.c.b16 %v3168, %v3164
        %v4177 = vpack.c.b16 %v3169, %v3165
        %v4178 = vpack.c.b16 %v3170, %v3166
        %v4179 = vpack.c.b16 %v3175, %v3171
        %v4180 = vpack.c.b16 %v3176, %v3172
        %v4181 = vpack.c.b16 %v3177, %v3173
        %v4182 = vpack.c.b16 %v3178, %v3174
        %v4183 = vpack.c.b16 %v3183, %v3179
        %v4184 = vpack.c.b16 %v3184, %v3180
        %v4185 = vpack.c.b16 %v3185, %v3181
        %v4186 = vpack.c.b16 %v3186, %v3182
        %v4187 = vpack.c.b16 %v3191, %v3187
        %v4188 = vpack.c.b16 %v3192, %v3188
        %v4189 = vpack.c.b16 %v3193, %v3189
        %v4190 = vpack.c.b16 %v3194, %v3190
        %v4191 = vpack.c.b16 %v3199, %v3195
        %v4192 = vpack.c.b16 %v3200, %v3196
        %v4193 = vpack.c.b16 %v3201, %v3197
        %v4194 = vpack.c.b16 %v3202, %v3198
        %v4195 = vpack.c.b16 %v3207, %v3203
        %v4196 = vpack.c.b16 %v3208, %v3204
        %v4197 = vpack.c.b16 %v3209, %v3205
        %v4198 = vpack.c.b16 %v3210, %v3206
        %v4199 = vpack.c.b16 %v3215, %v3211
        %v4200 = vpack.c.b16 %v3216, %v3212
        %v4201 = vpack.c.b16 %v3217, %v3213
        %v4202 = vpack.c.b16 %v3218, %v3214
        %v4203 = vpack.c.b16 %v3223, %v3219
        %v4204 = vpack.c.b16 %v3224, %v3220
        %v4205 = vpack.c.b16 %v3225, %v3221
        %v4206 = vpack.c.b16 %v3226, %v3222
        %v4207 = vpack.c.b16 %v3231, %v3227
        %v4208 = vpack.c.b16 %v3232, %v3228
        %v4209 = vpack.c.b16 %v3233, %v3229
        %v4210 = vpack.c.b16 %v3234, %v3230
        %v4211 = vpack.c.b16 %v3239, %v3235
        %v4212 = vpack.c.b16 %v3240, %v3236
        %v4213 = vpack.c.b16 %v3241, %v3237
        %v4214 = vpack.c.b16 %v3242, %v3238
        %v4215 = vpack.c.b16 %v3247, %v3243
        %v4216 = vpack.c.b16 %v3248, %v3244
        %v4217 = vpack.c.b16 %v3249, %v3245
        %v4218 = vpack.c.b16 %v3250, %v3246
        %v4219 = vpack.c.b16 %v3255, %v3251
        %v4220 = vpack.c.b16 %v3256, %v3252
        %v4221 = vpack.c.b16 %v3257, %v3253
        %v4222 = vpack.c.b16 %v3258, %v3254
        %v4223 = vpack.c.b16 %v3263, %v3259
        %v4224 = vpack.c.b16 %v3264, %v3260
        %v4225 = vpack.c.b16 %v3265, %v3261
        %v4226 = vpack.c.b16 %v3266, %v3262
        %v4227 = vpack.c.b16 %v3271, %v3267
        %v4228 = vpack.c.b16 %v3272, %v3268
        %v4229 = vpack.c.b16 %v3273, %v3269
        %v4230 = vpack.c.b16 %v3274, %v3270
        %v4231 = vpack.c.b16 %v3279, %v3275
        %v4232 = vpack.c.b16 %v3280, %v3276
        %v4233 = vpack.c.b16 %v3281, %v3277
        %v4234 = vpack.c.b16 %v3282, %v3278
        %v4235 = vpack.c.b16 %v3287, %v3283
        %v4236 = vpack.c.b16 %v3288, %v3284
        %v4237 = vpack.c.b16 %v3289, %v3285
        %v4238 = vpack.c.b16 %v3290, %v3286
        %v4239 = vpack.c.b16 %v3295, %v3291
        %v4240 = vpack.c.b16 %v3296, %v3292
        %v4241 = vpack.c.b16 %v3297, %v3293
        %v4242 = vpack.c.b16 %v3298, %v3294
        %v4243 = vpack.c.b16 %v3303, %v3299
        %v4244 = vpack.c.b16 %v3304, %v3300
        %v4245 = vpack.c.b16 %v3305, %v3301
        %v4246 = vpack.c.b16 %v3306, %v3302
        %v4247 = vpack.c.b16 %v3311, %v3307
        %v4248 = vpack.c.b16 %v3312, %v3308
        %v4249 = vpack.c.b16 %v3313, %v3309
        %v4250 = vpack.c.b16 %v3314, %v3310
        %v4251 = vpack.c.b16 %v3319, %v3315
        %v4252 = vpack.c.b16 %v3320, %v3316
        %v4253 = vpack.c.b16 %v3321, %v3317
        %v4254 = vpack.c.b16 %v3322, %v3318
        %v4255 = vpack.c.b16 %v3327, %v3323
        %v4256 = vpack.c.b16 %v3328, %v3324
        %v4257 = vpack.c.b16 %v3329, %v3325
        %v4258 = vpack.c.b16 %v3330, %v3326
        %v4259 = vpack.c.b16 %v3335, %v3331
        %v4260 = vpack.c.b16 %v3336, %v3332
        %v4261 = vpack.c.b16 %v3337, %v3333
        %v4262 = vpack.c.b16 %v3338, %v3334
        %v4263 = vpack.c.b16 %v3343, %v3339
        %v4264 = vpack.c.b16 %v3344, %v3340
        %v4265 = vpack.c.b16 %v3345, %v3341
        %v4266 = vpack.c.b16 %v3346, %v3342
        %v4267 = vpack.c.b16 %v3351, %v3347
        %v4268 = vpack.c.b16 %v3352, %v3348
        %v4269 = vpack.c.b16 %v3353, %v3349
        %v4270 = vpack.c.b16 %v3354, %v3350
        %v4271 = vpack.c.b16 %v3359, %v3355
        %v4272 = vpack.c.b16 %v3360, %v3356
        %v4273 = vpack.c.b16 %v3361, %v3357
        %v4274 = vpack.c.b16 %v3362, %v3358
        %v4275 = vpack.c.b16 %v3367, %v3363
        %v4276 = vpack.c.b16 %v3368, %v3364
        %v4277 = vpack.c.b16 %v3369, %v3365
        %v4278 = vpack.c.b16 %v3370, %v3366
        %v4279 = vpack.c.b16 %v3375, %v3371
        %v4280 = vpack.c.b16 %v3376, %v3372
        %v4281 = vpack.c.b16 %v3377, %v3373
        %v4282 = vpack.c.b16 %v3378, %v3374
        %v4283 = vpack.c.b16 %v3383, %v3379
        %v4284 = vpack.c.b16 %v3384, %v3380
        %v4285 = vpack.c.b16 %v3385, %v3381
        %v4286 = vpack.c.b16 %v3386, %v3382
        %v4287 = vpack.c.b16 %v3391, %v3387
        %v4288 = vpack.c.b16 %v3392, %v3388
        %v4289 = vpack.c.b16 %v3393, %v3389
        %v4290 = vpack.c.b16 %v3394, %v3390
        %v4291 = vpack.c.b16 %v3399, %v3395
        %v4292 = vpack.c.b16 %v3400, %v3396
        %v4293 = vpack.c.b16 %v3401, %v3397
        %v4294 = vpack.c.b16 %v3402, %v3398
        %v4295 = vpack.c.b16 %v3407, %v3403
        %v4296 = vpack.c.b16 %v3408, %v3404
        %v4297 = vpack.c.b16 %v3409, %v3405
        %v4298 = vpack.c.b16 %v3410, %v3406
        %v4299 = vpack.c.b16 %v3415, %v3411
        %v4300 = vpack.c.b16 %v3416, %v3412
        %v4301 = vpack.c.b16 %v3417, %v3413
        %v4302 = vpack.c.b16 %v3418, %v3414
        %v4303 = vpack.c.b16 %v3423, %v3419
        %v4304 = vpack.c.b16 %v3424, %v3420
        %v4305 = vpack.c.b16 %v3425, %v3421
        %v4306 = vpack.c.b16 %v3426, %v3422
        %v4307 = vpack.c.b16 %v3431, %v3427
        %v4308 = vpack.c.b16 %v3432, %v3428
        %v4309 = vpack.c.b16 %v3433, %v3429
        %v4310 = vpack.c.b16 %v3434, %v3430
        %v4311 = vpack.c.b16 %v3439, %v3435
        %v4312 = vpack.c.b16 %v3440, %v3436
        %v4313 = vpack.c.b16 %v3441, %v3437
        %v4314 = vpack.c.b16 %v3442, %v3438
        %v4315 = vpack.c.b16 %v3447, %v3443
        %v4316 = vpack.c.b16 %v3448, %v3444
        %v4317 = vpack.c.b16 %v3449, %v3445
        %v4318 = vpack.c.b16 %v3450, %v3446
        %v4319 = vpack.c.b16 %v3455, %v3451
        %v4320 = vpack.c.b16 %v3456, %v3452
        %v4321 = vpack.c.b16 %v3457, %v3453
        %v4322 = vpack.c.b16 %v3458, %v3454
        %v4323 = vpack.c.b16 %v3463, %v3459
        %v4324 = vpack.c.b16 %v3464, %v3460
        %v4325 = vpack.c.b16 %v3465, %v3461
        %v4326 = vpack.c.b16 %v3466, %v3462
        %v4327 = vpack.c.b16 %v3471, %v3467
        %v4328 = vpack.c.b16 %v3472, %v3468
        %v4329 = vpack.c.b16 %v3473, %v3469
        %v4330 = vpack.c.b16 %v3474, %v3470
        %v4331 = vpack.c.b16 %v3479, %v3475
        %v4332 = vpack.c.b16 %v3480, %v3476
        %v4333 = vpack.c.b16 %v3481, %v3477
        %v4334 = vpack.c.b16 %v3482, %v3478
        %v4335 = vpack.c.b16 %v3487, %v3483
        %v4336 = vpack.c.b16 %v3488, %v3484
        %v4337 = vpack.c.b16 %v3489, %v3485
        %v4338 = vpack.c.b16 %v3490, %v3486
        %v4339 = vpack.c.b16 %v3495, %v3491
        %v4340 = vpack.c.b16 %v3496, %v3492
        %v4341 = vpack.c.b16 %v3497, %v3493
        %v4342 = vpack.c.b16 %v3498, %v3494
        %v4343 = vpack.c.b16 %v3503, %v3499
        %v4344 = vpack.c.b16 %v3504, %v3500
        %v4345 = vpack.c.b16 %v3505, %v3501
        %v4346 = vpack.c.b16 %v3506, %v3502
        %v4347 = vpack.c.b16 %v3511, %v3507
        %v4348 = vpack.c.b16 %v3512, %v3508
        %v4349 = vpack.c.b16 %v3513, %v3509
        %v4350 = vpack.c.b16 %v3514, %v3510
        %v4351 = vpack.c.b16 %v3519, %v3515
        %v4352 = vpack.c.b16 %v3520, %v3516
        %v4353 = vpack.c.b16 %v3521, %v3517
        %v4354 = vpack.c.b16 %v3522, %v3518
        %v4355 = vpack.c.b16 %v3527, %v3523
        %v4356 = vpack.c.b16 %v3528, %v3524
        %v4357 = vpack.c.b16 %v3529, %v3525
        %v4358 = vpack.c.b16 %v3530, %v3526
        %v4359 = vpack.c.b16 %v3535, %v3531
        %v4360 = vpack.c.b16 %v3536, %v3532
        %v4361 = vpack.c.b16 %v3537, %v3533
        %v4362 = vpack.c.b16 %v3538, %v3534
        %v4363 = vpack.c.b16 %v3543, %v3539
        %v4364 = vpack.c.b16 %v3544, %v3540
        %v4365 = vpack.c.b16 %v3545, %v3541
        %v4366 = vpack.c.b16 %v3546, %v3542
        %v4367 = vpack.c.b16 %v3551, %v3547
        %v4368 = vpack.c.b16 %v3552, %v3548
        %v4369 = vpack.c.b16 %v3553, %v3549
        %v4370 = vpack.c.b16 %v3554, %v3550
        %v4371 = vpack.c.b16 %v3559, %v3555
        %v4372 = vpack.c.b16 %v3560, %v3556
        %v4373 = vpack.c.b16 %v3561, %v3557
        %v4374 = vpack.c.b16 %v3562, %v3558
        %v4375 = vpack.c.b16 %v3567, %v3563
        %v4376 = vpack.c.b16 %v3568, %v3564
        %v4377 = vpack.c.b16 %v3569, %v3565
        %v4378 = vpack.c.b16 %v3570, %v3566
        %v4379 = vpack.c.b16 %v3575, %v3571
        %v4380 = vpack.c.b16 %v3576, %v3572
        %v4381 = vpack.c.b16 %v3577, %v3573
        %v4382 = vpack.c.b16 %v3578, %v3574
        %v4383 = vpack.c.b16 %v3583, %v3579
        %v4384 = vpack.c.b16 %v3584, %v3580
        %v4385 = vpack.c.b16 %v3585, %v3581
        %v4386 = vpack.c.b16 %v3586, %v3582
        %v4387 = vpack.c.b16 %v3591, %v3587
        %v4388 = vpack.c.b16 %v3592, %v3588
        %v4389 = vpack.c.b16 %v3593, %v3589
        %v4390 = vpack.c.b16 %v3594, %v3590
        %v4391 = vpack.c.b16 %v3599, %v3595
        %v4392 = vpack.c.b16 %v3600, %v3596
        %v4393 = vpack.c.b16 %v3601, %v3597
        %v4394 = vpack.c.b16 %v3602, %v3598
        %v4395 = vpack.c.b16 %v3607, %v3603
        %v4396 = vpack.c.b16 %v3608, %v3604
        %v4397 = vpack.c.b16 %v3609, %v3605
        %v4398 = vpack.c.b16 %v3610, %v3606
        %v4399 = vpack.c.b16 %v3615, %v3611
        %v4400 = vpack.c.b16 %v3616, %v3612
        %v4401 = vpack.c.b16 %v3617, %v3613
        %v4402 = vpack.c.b16 %v3618, %v3614
        %v4403 = vpack.c.b16 %v3623, %v3619
        %v4404 = vpack.c.b16 %v3624, %v3620
        %v4405 = vpack.c.b16 %v3625, %v3621
        %v4406 = vpack.c.b16 %v3626, %v3622
        %v4407 = vpack.c.b16 %v3631, %v3627
        %v4408 = vpack.c.b16 %v3632, %v3628
        %v4409 = vpack.c.b16 %v3633, %v3629
        %v4410 = vpack.c.b16 %v3634, %v3630
        %v4411 = vpack.c.b16 %v3639, %v3635
        %v4412 = vpack.c.b16 %v3640, %v3636
        %v4413 = vpack.c.b16 %v3641, %v3637
        %v4414 = vpack.c.b16 %v3642, %v3638
        %v4415 = vpack.c.b16 %v3647, %v3643
        %v4416 = vpack.c.b16 %v3648, %v3644
        %v4417 = vpack.c.b16 %v3649, %v3645
        %v4418 = vpack.c.b16 %v3650, %v3646
        %v4419 = vpack.c.b16 %v3655, %v3651
        %v4420 = vpack.c.b16 %v3656, %v3652
        %v4421 = vpack.c.b16 %v3657, %v3653
        %v4422 = vpack.c.b16 %v3658, %v3654
        %v4423 = vpack.c.b16 %v3663, %v3659
        %v4424 = vpack.c.b16 %v3664, %v3660
        %v4425 = vpack.c.b16 %v3665, %v3661
        %v4426 = vpack.c.b16 %v3666, %v3662
        %v4427 = vpack.c.b16 %v3671, %v3667
        %v4428 = vpack.c.b16 %v3672, %v3668
        %v4429 = vpack.c.b16 %v3673, %v3669
        %v4430 = vpack.c.b16 %v3674, %v3670
        %v4431 = vpack.c.b16 %v3679, %v3675
        %v4432 = vpack.c.b16 %v3680, %v3676
        %v4433 = vpack.c.b16 %v3681, %v3677
        %v4434 = vpack.c.b16 %v3682, %v3678
        %v4435 = vpack.c.b16 %v3687, %v3683
        %v4436 = vpack.c.b16 %v3688, %v3684
        %v4437 = vpack.c.b16 %v3689, %v3685
        %v4438 = vpack.c.b16 %v3690, %v3686
        %v4439 = vpack.c.b16 %v3695, %v3691
        %v4440 = vpack.c.b16 %v3696, %v3692
        %v4441 = vpack.c.b16 %v3697, %v3693
        %v4442 = vpack.c.b16 %v3698, %v3694
        %v4443 = vpack.c.b16 %v3703, %v3699
        %v4444 = vpack.c.b16 %v3704, %v3700
        %v4445 = vpack.c.b16 %v3705, %v3701
        %v4446 = vpack.c.b16 %v3706, %v3702
        %v4447 = vpack.c.b16 %v3711, %v3707
        %v4448 = vpack.c.b16 %v3712, %v3708
        %v4449 = vpack.c.b16 %v3713, %v3709
        %v4450 = vpack.c.b16 %v3714, %v3710
        %v4451 = vpack.c.b16 %v3719, %v3715
        %v4452 = vpack.c.b16 %v3720, %v3716
        %v4453 = vpack.c.b16 %v3721, %v3717
        %v4454 = vpack.c.b16 %v3722, %v3718
        %v4455 = vpack.c.b16 %v3727, %v3723
        %v4456 = vpack.c.b16 %v3728, %v3724
        %v4457 = vpack.c.b16 %v3729, %v3725
        %v4458 = vpack.c.b16 %v3730, %v3726
        %v4459 = vpack.c.b16 %v3735, %v3731
        %v4460 = vpack.c.b16 %v3736, %v3732
        %v4461 = vpack.c.b16 %v3737, %v3733
        %v4462 = vpack.c.b16 %v3738, %v3734
        %v4463 = vpack.c.b16 %v3743, %v3739
        %v4464 = vpack.c.b16 %v3744, %v3740
        %v4465 = vpack.c.b16 %v3745, %v3741
        %v4466 = vpack.c.b16 %v3746, %v3742
        %v4467 = vpack.c.b16 %v3751, %v3747
        %v4468 = vpack.c.b16 %v3752, %v3748
        %v4469 = vpack.c.b16 %v3753, %v3749
        %v4470 = vpack.c.b16 %v3754, %v3750
        %v4471 = vpack.c.b16 %v3759, %v3755
        %v4472 = vpack.c.b16 %v3760, %v3756
        %v4473 = vpack.c.b16 %v3761, %v3757
        %v4474 = vpack.c.b16 %v3762, %v3758
        %v4475 = vpack.c.b16 %v3767, %v3763
        %v4476 = vpack.c.b16 %v3768, %v3764
        %v4477 = vpack.c.b16 %v3769, %v3765
        %v4478 = vpack.c.b16 %v3770, %v3766
        %v4479 = vpack.c.b16 %v3775, %v3771
        %v4480 = vpack.c.b16 %v3776, %v3772
        %v4481 = vpack.c.b16 %v3777, %v3773
        %v4482 = vpack.c.b16 %v3778, %v3774
        %v4483 = vpack.c.b16 %v3783, %v3779
        %v4484 = vpack.c.b16 %v3784, %v3780
        %v4485 = vpack.c.b16 %v3785, %v3781
        %v4486 = vpack.c.b16 %v3786, %v3782
        %v4487 = vpack.c.b16 %v3791, %v3787
        %v4488 = vpack.c.b16 %v3792, %v3788
        %v4489 = vpack.c.b16 %v3793, %v3789
        %v4490 = vpack.c.b16 %v3794, %v3790
        %v4491 = vpack.c.b16 %v3799, %v3795
        %v4492 = vpack.c.b16 %v3800, %v3796
        %v4493 = vpack.c.b16 %v3801, %v3797
        %v4494 = vpack.c.b16 %v3802, %v3798
        %v4495 = vpack.c.b16 %v3807, %v3803
        %v4496 = vpack.c.b16 %v3808, %v3804
        %v4497 = vpack.c.b16 %v3809, %v3805
        %v4498 = vpack.c.b16 %v3810, %v3806
        %v4499 = vpack.c.b16 %v3815, %v3811
        %v4500 = vpack.c.b16 %v3816, %v3812
        %v4501 = vpack.c.b16 %v3817, %v3813
        %v4502 = vpack.c.b16 %v3818, %v3814
        %v4503 = vpack.c.b16 %v3823, %v3819
        %v4504 = vpack.c.b16 %v3824, %v3820
        %v4505 = vpack.c.b16 %v3825, %v3821
        %v4506 = vpack.c.b16 %v3826, %v3822
        %v4507 = vpack.c.b16 %v3831, %v3827
        %v4508 = vpack.c.b16 %v3832, %v3828
        %v4509 = vpack.c.b16 %v3833, %v3829
        %v4510 = vpack.c.b16 %v3834, %v3830
        %v4511 = vpack.c.b16 %v3839, %v3835
        %v4512 = vpack.c.b16 %v3840, %v3836
        %v4513 = vpack.c.b16 %v3841, %v3837
        %v4514 = vpack.c.b16 %v3842, %v3838
        %v4515 = vpack.c.b16 %v3847, %v3843
        %v4516 = vpack.c.b16 %v3848, %v3844
        %v4517 = vpack.c.b16 %v3849, %v3845
        %v4518 = vpack.c.b16 %v3850, %v3846
        %v4519 = vpack.c.b16 %v3855, %v3851
        %v4520 = vpack.c.b16 %v3856, %v3852
        %v4521 = vpack.c.b16 %v3857, %v3853
        %v4522 = vpack.c.b16 %v3858, %v3854
        %v4523 = vpack.c.b16 %v3863, %v3859
        %v4524 = vpack.c.b16 %v3864, %v3860
        %v4525 = vpack.c.b16 %v3865, %v3861
        %v4526 = vpack.c.b16 %v3866, %v3862
        %v4527 = vpack.c.b16 %v3871, %v3867
        %v4528 = vpack.c.b16 %v3872, %v3868
        %v4529 = vpack.c.b16 %v3873, %v3869
        %v4530 = vpack.c.b16 %v3874, %v3870
        %v4531 = vpack.c.b16 %v3879, %v3875
        %v4532 = vpack.c.b16 %v3880, %v3876
        %v4533 = vpack.c.b16 %v3881, %v3877
        %v4534 = vpack.c.b16 %v3882, %v3878
        %v4535 = vpack.c.b16 %v3887, %v3883
        %v4536 = vpack.c.b16 %v3888, %v3884
        %v4537 = vpack.c.b16 %v3889, %v3885
        %v4538 = vpack.c.b16 %v3890, %v3886
        %v4539 = vpack.c.b16 %v3895, %v3891
        %v4540 = vpack.c.b16 %v3896, %v3892
        %v4541 = vpack.c.b16 %v3897, %v3893
        %v4542 = vpack.c.b16 %v3898, %v3894
        %v4543 = vpack.c.b16 %v3903, %v3899
        %v4544 = vpack.c.b16 %v3904, %v3900
        %v4545 = vpack.c.b16 %v3905, %v3901
        %v4546 = vpack.c.b16 %v3906, %v3902
        %v4547 = vpack.c.b16 %v3911, %v3907
        %v4548 = vpack.c.b16 %v3912, %v3908
        %v4549 = vpack.c.b16 %v3913, %v3909
        %v4550 = vpack.c.b16 %v3914, %v3910
        %v4551 = vpack.c.b16 %v3919, %v3915
        %v4552 = vpack.c.b16 %v3920, %v3916
        %v4553 = vpack.c.b16 %v3921, %v3917
        %v4554 = vpack.c.b16 %v3922, %v3918
        %v4555 = vpack.c.b16 %v3927, %v3923
        %v4556 = vpack.c.b16 %v3928, %v3924
        %v4557 = vpack.c.b16 %v3929, %v3925
        %v4558 = vpack.c.b16 %v3930, %v3926
        %v4559 = vpack.c.b16 %v3935, %v3931
        %v4560 = vpack.c.b16 %v3936, %v3932
        %v4561 = vpack.c.b16 %v3937, %v3933
        %v4562 = vpack.c.b16 %v3938, %v3934
        %v4563 = vpack.c.b16 %v3943, %v3939
        %v4564 = vpack.c.b16 %v3944, %v3940
        %v4565 = vpack.c.b16 %v3945, %v3941
        %v4566 = vpack.c.b16 %v3946, %v3942
        %v4567 = vpack.c.b16 %v3951, %v3947
        %v4568 = vpack.c.b16 %v3952, %v3948
        %v4569 = vpack.c.b16 %v3953, %v3949
        %v4570 = vpack.c.b16 %v3954, %v3950
        %v4571 = vpack.c.b16 %v3959, %v3955
        %v4572 = vpack.c.b16 %v3960, %v3956
        %v4573 = vpack.c.b16 %v3961, %v3957
        %v4574 = vpack.c.b16 %v3962, %v3958
        %v4575 = vpack.c.b16 %v3967, %v3963
        %v4576 = vpack.c.b16 %v3968, %v3964
        %v4577 = vpack.c.b16 %v3969, %v3965
        %v4578 = vpack.c.b16 %v3970, %v3966
        %v4579 = vpack.c.b16 %v3975, %v3971
        %v4580 = vpack.c.b16 %v3976, %v3972
        %v4581 = vpack.c.b16 %v3977, %v3973
        %v4582 = vpack.c.b16 %v3978, %v3974
        %v4583 = vpack.c.b16 %v3983, %v3979
        %v4584 = vpack.c.b16 %v3984, %v3980
        %v4585 = vpack.c.b16 %v3985, %v3981
        %v4586 = vpack.c.b16 %v3986, %v3982
        %v4587 = vpack.c.b16 %v3991, %v3987
        %v4588 = vpack.c.b16 %v3992, %v3988
        %v4589 = vpack.c.b16 %v3993, %v3989
        %v4590 = vpack.c.b16 %v3994, %v3990
        %v4591 = vpack.c.b16 %v3999, %v3995
        %v4592 = vpack.c.b16 %v4000, %v3996
        %v4593 = vpack.c.b16 %v4001, %v3997
        %v4594 = vpack.c.b16 %v4002, %v3998
        %v4595 = vpack.c.b16 %v4007, %v4003
        %v4596 = vpack.c.b16 %v4008, %v4004
        %v4597 = vpack.c.b16 %v4009, %v4005
        %v4598 = vpack.c.b16 %v4010, %v4006
        %v4599 = vpack.c.b16 %v4015, %v4011
        %v4600 = vpack.c.b16 %v4016, %v4012
        %v4601 = vpack.c.b16 %v4017, %v4013
        %v4602 = vpack.c.b16 %v4018, %v4014
        %v4603 = vpack.c.b16 %v4023, %v4019
        %v4604 = vpack.c.b16 %v4024, %v4020
        %v4605 = vpack.c.b16 %v4025, %v4021
        %v4606 = vpack.c.b16 %v4026, %v4022
        %v4607 = vpack.c.b16 %v4031, %v4027
        %v4608 = vpack.c.b16 %v4032, %v4028
        %v4609 = vpack.c.b16 %v4033, %v4029
        %v4610 = vpack.c.b16 %v4034, %v4030
        %v4611 = vpack.c.b16 %v4039, %v4035
        %v4612 = vpack.c.b16 %v4040, %v4036
        %v4613 = vpack.c.b16 %v4041, %v4037
        %v4614 = vpack.c.b16 %v4042, %v4038
        %v4615 = vpack.c.b16 %v4047, %v4043
        %v4616 = vpack.c.b16 %v4048, %v4044
        %v4617 = vpack.c.b16 %v4049, %v4045
        %v4618 = vpack.c.b16 %v4050, %v4046
        %v4619 = vpack.c.b16 %v4055, %v4051
        %v4620 = vpack.c.b16 %v4056, %v4052
        %v4621 = vpack.c.b16 %v4057, %v4053
        %v4622 = vpack.c.b16 %v4058, %v4054
        %v4623 = vpack.c.b16 %v4063, %v4059
        %v4624 = vpack.c.b16 %v4064, %v4060
        %v4625 = vpack.c.b16 %v4065, %v4061
        %v4626 = vpack.c.b16 %v4066, %v4062
        %v4627 = vpack.c.b16 %v4071, %v4067
        %v4628 = vpack.c.b16 %v4072, %v4068
        %v4629 = vpack.c.b16 %v4073, %v4069
        %v4630 = vpack.c.b16 %v4074, %v4070
        %v4631 = vpack.c.b16 %v4079, %v4075
        %v4632 = vpack.c.b16 %v4080, %v4076
        %v4633 = vpack.c.b16 %v4081, %v4077
        %v4634 = vpack.c.b16 %v4082, %v4078
        %v4635 = vpack.c.b16 %v4087, %v4083
        %v4636 = vpack.c.b16 %v4088, %v4084
        %v4637 = vpack.c.b16 %v4089, %v4085
        %v4638 = vpack.c.b16 %v4090, %v4086
        %v4639 = vpack.c.b16 %v4095, %v4091
        %v4640 = vpack.c.b16 %v4096, %v4092
        %v4641 = vpack.c.b16 %v4097, %v4093
        %v4642 = vpack.c.b16 %v4098, %v4094
        %v4643 = vpack.c.b16 %v4103, %v4099
        %v4644 = vpack.c.b16 %v4104, %v4100
        %v4645 = vpack.c.b16 %v4105, %v4101
        %v4646 = vpack.c.b16 %v4106, %v4102
        %v4647 = vpack.c.b16 %v4111, %v4107
        %v4648 = vpack.c.b16 %v4112, %v4108
        %v4649 = vpack.c.b16 %v4113, %v4109
        %v4650 = vpack.c.b16 %v4114, %v4110
        %v4651 = vpack.c.b16 %v4119, %v4115
        %v4652 = vpack.c.b16 %v4120, %v4116
        %v4653 = vpack.c.b16 %v4121, %v4117
        %v4654 = vpack.c.b16 %v4122, %v4118
        %v4655 = vpack.c.b16 %v4127, %v4123
        %v4656 = vpack.c.b16 %v4128, %v4124
        %v4657 = vpack.c.b16 %v4129, %v4125
        %v4658 = vpack.c.b16 %v4130, %v4126
        %v4659 = vpack.c.b16 %v4135, %v4131
        %v4660 = vpack.c.b16 %v4136, %v4132
        %v4661 = vpack.c.b16 %v4137, %v4133
        %v4662 = vpack.c.b16 %v4138, %v4134
        %v4663 = vpack.c.b16 %v4143, %v4139
        %v4664 = vpack.c.b16 %v4144, %v4140
        %v4665 = vpack.c.b16 %v4145, %v4141
        %v4666 = vpack.c.b16 %v4146, %v4142
        %v4667 = vpack.c.b16 %v4151, %v4147
        %v4668 = vpack.c.b16 %v4152, %v4148
        %v4669 = vpack.c.b16 %v4153, %v4149
        %v4670 = vpack.c.b16 %v4154, %v4150
        %v4671 = vpack.c.b16 %v4159, %v4155
        %v4672 = vpack.c.b16 %v4160, %v4156
        %v4673 = vpack.c.b16 %v4161, %v4157
        %v4674 = vpack.c.b16 %v4162, %v4158
        %5187 = vmatprep.subr.bf16.mxu0 %v4164
        %5188 = vmatpush1.bf16.msra.mxu0 %v4163
        %5189 = vmatprep.subr.bf16.mxu0 %v4168
        %5190 = vmatpush1.bf16.msra.mxu0 %v4167
        %5191 = vmatprep.subr.bf16.mxu0 %v4172
        %5192 = vmatpush1.bf16.msra.mxu0 %v4171
        %5193 = vmatprep.subr.bf16.mxu0 %v4176
        %5194 = vmatpush1.bf16.msra.mxu0 %v4175
        %5195 = vmatprep.subr.bf16.mxu0 %v4180
        %5196 = vmatpush1.bf16.msra.mxu0 %v4179
        %5197 = vmatprep.subr.bf16.mxu0 %v4184
        %5198 = vmatpush1.bf16.msra.mxu0 %v4183
        %5199 = vmatprep.subr.bf16.mxu0 %v4188
        %5200 = vmatpush1.bf16.msra.mxu0 %v4187
        %5201 = vmatprep.subr.bf16.mxu0 %v4192
        %5202 = vmatpush1.bf16.msra.mxu0 %v4191
        %5203 = vmatprep.subr.bf16.mxu0 %v4196
        %5204 = vmatpush1.bf16.msra.mxu0 %v4195
        %5205 = vmatprep.subr.bf16.mxu0 %v4200
        %5206 = vmatpush1.bf16.msra.mxu0 %v4199
        %5207 = vmatprep.subr.bf16.mxu0 %v4204
        %5208 = vmatpush1.bf16.msra.mxu0 %v4203
        %5209 = vmatprep.subr.bf16.mxu0 %v4208
        %5210 = vmatpush1.bf16.msra.mxu0 %v4207
        %5211 = vmatprep.subr.bf16.mxu0 %v4212
        %5212 = vmatpush1.bf16.msra.mxu0 %v4211
        %5213 = vmatprep.subr.bf16.mxu0 %v4216
        %5214 = vmatpush1.bf16.msra.mxu0 %v4215
        %5215 = vmatprep.subr.bf16.mxu0 %v4220
        %5216 = vmatpush1.bf16.msra.mxu0 %v4219
        %5217 = vmatprep.subr.bf16.mxu0 %v4224
        %5218 = vmatpush1.bf16.msra.mxu0 %v4223
        %5219 = vmatprep.mubr.bf16.mxu0 %v2596
        %5220 = vmatmul.mubr.bf16.gmra.mrb[0].mxu0 %v2595
        %v5221 = vpop.f32.mrb[0].mxu0
        %v5222 = vadd.f32 %v2207, %v5221
        %v5223 = vpop.f32.mrb[0].mxu0
        %v5224 = vadd.f32 %v2211, %v5223
        %v5225 = vpop.f32.mrb[0].mxu0
        %v5226 = vpop.f32.mrb[0].mxu0
        %5227 = vdwg.mxu0
        %5228 = vmatprep.subr.bf16.mxu0 %v4228
        %5229 = vmatpush1.bf16.msra.mxu0 %v4227
        %5230 = vmatprep.subr.bf16.mxu0 %v4232
        %5231 = vmatpush1.bf16.msra.mxu0 %v4231
        %5232 = vmatprep.subr.bf16.mxu0 %v4236
        %5233 = vmatpush1.bf16.msra.mxu0 %v4235
        %5234 = vmatprep.subr.bf16.mxu0 %v4240
        %5235 = vmatpush1.bf16.msra.mxu0 %v4239
        %5236 = vmatprep.subr.bf16.mxu0 %v4244
        %5237 = vmatpush1.bf16.msra.mxu0 %v4243
        %5238 = vmatprep.subr.bf16.mxu0 %v4248
        %5239 = vmatpush1.bf16.msra.mxu0 %v4247
        %5240 = vmatprep.subr.bf16.mxu0 %v4252
        %5241 = vmatpush1.bf16.msra.mxu0 %v4251
        %5242 = vmatprep.subr.bf16.mxu0 %v4256
        %5243 = vmatpush1.bf16.msra.mxu0 %v4255
        %5244 = vmatprep.subr.bf16.mxu0 %v4260
        %5245 = vmatpush1.bf16.msra.mxu0 %v4259
        %5246 = vmatprep.subr.bf16.mxu0 %v4264
        %5247 = vmatpush1.bf16.msra.mxu0 %v4263
        %5248 = vmatprep.subr.bf16.mxu0 %v4268
        %5249 = vmatpush1.bf16.msra.mxu0 %v4267
        %5250 = vmatprep.subr.bf16.mxu0 %v4272
        %5251 = vmatpush1.bf16.msra.mxu0 %v4271
        %5252 = vmatprep.subr.bf16.mxu0 %v4276
        %5253 = vmatpush1.bf16.msra.mxu0 %v4275
        %5254 = vmatprep.subr.bf16.mxu0 %v4280
        %5255 = vmatpush1.bf16.msra.mxu0 %v4279
        %5256 = vmatprep.subr.bf16.mxu0 %v4284
        %5257 = vmatpush1.bf16.msra.mxu0 %v4283
        %5258 = vmatprep.subr.bf16.mxu0 %v4288
        %5259 = vmatpush1.bf16.msra.mxu0 %v4287
        %5260 = vmatprep.mubr.bf16.mxu0 %v2598
        %5261 = vmatmul.mubr.bf16.gmra.mrb[0].mxu0 %v2597
        %v5262 = vpop.f32.mrb[0].mxu0
        %v5263 = vadd.f32 %v5222, %v5262
        %v5264 = vpop.f32.mrb[0].mxu0
        %v5265 = vadd.f32 %v5224, %v5264
        %v5266 = vpop.f32.mrb[0].mxu0
        %v5267 = vpop.f32.mrb[0].mxu0
        %5268 = vdwg.mxu0
        %5269 = vmatprep.subr.bf16.mxu0 %v4292
        %5270 = vmatpush1.bf16.msra.mxu0 %v4291
        %5271 = vmatprep.subr.bf16.mxu0 %v4296
        %5272 = vmatpush1.bf16.msra.mxu0 %v4295
        %5273 = vmatprep.subr.bf16.mxu0 %v4300
        %5274 = vmatpush1.bf16.msra.mxu0 %v4299
        %5275 = vmatprep.subr.bf16.mxu0 %v4304
        %5276 = vmatpush1.bf16.msra.mxu0 %v4303
        %5277 = vmatprep.subr.bf16.mxu0 %v4308
        %5278 = vmatpush1.bf16.msra.mxu0 %v4307
        %5279 = vmatprep.subr.bf16.mxu0 %v4312
        %5280 = vmatpush1.bf16.msra.mxu0 %v4311
        %5281 = vmatprep.subr.bf16.mxu0 %v4316
        %5282 = vmatpush1.bf16.msra.mxu0 %v4315
        %5283 = vmatprep.subr.bf16.mxu0 %v4320
        %5284 = vmatpush1.bf16.msra.mxu0 %v4319
        %5285 = vmatprep.subr.bf16.mxu0 %v4324
        %5286 = vmatpush1.bf16.msra.mxu0 %v4323
        %5287 = vmatprep.subr.bf16.mxu0 %v4328
        %5288 = vmatpush1.bf16.msra.mxu0 %v4327
        %5289 = vmatprep.subr.bf16.mxu0 %v4332
        %5290 = vmatpush1.bf16.msra.mxu0 %v4331
        %5291 = vmatprep.subr.bf16.mxu0 %v4336
        %5292 = vmatpush1.bf16.msra.mxu0 %v4335
        %5293 = vmatprep.subr.bf16.mxu0 %v4340
        %5294 = vmatpush1.bf16.msra.mxu0 %v4339
        %5295 = vmatprep.subr.bf16.mxu0 %v4344
        %5296 = vmatpush1.bf16.msra.mxu0 %v4343
        %5297 = vmatprep.subr.bf16.mxu0 %v4348
        %5298 = vmatpush1.bf16.msra.mxu0 %v4347
        %5299 = vmatprep.subr.bf16.mxu0 %v4352
        %5300 = vmatpush1.bf16.msra.mxu0 %v4351
        %5301 = vmatprep.mubr.bf16.mxu0 %v2600
        %5302 = vmatmul.mubr.bf16.gmra.mrb[0].mxu0 %v2599
        %v5303 = vpop.f32.mrb[0].mxu0
        %v5304 = vadd.f32 %v5263, %v5303
        %v5305 = vpop.f32.mrb[0].mxu0
        %v5306 = vadd.f32 %v5265, %v5305
        %v5307 = vpop.f32.mrb[0].mxu0
        %v5308 = vpop.f32.mrb[0].mxu0
        %5309 = vdwg.mxu0
        %5310 = vmatprep.subr.bf16.mxu0 %v4356
        %5311 = vmatpush1.bf16.msra.mxu0 %v4355
        %5312 = vmatprep.subr.bf16.mxu0 %v4360
        %5313 = vmatpush1.bf16.msra.mxu0 %v4359
        %5314 = vmatprep.subr.bf16.mxu0 %v4364
        %5315 = vmatpush1.bf16.msra.mxu0 %v4363
        %5316 = vmatprep.subr.bf16.mxu0 %v4368
        %5317 = vmatpush1.bf16.msra.mxu0 %v4367
        %5318 = vmatprep.subr.bf16.mxu0 %v4372
        %5319 = vmatpush1.bf16.msra.mxu0 %v4371
        %5320 = vmatprep.subr.bf16.mxu0 %v4376
        %5321 = vmatpush1.bf16.msra.mxu0 %v4375
        %5322 = vmatprep.subr.bf16.mxu0 %v4380
        %5323 = vmatpush1.bf16.msra.mxu0 %v4379
        %5324 = vmatprep.subr.bf16.mxu0 %v4384
        %5325 = vmatpush1.bf16.msra.mxu0 %v4383
        %5326 = vmatprep.subr.bf16.mxu0 %v4388
        %5327 = vmatpush1.bf16.msra.mxu0 %v4387
        %5328 = vmatprep.subr.bf16.mxu0 %v4392
        %5329 = vmatpush1.bf16.msra.mxu0 %v4391
        %5330 = vmatprep.subr.bf16.mxu0 %v4396
        %5331 = vmatpush1.bf16.msra.mxu0 %v4395
        %5332 = vmatprep.subr.bf16.mxu0 %v4400
        %5333 = vmatpush1.bf16.msra.mxu0 %v4399
        %5334 = vmatprep.subr.bf16.mxu0 %v4404
        %5335 = vmatpush1.bf16.msra.mxu0 %v4403
        %5336 = vmatprep.subr.bf16.mxu0 %v4408
        %5337 = vmatpush1.bf16.msra.mxu0 %v4407
        %5338 = vmatprep.subr.bf16.mxu0 %v4412
        %5339 = vmatpush1.bf16.msra.mxu0 %v4411
        %5340 = vmatprep.subr.bf16.mxu0 %v4416
        %5341 = vmatpush1.bf16.msra.mxu0 %v4415
        %5342 = vmatprep.mubr.bf16.mxu0 %v2602
        %5343 = vmatmul.mubr.bf16.gmra.mrb[0].mxu0 %v2601
        %v5344 = vpop.f32.mrb[0].mxu0
        %v5345 = vadd.f32 %v5304, %v5344
        %v5346 = vpop.f32.mrb[0].mxu0
        %v5347 = vadd.f32 %v5306, %v5346
        %v5348 = vpop.f32.mrb[0].mxu0
        %v5349 = vpop.f32.mrb[0].mxu0
        %5350 = vdwg.mxu0
        %5351 = vmatprep.subr.bf16.mxu0 %v4420
        %5352 = vmatpush1.bf16.msra.mxu0 %v4419
        %5353 = vmatprep.subr.bf16.mxu0 %v4424
        %5354 = vmatpush1.bf16.msra.mxu0 %v4423
        %5355 = vmatprep.subr.bf16.mxu0 %v4428
        %5356 = vmatpush1.bf16.msra.mxu0 %v4427
        %5357 = vmatprep.subr.bf16.mxu0 %v4432
        %5358 = vmatpush1.bf16.msra.mxu0 %v4431
        %5359 = vmatprep.subr.bf16.mxu0 %v4436
        %5360 = vmatpush1.bf16.msra.mxu0 %v4435
        %5361 = vmatprep.subr.bf16.mxu0 %v4440
        %5362 = vmatpush1.bf16.msra.mxu0 %v4439
        %5363 = vmatprep.subr.bf16.mxu0 %v4444
        %5364 = vmatpush1.bf16.msra.mxu0 %v4443
        %5365 = vmatprep.subr.bf16.mxu0 %v4448
        %5366 = vmatpush1.bf16.msra.mxu0 %v4447
        %5367 = vmatprep.subr.bf16.mxu0 %v4452
        %5368 = vmatpush1.bf16.msra.mxu0 %v4451
        %5369 = vmatprep.subr.bf16.mxu0 %v4456
        %5370 = vmatpush1.bf16.msra.mxu0 %v4455
        %5371 = vmatprep.subr.bf16.mxu0 %v4460
        %5372 = vmatpush1.bf16.msra.mxu0 %v4459
        %5373 = vmatprep.subr.bf16.mxu0 %v4464
        %5374 = vmatpush1.bf16.msra.mxu0 %v4463
        %5375 = vmatprep.subr.bf16.mxu0 %v4468
        %5376 = vmatpush1.bf16.msra.mxu0 %v4467
        %5377 = vmatprep.subr.bf16.mxu0 %v4472
        %5378 = vmatpush1.bf16.msra.mxu0 %v4471
        %5379 = vmatprep.subr.bf16.mxu0 %v4476
        %5380 = vmatpush1.bf16.msra.mxu0 %v4475
        %5381 = vmatprep.subr.bf16.mxu0 %v4480
        %5382 = vmatpush1.bf16.msra.mxu0 %v4479
        %5383 = vmatprep.mubr.bf16.mxu0 %v2604
        %5384 = vmatmul.mubr.bf16.gmra.mrb[0].mxu0 %v2603
        %v5385 = vpop.f32.mrb[0].mxu0
        %v5386 = vadd.f32 %v5345, %v5385
        %v5387 = vpop.f32.mrb[0].mxu0
        %v5388 = vadd.f32 %v5347, %v5387
        %v5389 = vpop.f32.mrb[0].mxu0
        %v5390 = vpop.f32.mrb[0].mxu0
        %5391 = vdwg.mxu0
        %5392 = vmatprep.subr.bf16.mxu0 %v4484
        %5393 = vmatpush1.bf16.msra.mxu0 %v4483
        %5394 = vmatprep.subr.bf16.mxu0 %v4488
        %5395 = vmatpush1.bf16.msra.mxu0 %v4487
        %5396 = vmatprep.subr.bf16.mxu0 %v4492
        %5397 = vmatpush1.bf16.msra.mxu0 %v4491
        %5398 = vmatprep.subr.bf16.mxu0 %v4496
        %5399 = vmatpush1.bf16.msra.mxu0 %v4495
        %5400 = vmatprep.subr.bf16.mxu0 %v4500
        %5401 = vmatpush1.bf16.msra.mxu0 %v4499
        %5402 = vmatprep.subr.bf16.mxu0 %v4504
        %5403 = vmatpush1.bf16.msra.mxu0 %v4503
        %5404 = vmatprep.subr.bf16.mxu0 %v4508
        %5405 = vmatpush1.bf16.msra.mxu0 %v4507
        %5406 = vmatprep.subr.bf16.mxu0 %v4512
        %5407 = vmatpush1.bf16.msra.mxu0 %v4511
        %5408 = vmatprep.subr.bf16.mxu0 %v4516
        %5409 = vmatpush1.bf16.msra.mxu0 %v4515
        %5410 = vmatprep.subr.bf16.mxu0 %v4520
        %5411 = vmatpush1.bf16.msra.mxu0 %v4519
        %5412 = vmatprep.subr.bf16.mxu0 %v4524
        %5413 = vmatpush1.bf16.msra.mxu0 %v4523
        %5414 = vmatprep.subr.bf16.mxu0 %v4528
        %5415 = vmatpush1.bf16.msra.mxu0 %v4527
        %5416 = vmatprep.subr.bf16.mxu0 %v4532
        %5417 = vmatpush1.bf16.msra.mxu0 %v4531
        %5418 = vmatprep.subr.bf16.mxu0 %v4536
        %5419 = vmatpush1.bf16.msra.mxu0 %v4535
        %5420 = vmatprep.subr.bf16.mxu0 %v4540
        %5421 = vmatpush1.bf16.msra.mxu0 %v4539
        %5422 = vmatprep.subr.bf16.mxu0 %v4544
        %5423 = vmatpush1.bf16.msra.mxu0 %v4543
        %5424 = vmatprep.mubr.bf16.mxu0 %v2606
        %5425 = vmatmul.mubr.bf16.gmra.mrb[0].mxu0 %v2605
        %v5426 = vpop.f32.mrb[0].mxu0
        %v5427 = vadd.f32 %v5386, %v5426
        %v5428 = vpop.f32.mrb[0].mxu0
        %v5429 = vadd.f32 %v5388, %v5428
        %v5430 = vpop.f32.mrb[0].mxu0
        %v5431 = vpop.f32.mrb[0].mxu0
        %5432 = vdwg.mxu0
        %5433 = vmatprep.subr.bf16.mxu0 %v4548
        %5434 = vmatpush1.bf16.msra.mxu0 %v4547
        %5435 = vmatprep.subr.bf16.mxu0 %v4552
        %5436 = vmatpush1.bf16.msra.mxu0 %v4551
        %5437 = vmatprep.subr.bf16.mxu0 %v4556
        %5438 = vmatpush1.bf16.msra.mxu0 %v4555
        %5439 = vmatprep.subr.bf16.mxu0 %v4560
        %5440 = vmatpush1.bf16.msra.mxu0 %v4559
        %5441 = vmatprep.subr.bf16.mxu0 %v4564
        %5442 = vmatpush1.bf16.msra.mxu0 %v4563
        %5443 = vmatprep.subr.bf16.mxu0 %v4568
        %5444 = vmatpush1.bf16.msra.mxu0 %v4567
        %5445 = vmatprep.subr.bf16.mxu0 %v4572
        %5446 = vmatpush1.bf16.msra.mxu0 %v4571
        %5447 = vmatprep.subr.bf16.mxu0 %v4576
        %5448 = vmatpush1.bf16.msra.mxu0 %v4575
        %5449 = vmatprep.subr.bf16.mxu0 %v4580
        %5450 = vmatpush1.bf16.msra.mxu0 %v4579
        %5451 = vmatprep.subr.bf16.mxu0 %v4584
        %5452 = vmatpush1.bf16.msra.mxu0 %v4583
        %5453 = vmatprep.subr.bf16.mxu0 %v4588
        %5454 = vmatpush1.bf16.msra.mxu0 %v4587
        %5455 = vmatprep.subr.bf16.mxu0 %v4592
        %5456 = vmatpush1.bf16.msra.mxu0 %v4591
        %5457 = vmatprep.subr.bf16.mxu0 %v4596
        %5458 = vmatpush1.bf16.msra.mxu0 %v4595
        %5459 = vmatprep.subr.bf16.mxu0 %v4600
        %5460 = vmatpush1.bf16.msra.mxu0 %v4599
        %5461 = vmatprep.subr.bf16.mxu0 %v4604
        %5462 = vmatpush1.bf16.msra.mxu0 %v4603
        %5463 = vmatprep.subr.bf16.mxu0 %v4608
        %5464 = vmatpush1.bf16.msra.mxu0 %v4607
        %5465 = vmatprep.mubr.bf16.mxu0 %v2608
        %5466 = vmatmul.mubr.bf16.gmra.mrb[0].mxu0 %v2607
        %v5467 = vpop.f32.mrb[0].mxu0
        %v5468 = vadd.f32 %v5427, %v5467
        %v5469 = vpop.f32.mrb[0].mxu0
        %v5470 = vadd.f32 %v5429, %v5469
        %v5471 = vpop.f32.mrb[0].mxu0
        %v5472 = vpop.f32.mrb[0].mxu0
        %5473 = vdwg.mxu0
        %5474 = vmatprep.subr.bf16.mxu0 %v4612
        %5475 = vmatpush1.bf16.msra.mxu0 %v4611
        %5476 = vmatprep.subr.bf16.mxu0 %v4616
        %5477 = vmatpush1.bf16.msra.mxu0 %v4615
        %5478 = vmatprep.subr.bf16.mxu0 %v4620
        %5479 = vmatpush1.bf16.msra.mxu0 %v4619
        %5480 = vmatprep.subr.bf16.mxu0 %v4624
        %5481 = vmatpush1.bf16.msra.mxu0 %v4623
        %5482 = vmatprep.subr.bf16.mxu0 %v4628
        %5483 = vmatpush1.bf16.msra.mxu0 %v4627
        %5484 = vmatprep.subr.bf16.mxu0 %v4632
        %5485 = vmatpush1.bf16.msra.mxu0 %v4631
        %5486 = vmatprep.subr.bf16.mxu0 %v4636
        %5487 = vmatpush1.bf16.msra.mxu0 %v4635
        %5488 = vmatprep.subr.bf16.mxu0 %v4640
        %5489 = vmatpush1.bf16.msra.mxu0 %v4639
        %5490 = vmatprep.subr.bf16.mxu0 %v4644
        %5491 = vmatpush1.bf16.msra.mxu0 %v4643
        %5492 = vmatprep.subr.bf16.mxu0 %v4648
        %5493 = vmatpush1.bf16.msra.mxu0 %v4647
        %5494 = vmatprep.subr.bf16.mxu0 %v4652
        %5495 = vmatpush1.bf16.msra.mxu0 %v4651
        %5496 = vmatprep.subr.bf16.mxu0 %v4656
        %5497 = vmatpush1.bf16.msra.mxu0 %v4655
        %5498 = vmatprep.subr.bf16.mxu0 %v4660
        %5499 = vmatpush1.bf16.msra.mxu0 %v4659
        %5500 = vmatprep.subr.bf16.mxu0 %v4664
        %5501 = vmatpush1.bf16.msra.mxu0 %v4663
        %5502 = vmatprep.subr.bf16.mxu0 %v4668
        %5503 = vmatpush1.bf16.msra.mxu0 %v4667
        %5504 = vmatprep.subr.bf16.mxu0 %v4672
        %5505 = vmatpush1.bf16.msra.mxu0 %v4671
        %5506 = vmatprep.mubr.bf16.mxu0 %v2610
        %5507 = vmatmul.mubr.bf16.gmra.mrb[0].mxu0 %v2609
        %v5508 = vpop.f32.mrb[0].mxu0
        %v5509 = vadd.f32 %v5468, %v5508
        %v5510 = vpop.f32.mrb[0].mxu0
        %v5511 = vadd.f32 %v5470, %v5510
        %v5512 = vpop.f32.mrb[0].mxu0
        %v5513 = vpop.f32.mrb[0].mxu0
        %5514 = vdwg.mxu0
        %5515 = vmatprep.subr.bf16.mxu0 %v4166
        %5516 = vmatpush1.bf16.msra.mxu0 %v4165
        %5517 = vmatprep.subr.bf16.mxu0 %v4170
        %5518 = vmatpush1.bf16.msra.mxu0 %v4169
        %5519 = vmatprep.subr.bf16.mxu0 %v4174
        %5520 = vmatpush1.bf16.msra.mxu0 %v4173
        %5521 = vmatprep.subr.bf16.mxu0 %v4178
        %5522 = vmatpush1.bf16.msra.mxu0 %v4177
        %5523 = vmatprep.subr.bf16.mxu0 %v4182
        %5524 = vmatpush1.bf16.msra.mxu0 %v4181
        %5525 = vmatprep.subr.bf16.mxu0 %v4186
        %5526 = vmatpush1.bf16.msra.mxu0 %v4185
        %5527 = vmatprep.subr.bf16.mxu0 %v4190
        %5528 = vmatpush1.bf16.msra.mxu0 %v4189
        %5529 = vmatprep.subr.bf16.mxu0 %v4194
        %5530 = vmatpush1.bf16.msra.mxu0 %v4193
        %5531 = vmatprep.subr.bf16.mxu0 %v4198
        %5532 = vmatpush1.bf16.msra.mxu0 %v4197
        %5533 = vmatprep.subr.bf16.mxu0 %v4202
        %5534 = vmatpush1.bf16.msra.mxu0 %v4201
        %5535 = vmatprep.subr.bf16.mxu0 %v4206
        %5536 = vmatpush1.bf16.msra.mxu0 %v4205
        %5537 = vmatprep.subr.bf16.mxu0 %v4210
        %5538 = vmatpush1.bf16.msra.mxu0 %v4209
        %5539 = vmatprep.subr.bf16.mxu0 %v4214
        %5540 = vmatpush1.bf16.msra.mxu0 %v4213
        %5541 = vmatprep.subr.bf16.mxu0 %v4218
        %5542 = vmatpush1.bf16.msra.mxu0 %v4217
        %5543 = vmatprep.subr.bf16.mxu0 %v4222
        %5544 = vmatpush1.bf16.msra.mxu0 %v4221
        %5545 = vmatprep.subr.bf16.mxu0 %v4226
        %5546 = vmatpush1.bf16.msra.mxu0 %v4225
        %5547 = vmatprep.mubr.bf16.mxu0 %v2596
        %5548 = vmatmul.mubr.bf16.gmra.mrb[0].mxu0 %v2595
        %v5549 = vpop.f32.mrb[0].mxu0
        %v5550 = vadd.f32 %v2215, %v5549
        %v5551 = vpop.f32.mrb[0].mxu0
        %v5552 = vadd.f32 %v2219, %v5551
        %v5553 = vpop.f32.mrb[0].mxu0
        %v5554 = vpop.f32.mrb[0].mxu0
        %5555 = vdwg.mxu0
        %5556 = vmatprep.subr.bf16.mxu0 %v4230
        %5557 = vmatpush1.bf16.msra.mxu0 %v4229
        %5558 = vmatprep.subr.bf16.mxu0 %v4234
        %5559 = vmatpush1.bf16.msra.mxu0 %v4233
        %5560 = vmatprep.subr.bf16.mxu0 %v4238
        %5561 = vmatpush1.bf16.msra.mxu0 %v4237
        %5562 = vmatprep.subr.bf16.mxu0 %v4242
        %5563 = vmatpush1.bf16.msra.mxu0 %v4241
        %5564 = vmatprep.subr.bf16.mxu0 %v4246
        %5565 = vmatpush1.bf16.msra.mxu0 %v4245
        %5566 = vmatprep.subr.bf16.mxu0 %v4250
        %5567 = vmatpush1.bf16.msra.mxu0 %v4249
        %5568 = vmatprep.subr.bf16.mxu0 %v4254
        %5569 = vmatpush1.bf16.msra.mxu0 %v4253
        %5570 = vmatprep.subr.bf16.mxu0 %v4258
        %5571 = vmatpush1.bf16.msra.mxu0 %v4257
        %5572 = vmatprep.subr.bf16.mxu0 %v4262
        %5573 = vmatpush1.bf16.msra.mxu0 %v4261
        %5574 = vmatprep.subr.bf16.mxu0 %v4266
        %5575 = vmatpush1.bf16.msra.mxu0 %v4265
        %5576 = vmatprep.subr.bf16.mxu0 %v4270
        %5577 = vmatpush1.bf16.msra.mxu0 %v4269
        %5578 = vmatprep.subr.bf16.mxu0 %v4274
        %5579 = vmatpush1.bf16.msra.mxu0 %v4273
        %5580 = vmatprep.subr.bf16.mxu0 %v4278
        %5581 = vmatpush1.bf16.msra.mxu0 %v4277
        %5582 = vmatprep.subr.bf16.mxu0 %v4282
        %5583 = vmatpush1.bf16.msra.mxu0 %v4281
        %5584 = vmatprep.subr.bf16.mxu0 %v4286
        %5585 = vmatpush1.bf16.msra.mxu0 %v4285
        %5586 = vmatprep.subr.bf16.mxu0 %v4290
        %5587 = vmatpush1.bf16.msra.mxu0 %v4289
        %5588 = vmatprep.mubr.bf16.mxu0 %v2598
        %5589 = vmatmul.mubr.bf16.gmra.mrb[0].mxu0 %v2597
        %v5590 = vpop.f32.mrb[0].mxu0
        %v5591 = vadd.f32 %v5550, %v5590
        %v5592 = vpop.f32.mrb[0].mxu0
        %v5593 = vadd.f32 %v5552, %v5592
        %v5594 = vpop.f32.mrb[0].mxu0
        %v5595 = vpop.f32.mrb[0].mxu0
        %5596 = vdwg.mxu0
        %5597 = vmatprep.subr.bf16.mxu0 %v4294
        %5598 = vmatpush1.bf16.msra.mxu0 %v4293
        %5599 = vmatprep.subr.bf16.mxu0 %v4298
        %5600 = vmatpush1.bf16.msra.mxu0 %v4297
        %5601 = vmatprep.subr.bf16.mxu0 %v4302
        %5602 = vmatpush1.bf16.msra.mxu0 %v4301
        %5603 = vmatprep.subr.bf16.mxu0 %v4306
        %5604 = vmatpush1.bf16.msra.mxu0 %v4305
        %5605 = vmatprep.subr.bf16.mxu0 %v4310
        %5606 = vmatpush1.bf16.msra.mxu0 %v4309
        %5607 = vmatprep.subr.bf16.mxu0 %v4314
        %5608 = vmatpush1.bf16.msra.mxu0 %v4313
        %5609 = vmatprep.subr.bf16.mxu0 %v4318
        %5610 = vmatpush1.bf16.msra.mxu0 %v4317
        %5611 = vmatprep.subr.bf16.mxu0 %v4322
        %5612 = vmatpush1.bf16.msra.mxu0 %v4321
        %5613 = vmatprep.subr.bf16.mxu0 %v4326
        %5614 = vmatpush1.bf16.msra.mxu0 %v4325
        %5615 = vmatprep.subr.bf16.mxu0 %v4330
        %5616 = vmatpush1.bf16.msra.mxu0 %v4329
        %5617 = vmatprep.subr.bf16.mxu0 %v4334
        %5618 = vmatpush1.bf16.msra.mxu0 %v4333
        %5619 = vmatprep.subr.bf16.mxu0 %v4338
        %5620 = vmatpush1.bf16.msra.mxu0 %v4337
        %5621 = vmatprep.subr.bf16.mxu0 %v4342
        %5622 = vmatpush1.bf16.msra.mxu0 %v4341
        %5623 = vmatprep.subr.bf16.mxu0 %v4346
        %5624 = vmatpush1.bf16.msra.mxu0 %v4345
        %5625 = vmatprep.subr.bf16.mxu0 %v4350
        %5626 = vmatpush1.bf16.msra.mxu0 %v4349
        %5627 = vmatprep.subr.bf16.mxu0 %v4354
        %5628 = vmatpush1.bf16.msra.mxu0 %v4353
        %5629 = vmatprep.mubr.bf16.mxu0 %v2600
        %5630 = vmatmul.mubr.bf16.gmra.mrb[0].mxu0 %v2599
        %v5631 = vpop.f32.mrb[0].mxu0
        %v5632 = vadd.f32 %v5591, %v5631
        %v5633 = vpop.f32.mrb[0].mxu0
        %v5634 = vadd.f32 %v5593, %v5633
        %v5635 = vpop.f32.mrb[0].mxu0
        %v5636 = vpop.f32.mrb[0].mxu0
        %5637 = vdwg.mxu0
        %5638 = vmatprep.subr.bf16.mxu0 %v4358
        %5639 = vmatpush1.bf16.msra.mxu0 %v4357
        %5640 = vmatprep.subr.bf16.mxu0 %v4362
        %5641 = vmatpush1.bf16.msra.mxu0 %v4361
        %5642 = vmatprep.subr.bf16.mxu0 %v4366
        %5643 = vmatpush1.bf16.msra.mxu0 %v4365
        %5644 = vmatprep.subr.bf16.mxu0 %v4370
        %5645 = vmatpush1.bf16.msra.mxu0 %v4369
        %5646 = vmatprep.subr.bf16.mxu0 %v4374
        %5647 = vmatpush1.bf16.msra.mxu0 %v4373
        %5648 = vmatprep.subr.bf16.mxu0 %v4378
        %5649 = vmatpush1.bf16.msra.mxu0 %v4377
        %5650 = vmatprep.subr.bf16.mxu0 %v4382
        %5651 = vmatpush1.bf16.msra.mxu0 %v4381
        %5652 = vmatprep.subr.bf16.mxu0 %v4386
        %5653 = vmatpush1.bf16.msra.mxu0 %v4385
        %5654 = vmatprep.subr.bf16.mxu0 %v4390
        %5655 = vmatpush1.bf16.msra.mxu0 %v4389
        %5656 = vmatprep.subr.bf16.mxu0 %v4394
        %5657 = vmatpush1.bf16.msra.mxu0 %v4393
        %5658 = vmatprep.subr.bf16.mxu0 %v4398
        %5659 = vmatpush1.bf16.msra.mxu0 %v4397
        %5660 = vmatprep.subr.bf16.mxu0 %v4402
        %5661 = vmatpush1.bf16.msra.mxu0 %v4401
        %5662 = vmatprep.subr.bf16.mxu0 %v4406
        %5663 = vmatpush1.bf16.msra.mxu0 %v4405
        %5664 = vmatprep.subr.bf16.mxu0 %v4410
        %5665 = vmatpush1.bf16.msra.mxu0 %v4409
        %5666 = vmatprep.subr.bf16.mxu0 %v4414
        %5667 = vmatpush1.bf16.msra.mxu0 %v4413
        %5668 = vmatprep.subr.bf16.mxu0 %v4418
        %5669 = vmatpush1.bf16.msra.mxu0 %v4417
        %5670 = vmatprep.mubr.bf16.mxu0 %v2602
        %5671 = vmatmul.mubr.bf16.gmra.mrb[0].mxu0 %v2601
        %v5672 = vpop.f32.mrb[0].mxu0
        %v5673 = vadd.f32 %v5632, %v5672
        %v5674 = vpop.f32.mrb[0].mxu0
        %v5675 = vadd.f32 %v5634, %v5674
        %v5676 = vpop.f32.mrb[0].mxu0
        %v5677 = vpop.f32.mrb[0].mxu0
        %5678 = vdwg.mxu0
        %5679 = vmatprep.subr.bf16.mxu0 %v4422
        %5680 = vmatpush1.bf16.msra.mxu0 %v4421
        %5681 = vmatprep.subr.bf16.mxu0 %v4426
        %5682 = vmatpush1.bf16.msra.mxu0 %v4425
        %5683 = vmatprep.subr.bf16.mxu0 %v4430
        %5684 = vmatpush1.bf16.msra.mxu0 %v4429
        %5685 = vmatprep.subr.bf16.mxu0 %v4434
        %5686 = vmatpush1.bf16.msra.mxu0 %v4433
        %5687 = vmatprep.subr.bf16.mxu0 %v4438
        %5688 = vmatpush1.bf16.msra.mxu0 %v4437
        %5689 = vmatprep.subr.bf16.mxu0 %v4442
        %5690 = vmatpush1.bf16.msra.mxu0 %v4441
        %5691 = vmatprep.subr.bf16.mxu0 %v4446
        %5692 = vmatpush1.bf16.msra.mxu0 %v4445
        %5693 = vmatprep.subr.bf16.mxu0 %v4450
        %5694 = vmatpush1.bf16.msra.mxu0 %v4449
        %5695 = vmatprep.subr.bf16.mxu0 %v4454
        %5696 = vmatpush1.bf16.msra.mxu0 %v4453
        %5697 = vmatprep.subr.bf16.mxu0 %v4458
        %5698 = vmatpush1.bf16.msra.mxu0 %v4457
        %5699 = vmatprep.subr.bf16.mxu0 %v4462
        %5700 = vmatpush1.bf16.msra.mxu0 %v4461
        %5701 = vmatprep.subr.bf16.mxu0 %v4466
        %5702 = vmatpush1.bf16.msra.mxu0 %v4465
        %5703 = vmatprep.subr.bf16.mxu0 %v4470
        %5704 = vmatpush1.bf16.msra.mxu0 %v4469
        %5705 = vmatprep.subr.bf16.mxu0 %v4474
        %5706 = vmatpush1.bf16.msra.mxu0 %v4473
        %5707 = vmatprep.subr.bf16.mxu0 %v4478
        %5708 = vmatpush1.bf16.msra.mxu0 %v4477
        %5709 = vmatprep.subr.bf16.mxu0 %v4482
        %5710 = vmatpush1.bf16.msra.mxu0 %v4481
        %5711 = vmatprep.mubr.bf16.mxu0 %v2604
        %5712 = vmatmul.mubr.bf16.gmra.mrb[0].mxu0 %v2603
        %v5713 = vpop.f32.mrb[0].mxu0
        %v5714 = vadd.f32 %v5673, %v5713
        %v5715 = vpop.f32.mrb[0].mxu0
        %v5716 = vadd.f32 %v5675, %v5715
        %v5717 = vpop.f32.mrb[0].mxu0
        %v5718 = vpop.f32.mrb[0].mxu0
        %5719 = vdwg.mxu0
        %5720 = vmatprep.subr.bf16.mxu0 %v4486
        %5721 = vmatpush1.bf16.msra.mxu0 %v4485
        %5722 = vmatprep.subr.bf16.mxu0 %v4490
        %5723 = vmatpush1.bf16.msra.mxu0 %v4489
        %5724 = vmatprep.subr.bf16.mxu0 %v4494
        %5725 = vmatpush1.bf16.msra.mxu0 %v4493
        %5726 = vmatprep.subr.bf16.mxu0 %v4498
        %5727 = vmatpush1.bf16.msra.mxu0 %v4497
        %5728 = vmatprep.subr.bf16.mxu0 %v4502
        %5729 = vmatpush1.bf16.msra.mxu0 %v4501
        %5730 = vmatprep.subr.bf16.mxu0 %v4506
        %5731 = vmatpush1.bf16.msra.mxu0 %v4505
        %5732 = vmatprep.subr.bf16.mxu0 %v4510
        %5733 = vmatpush1.bf16.msra.mxu0 %v4509
        %5734 = vmatprep.subr.bf16.mxu0 %v4514
        %5735 = vmatpush1.bf16.msra.mxu0 %v4513
        %5736 = vmatprep.subr.bf16.mxu0 %v4518
        %5737 = vmatpush1.bf16.msra.mxu0 %v4517
        %5738 = vmatprep.subr.bf16.mxu0 %v4522
        %5739 = vmatpush1.bf16.msra.mxu0 %v4521
        %5740 = vmatprep.subr.bf16.mxu0 %v4526
        %5741 = vmatpush1.bf16.msra.mxu0 %v4525
        %5742 = vmatprep.subr.bf16.mxu0 %v4530
        %5743 = vmatpush1.bf16.msra.mxu0 %v4529
        %5744 = vmatprep.subr.bf16.mxu0 %v4534
        %5745 = vmatpush1.bf16.msra.mxu0 %v4533
        %5746 = vmatprep.subr.bf16.mxu0 %v4538
        %5747 = vmatpush1.bf16.msra.mxu0 %v4537
        %5748 = vmatprep.subr.bf16.mxu0 %v4542
        %5749 = vmatpush1.bf16.msra.mxu0 %v4541
        %5750 = vmatprep.subr.bf16.mxu0 %v4546
        %5751 = vmatpush1.bf16.msra.mxu0 %v4545
        %5752 = vmatprep.mubr.bf16.mxu0 %v2606
        %5753 = vmatmul.mubr.bf16.gmra.mrb[0].mxu0 %v2605
        %v5754 = vpop.f32.mrb[0].mxu0
        %v5755 = vadd.f32 %v5714, %v5754
        %v5756 = vpop.f32.mrb[0].mxu0
        %v5757 = vadd.f32 %v5716, %v5756
        %v5758 = vpop.f32.mrb[0].mxu0
        %v5759 = vpop.f32.mrb[0].mxu0
        %5760 = vdwg.mxu0
        %5761 = vmatprep.subr.bf16.mxu0 %v4550
        %5762 = vmatpush1.bf16.msra.mxu0 %v4549
        %5763 = vmatprep.subr.bf16.mxu0 %v4554
        %5764 = vmatpush1.bf16.msra.mxu0 %v4553
        %5765 = vmatprep.subr.bf16.mxu0 %v4558
        %5766 = vmatpush1.bf16.msra.mxu0 %v4557
        %5767 = vmatprep.subr.bf16.mxu0 %v4562
        %5768 = vmatpush1.bf16.msra.mxu0 %v4561
        %5769 = vmatprep.subr.bf16.mxu0 %v4566
        %5770 = vmatpush1.bf16.msra.mxu0 %v4565
        %5771 = vmatprep.subr.bf16.mxu0 %v4570
        %5772 = vmatpush1.bf16.msra.mxu0 %v4569
        %5773 = vmatprep.subr.bf16.mxu0 %v4574
        %5774 = vmatpush1.bf16.msra.mxu0 %v4573
        %5775 = vmatprep.subr.bf16.mxu0 %v4578
        %5776 = vmatpush1.bf16.msra.mxu0 %v4577
        %5777 = vmatprep.subr.bf16.mxu0 %v4582
        %5778 = vmatpush1.bf16.msra.mxu0 %v4581
        %5779 = vmatprep.subr.bf16.mxu0 %v4586
        %5780 = vmatpush1.bf16.msra.mxu0 %v4585
        %5781 = vmatprep.subr.bf16.mxu0 %v4590
        %5782 = vmatpush1.bf16.msra.mxu0 %v4589
        %5783 = vmatprep.subr.bf16.mxu0 %v4594
        %5784 = vmatpush1.bf16.msra.mxu0 %v4593
        %5785 = vmatprep.subr.bf16.mxu0 %v4598
        %5786 = vmatpush1.bf16.msra.mxu0 %v4597
        %5787 = vmatprep.subr.bf16.mxu0 %v4602
        %5788 = vmatpush1.bf16.msra.mxu0 %v4601
        %5789 = vmatprep.subr.bf16.mxu0 %v4606
        %5790 = vmatpush1.bf16.msra.mxu0 %v4605
        %5791 = vmatprep.subr.bf16.mxu0 %v4610
        %5792 = vmatpush1.bf16.msra.mxu0 %v4609
        %5793 = vmatprep.mubr.bf16.mxu0 %v2608
        %5794 = vmatmul.mubr.bf16.gmra.mrb[0].mxu0 %v2607
        %v5795 = vpop.f32.mrb[0].mxu0
        %v5796 = vadd.f32 %v5755, %v5795
        %v5797 = vpop.f32.mrb[0].mxu0
        %v5798 = vadd.f32 %v5757, %v5797
        %v5799 = vpop.f32.mrb[0].mxu0
        %v5800 = vpop.f32.mrb[0].mxu0
        %5801 = vdwg.mxu0
        %5802 = vmatprep.subr.bf16.mxu0 %v4614
        %5803 = vmatpush1.bf16.msra.mxu0 %v4613
        %5804 = vmatprep.subr.bf16.mxu0 %v4618
        %5805 = vmatpush1.bf16.msra.mxu0 %v4617
        %5806 = vmatprep.subr.bf16.mxu0 %v4622
        %5807 = vmatpush1.bf16.msra.mxu0 %v4621
        %5808 = vmatprep.subr.bf16.mxu0 %v4626
        %5809 = vmatpush1.bf16.msra.mxu0 %v4625
        %5810 = vmatprep.subr.bf16.mxu0 %v4630
        %5811 = vmatpush1.bf16.msra.mxu0 %v4629
        %5812 = vmatprep.subr.bf16.mxu0 %v4634
        %5813 = vmatpush1.bf16.msra.mxu0 %v4633
        %5814 = vmatprep.subr.bf16.mxu0 %v4638
        %5815 = vmatpush1.bf16.msra.mxu0 %v4637
        %5816 = vmatprep.subr.bf16.mxu0 %v4642
        %5817 = vmatpush1.bf16.msra.mxu0 %v4641
        %5818 = vmatprep.subr.bf16.mxu0 %v4646
        %5819 = vmatpush1.bf16.msra.mxu0 %v4645
        %5820 = vmatprep.subr.bf16.mxu0 %v4650
        %5821 = vmatpush1.bf16.msra.mxu0 %v4649
        %5822 = vmatprep.subr.bf16.mxu0 %v4654
        %5823 = vmatpush1.bf16.msra.mxu0 %v4653
        %5824 = vmatprep.subr.bf16.mxu0 %v4658
        %5825 = vmatpush1.bf16.msra.mxu0 %v4657
        %5826 = vmatprep.subr.bf16.mxu0 %v4662
        %5827 = vmatpush1.bf16.msra.mxu0 %v4661
        %5828 = vmatprep.subr.bf16.mxu0 %v4666
        %5829 = vmatpush1.bf16.msra.mxu0 %v4665
        %5830 = vmatprep.subr.bf16.mxu0 %v4670
        %5831 = vmatpush1.bf16.msra.mxu0 %v4669
        %5832 = vmatprep.subr.bf16.mxu0 %v4674
        %5833 = vmatpush1.bf16.msra.mxu0 %v4673
        %5834 = vmatprep.mubr.bf16.mxu0 %v2610
        %5835 = vmatmul.mubr.bf16.gmra.mrb[0].mxu0 %v2609
        %v5836 = vpop.f32.mrb[0].mxu0
        %v5837 = vadd.f32 %v5796, %v5836
        %v5838 = vpop.f32.mrb[0].mxu0
        %v5839 = vadd.f32 %v5798, %v5838
        %v5840 = vpop.f32.mrb[0].mxu0
        %v5841 = vpop.f32.mrb[0].mxu0
        %5842 = vdwg.mxu0
        %v5843 = vmul.f32 %v5509, %v5509
        %v5844 = vmul.f32 %v5511, %v5511
        %v5845 = vmul.f32 %v5837, %v5837
        %v5846 = vmul.f32 %v5839, %v5839
        %v5847 = vadd.f32 %v5843, %v5844
        %v5848 = vadd.f32 %v5847, %v5845
        %v5849 = vadd.f32 %v5848, %v5846
        %5850 = vadd.xlane.f32.xlu0 %v5849
        %v5851 = vpop.xlane.xlu0 %5850
        %v5852 = vadd.f32 %v5851, 1e-12
        %v5853 = vrsqrt.pop %v5852
        %v5854 = vmul.f32 %v5509, %v5853
        %v5855 = vmul.f32 %v5511, %v5853
        %v5856 = vmul.f32 %v5837, %v5853
        %v5857 = vmul.f32 %v5839, %v5853
        %v5858 = vpack.c.bf16 %v5854, %v5854
        %v5859 = vpack.c.bf16 %v5855, %v5855
        %v5860 = vpack.c.bf16 %v5856, %v5856
        %v5861 = vpack.c.bf16 %v5857, %v5857
        %v5862 = vld [vmem:[#allocation8] sm:$0xf]
        %v5863 = vld [vmem:[#allocation8 + $0x4] sm:$0xf]
        %v5864 = vld [vmem:[#allocation8 + $0x8] sm:$0xf]
        %v5865 = vld [vmem:[#allocation8 + $0xc] sm:$0xf]
        %v5866 = vld [vmem:[#allocation8 + $0x10] sm:$0xf]
        %v5867 = vld [vmem:[#allocation8 + $0x14] sm:$0xf]
        %v5868 = vld [vmem:[#allocation8 + $0x18] sm:$0xf]
        %v5869 = vld [vmem:[#allocation8 + $0x1c] sm:$0xf]
        %v5870 = vld [vmem:[#allocation8 + $0x20] sm:$0xf]
        %v5871 = vld [vmem:[#allocation8 + $0x24] sm:$0xf]
        %v5872 = vld [vmem:[#allocation8 + $0x28] sm:$0xf]
        %v5873 = vld [vmem:[#allocation8 + $0x2c] sm:$0xf]
        %v5874 = vld [vmem:[#allocation8 + $0x30] sm:$0xf]
        %v5875 = vld [vmem:[#allocation8 + $0x34] sm:$0xf]
        %v5876 = vld [vmem:[#allocation8 + $0x38] sm:$0xf]
        %v5877 = vld [vmem:[#allocation8 + $0x3c] sm:$0xf]
        %v5878 = vld [vmem:[#allocation8 + $0x40] sm:$0xf]
        %v5879 = vld [vmem:[#allocation8 + $0x44] sm:$0xf]
        %v5880 = vld [vmem:[#allocation8 + $0x48] sm:$0xf]
        %v5881 = vld [vmem:[#allocation8 + $0x4c] sm:$0xf]
        %v5882 = vld [vmem:[#allocation8 + $0x50] sm:$0xf]
        %v5883 = vld [vmem:[#allocation8 + $0x54] sm:$0xf]
        %v5884 = vld [vmem:[#allocation8 + $0x58] sm:$0xf]
        %v5885 = vld [vmem:[#allocation8 + $0x5c] sm:$0xf]
        %v5886 = vld [vmem:[#allocation8 + $0x60] sm:$0xf]
        %v5887 = vld [vmem:[#allocation8 + $0x64] sm:$0xf]
        %v5888 = vld [vmem:[#allocation8 + $0x68] sm:$0xf]
        %v5889 = vld [vmem:[#allocation8 + $0x6c] sm:$0xf]
        %v5890 = vld [vmem:[#allocation8 + $0x70] sm:$0xf]
        %v5891 = vld [vmem:[#allocation8 + $0x74] sm:$0xf]
        %v5892 = vld [vmem:[#allocation8 + $0x78] sm:$0xf]
        %v5893 = vld [vmem:[#allocation8 + $0x7c] sm:$0xf]
        %v5894 = vld [vmem:[#allocation8 + $0x80] sm:$0xf]
        %v5895 = vld [vmem:[#allocation8 + $0x84] sm:$0xf]
        %v5896 = vld [vmem:[#allocation8 + $0x88] sm:$0xf]
        %v5897 = vld [vmem:[#allocation8 + $0x8c] sm:$0xf]
        %v5898 = vld [vmem:[#allocation8 + $0x90] sm:$0xf]
        %v5899 = vld [vmem:[#allocation8 + $0x94] sm:$0xf]
        %v5900 = vld [vmem:[#allocation8 + $0x98] sm:$0xf]
        %v5901 = vld [vmem:[#allocation8 + $0x9c] sm:$0xf]
        %v5902 = vld [vmem:[#allocation8 + $0xa0] sm:$0xf]
        %v5903 = vld [vmem:[#allocation8 + $0xa4] sm:$0xf]
        %v5904 = vld [vmem:[#allocation8 + $0xa8] sm:$0xf]
        %v5905 = vld [vmem:[#allocation8 + $0xac] sm:$0xf]
        %v5906 = vld [vmem:[#allocation8 + $0xb0] sm:$0xf]
        %v5907 = vld [vmem:[#allocation8 + $0xb4] sm:$0xf]
        %v5908 = vld [vmem:[#allocation8 + $0xb8] sm:$0xf]
        %v5909 = vld [vmem:[#allocation8 + $0xbc] sm:$0xf]
        %v5910 = vld [vmem:[#allocation8 + $0xc0] sm:$0xf]
        %v5911 = vld [vmem:[#allocation8 + $0xc4] sm:$0xf]
        %v5912 = vld [vmem:[#allocation8 + $0xc8] sm:$0xf]
        %v5913 = vld [vmem:[#allocation8 + $0xcc] sm:$0xf]
        %v5914 = vld [vmem:[#allocation8 + $0xd0] sm:$0xf]
        %v5915 = vld [vmem:[#allocation8 + $0xd4] sm:$0xf]
        %v5916 = vld [vmem:[#allocation8 + $0xd8] sm:$0xf]
        %v5917 = vld [vmem:[#allocation8 + $0xdc] sm:$0xf]
        %v5918 = vld [vmem:[#allocation8 + $0xe0] sm:$0xf]
        %v5919 = vld [vmem:[#allocation8 + $0xe4] sm:$0xf]
        %v5920 = vld [vmem:[#allocation8 + $0xe8] sm:$0xf]
        %v5921 = vld [vmem:[#allocation8 + $0xec] sm:$0xf]
        %v5922 = vld [vmem:[#allocation8 + $0xf0] sm:$0xf]
        %v5923 = vld [vmem:[#allocation8 + $0xf4] sm:$0xf]
        %v5924 = vld [vmem:[#allocation8 + $0xf8] sm:$0xf]
        %v5925 = vld [vmem:[#allocation8 + $0xfc] sm:$0xf]
        %v5990 = vunpack.c.l.b16 %v5862
        %v5991 = vunpack.c.l.b16 %v5863
        %v5992 = vunpack.c.l.b16 %v5864
        %v5993 = vunpack.c.l.b16 %v5865
        %v5994 = vunpack.c.l.b16 %v5866
        %v5995 = vunpack.c.l.b16 %v5867
        %v5996 = vunpack.c.l.b16 %v5868
        %v5997 = vunpack.c.l.b16 %v5869
        %v5998 = vunpack.c.l.b16 %v5870
        %v5999 = vunpack.c.l.b16 %v5871
        %v6000 = vunpack.c.l.b16 %v5872
        %v6001 = vunpack.c.l.b16 %v5873
        %v6002 = vunpack.c.l.b16 %v5874
        %v6003 = vunpack.c.l.b16 %v5875
        %v6004 = vunpack.c.l.b16 %v5876
        %v6005 = vunpack.c.l.b16 %v5877
        %v6006 = vunpack.c.l.b16 %v5878
        %v6007 = vunpack.c.l.b16 %v5879
        %v6008 = vunpack.c.l.b16 %v5880
        %v6009 = vunpack.c.l.b16 %v5881
        %v6010 = vunpack.c.l.b16 %v5882
        %v6011 = vunpack.c.l.b16 %v5883
        %v6012 = vunpack.c.l.b16 %v5884
        %v6013 = vunpack.c.l.b16 %v5885
        %v6014 = vunpack.c.l.b16 %v5886
        %v6015 = vunpack.c.l.b16 %v5887
        %v6016 = vunpack.c.l.b16 %v5888
        %v6017 = vunpack.c.l.b16 %v5889
        %v6018 = vunpack.c.l.b16 %v5890
        %v6019 = vunpack.c.l.b16 %v5891
        %v6020 = vunpack.c.l.b16 %v5892
        %v6021 = vunpack.c.l.b16 %v5893
        %v6022 = vunpack.c.l.b16 %v5894
        %v6023 = vunpack.c.l.b16 %v5895
        %v6024 = vunpack.c.l.b16 %v5896
        %v6025 = vunpack.c.l.b16 %v5897
        %v6026 = vunpack.c.l.b16 %v5898
        %v6027 = vunpack.c.l.b16 %v5899
        %v6028 = vunpack.c.l.b16 %v5900
        %v6029 = vunpack.c.l.b16 %v5901
        %v6030 = vunpack.c.l.b16 %v5902
        %v6031 = vunpack.c.l.b16 %v5903
        %v6032 = vunpack.c.l.b16 %v5904
        %v6033 = vunpack.c.l.b16 %v5905
        %v6034 = vunpack.c.l.b16 %v5906
        %v6035 = vunpack.c.l.b16 %v5907
        %v6036 = vunpack.c.l.b16 %v5908
        %v6037 = vunpack.c.l.b16 %v5909
        %v6038 = vunpack.c.l.b16 %v5910
        %v6039 = vunpack.c.l.b16 %v5911
        %v6040 = vunpack.c.l.b16 %v5912
        %v6041 = vunpack.c.l.b16 %v5913
        %v6042 = vunpack.c.l.b16 %v5914
        %v6043 = vunpack.c.l.b16 %v5915
        %v6044 = vunpack.c.l.b16 %v5916
        %v6045 = vunpack.c.l.b16 %v5917
        %v6046 = vunpack.c.l.b16 %v5918
        %v6047 = vunpack.c.l.b16 %v5919
        %v6048 = vunpack.c.l.b16 %v5920
        %v6049 = vunpack.c.l.b16 %v5921
        %v6050 = vunpack.c.l.b16 %v5922
        %v6051 = vunpack.c.l.b16 %v5923
        %v6052 = vunpack.c.l.b16 %v5924
        %v6053 = vunpack.c.l.b16 %v5925
        %v6054 = vpack.c.b16 %v5991, %v5990
        %v6055 = vpack.c.b16 %v5993, %v5992
        %v6056 = vpack.c.b16 %v5995, %v5994
        %v6057 = vpack.c.b16 %v5997, %v5996
        %v6058 = vpack.c.b16 %v5999, %v5998
        %v6059 = vpack.c.b16 %v6001, %v6000
        %v6060 = vpack.c.b16 %v6003, %v6002
        %v6061 = vpack.c.b16 %v6005, %v6004
        %v6062 = vpack.c.b16 %v6007, %v6006
        %v6063 = vpack.c.b16 %v6009, %v6008
        %v6064 = vpack.c.b16 %v6011, %v6010
        %v6065 = vpack.c.b16 %v6013, %v6012
        %v6066 = vpack.c.b16 %v6015, %v6014
        %v6067 = vpack.c.b16 %v6017, %v6016
        %v6068 = vpack.c.b16 %v6019, %v6018
        %v6069 = vpack.c.b16 %v6021, %v6020
        %v6070 = vpack.c.b16 %v6023, %v6022
        %v6071 = vpack.c.b16 %v6025, %v6024
        %v6072 = vpack.c.b16 %v6027, %v6026
        %v6073 = vpack.c.b16 %v6029, %v6028
        %v6074 = vpack.c.b16 %v6031, %v6030
        %v6075 = vpack.c.b16 %v6033, %v6032
        %v6076 = vpack.c.b16 %v6035, %v6034
        %v6077 = vpack.c.b16 %v6037, %v6036
        %v6078 = vpack.c.b16 %v6039, %v6038
        %v6079 = vpack.c.b16 %v6041, %v6040
        %v6080 = vpack.c.b16 %v6043, %v6042
        %v6081 = vpack.c.b16 %v6045, %v6044
        %v6082 = vpack.c.b16 %v6047, %v6046
        %v6083 = vpack.c.b16 %v6049, %v6048
        %v6084 = vpack.c.b16 %v6051, %v6050
        %v6085 = vpack.c.b16 %v6053, %v6052
        %6118 = vmatprep.subr.bf16.mxu0 0
        %6119 = vmatpush1.bf16.msra.mxu0 %v6054
        %6120 = vmatprep.subr.bf16.mxu0 0
        %6121 = vmatpush1.bf16.msra.mxu0 %v6055
        %6122 = vmatprep.subr.bf16.mxu0 0
        %6123 = vmatpush1.bf16.msra.mxu0 %v6056
        %6124 = vmatprep.subr.bf16.mxu0 0
        %6125 = vmatpush1.bf16.msra.mxu0 %v6057
        %6126 = vmatprep.subr.bf16.mxu0 0
        %6127 = vmatpush1.bf16.msra.mxu0 %v6058
        %6128 = vmatprep.subr.bf16.mxu0 0
        %6129 = vmatpush1.bf16.msra.mxu0 %v6059
        %6130 = vmatprep.subr.bf16.mxu0 0
        %6131 = vmatpush1.bf16.msra.mxu0 %v6060
        %6132 = vmatprep.subr.bf16.mxu0 0
        %6133 = vmatpush1.bf16.msra.mxu0 %v6061
        %6134 = vmatprep.subr.bf16.mxu0 0
        %6135 = vmatpush1.bf16.msra.mxu0 %v6062
        %6136 = vmatprep.subr.bf16.mxu0 0
        %6137 = vmatpush1.bf16.msra.mxu0 %v6063
        %6138 = vmatprep.subr.bf16.mxu0 0
        %6139 = vmatpush1.bf16.msra.mxu0 %v6064
        %6140 = vmatprep.subr.bf16.mxu0 0
        %6141 = vmatpush1.bf16.msra.mxu0 %v6065
        %6142 = vmatprep.subr.bf16.mxu0 0
        %6143 = vmatpush1.bf16.msra.mxu0 %v6066
        %6144 = vmatprep.subr.bf16.mxu0 0
        %6145 = vmatpush1.bf16.msra.mxu0 %v6067
        %6146 = vmatprep.subr.bf16.mxu0 0
        %6147 = vmatpush1.bf16.msra.mxu0 %v6068
        %6148 = vmatprep.subr.bf16.mxu0 0
        %6149 = vmatpush1.bf16.msra.mxu0 %v6069
        %6150 = vmatprep.mubr.bf16.mxu0 %v5859
        %6151 = vmatmul.mubr.bf16.gmra.mrb[0].mxu0 %v5858
        %v6152 = vpop.f32.mrb[0].mxu0
        %v6153 = vadd.f32 0.0, %v6152
        %v6154 = vpop.f32.mrb[0].mxu0
        %v6155 = vpop.f32.mrb[0].mxu0
        %v6156 = vpop.f32.mrb[0].mxu0
        %6157 = vdwg.mxu0
        %6158 = vmatprep.subr.bf16.mxu0 0
        %6159 = vmatpush1.bf16.msra.mxu0 %v6070
        %6160 = vmatprep.subr.bf16.mxu0 0
        %6161 = vmatpush1.bf16.msra.mxu0 %v6071
        %6162 = vmatprep.subr.bf16.mxu0 0
        %6163 = vmatpush1.bf16.msra.mxu0 %v6072
        %6164 = vmatprep.subr.bf16.mxu0 0
        %6165 = vmatpush1.bf16.msra.mxu0 %v6073
        %6166 = vmatprep.subr.bf16.mxu0 0
        %6167 = vmatpush1.bf16.msra.mxu0 %v6074
        %6168 = vmatprep.subr.bf16.mxu0 0
        %6169 = vmatpush1.bf16.msra.mxu0 %v6075
        %6170 = vmatprep.subr.bf16.mxu0 0
        %6171 = vmatpush1.bf16.msra.mxu0 %v6076
        %6172 = vmatprep.subr.bf16.mxu0 0
        %6173 = vmatpush1.bf16.msra.mxu0 %v6077
        %6174 = vmatprep.subr.bf16.mxu0 0
        %6175 = vmatpush1.bf16.msra.mxu0 %v6078
        %6176 = vmatprep.subr.bf16.mxu0 0
        %6177 = vmatpush1.bf16.msra.mxu0 %v6079
        %6178 = vmatprep.subr.bf16.mxu0 0
        %6179 = vmatpush1.bf16.msra.mxu0 %v6080
        %6180 = vmatprep.subr.bf16.mxu0 0
        %6181 = vmatpush1.bf16.msra.mxu0 %v6081
        %6182 = vmatprep.subr.bf16.mxu0 0
        %6183 = vmatpush1.bf16.msra.mxu0 %v6082
        %6184 = vmatprep.subr.bf16.mxu0 0
        %6185 = vmatpush1.bf16.msra.mxu0 %v6083
        %6186 = vmatprep.subr.bf16.mxu0 0
        %6187 = vmatpush1.bf16.msra.mxu0 %v6084
        %6188 = vmatprep.subr.bf16.mxu0 0
        %6189 = vmatpush1.bf16.msra.mxu0 %v6085
        %6190 = vmatprep.mubr.bf16.mxu0 %v5861
        %6191 = vmatmul.mubr.bf16.gmra.mrb[0].mxu0 %v5860
        %v6192 = vpop.f32.mrb[0].mxu0
        %v6193 = vadd.f32 %v6153, %v6192
        %v6194 = vpop.f32.mrb[0].mxu0
        %v6195 = vpop.f32.mrb[0].mxu0
        %v6196 = vpop.f32.mrb[0].mxu0
        %6197 = vdwg.mxu0
        %6198 = vst [vmem:[%s258] sm:$0xff] %v6193
        %s6199 = sand.u32 %s120, 1
        %s6200 = scalar_lea.sflag [#allocation4], %s6199
        %s6201 = sand.u32 %s120, 1
        %s6202 = smul.addr %s6201, 8
        %s6203 = scalar_lea.vmem [#allocation10], %s6202
        // Predicated region
        $region53: #{tpu_custom_call.1} parent=35 // pred_check
          %p6204 = pneg %p130
        $region54: #{tpu_custom_call.1} parent=35 // pred_check_branch
          %6206 = sbr.rel (%p6204) target = $region56
        $region55: #{tpu_custom_call.1} parent=35 // pred_region
          %s6208 = ssub.s32 128, 128
          %6209 = vsyncadd %s6200, %s6208
          %s6210 = smul.addr %s23, 128
          %s6211 = scalar_lea.hbm %s4, %s6210
          %s6213 = sshll.u32 %s6203, 4
          %s6214 = int_to_ptr.vmem [resolvable:$true] %s6213
          %6216 = dma.vmem_to_hbm [thread:$0]  %s6214, 128, %s6211, %s6200
        $region56: #{tpu_custom_call.1} parent=35 // pred_fallthru
          _
      $region36: #{tpu_custom_call.1} parent=5 // pred_fallthru
        _
      %p6217 = scmp.le.s32.totalorder 2, %s18
      // Predicated region
      $region57: #{tpu_custom_call.1} parent=5 // pred_check
        %p6218 = pneg %p6217
      $region58: #{tpu_custom_call.1} parent=5 // pred_check_branch
        %6220 = sbr.rel (%p6218) target = $region60
      $region59: #{tpu_custom_call.1} parent=5 // pred_region
        %s6221 = ssub.s32 %s18, 2
        // Predicated region
        $region61: #{tpu_custom_call.1} parent=59 // pred_check
          %p6222 = pneg %p136
        $region62: #{tpu_custom_call.1} parent=59 // pred_check_branch
          %6224 = sbr.rel (%p6222) target = $region64
        $region63: #{tpu_custom_call.1} parent=59 // pred_region
          %s6225 = sand.u32 %s121, 1
          %s6226 = scalar_lea.sflag [#allocation4], %s6225
          %s6227 = sand.u32 %s121, 1
          %s6228 = smul.addr %s6227, 8
          %s6229 = scalar_lea.vmem [#allocation10], %s6228
          %6230 = dma.done %s6226, 128
        $region64: #{tpu_custom_call.1} parent=59 // pred_fallthru
          _
      $region60: #{tpu_custom_call.1} parent=5 // pred_fallthru
        _
    $region6: #{tpu_custom_call.1} parent=1 // loop_footer
      %s22 = sadd.s32 1, %s18
    $region7: #{tpu_custom_call.1} parent=1 // loop_footer_branch
      %17 = sbr.rel target = $region3
    $region8: #{tpu_custom_call.1} parent=1 // loop_exit
      _
    %6231 = vsyncpa [#allocation3], 1
    %s6232 = scalar_lea.sflag [#allocation3], 1
    %6233 = vsyncpa %s6232, 1
    %6234 = vsyncpa [#allocation6], 1
    %6235 = vsyncpa [#allocation9], 1
    %6236 = vsyncpa [#allocation4], 1
    %s6237 = scalar_lea.sflag [#allocation4], 1
    %6238 = vsyncpa %s6237, 1

</llo_original>
